<compile_context>
chip_gen: v6e
topology: v6e:2x2x1
jax: 0.10.0
libtpu: 0.0.40
codegen_flags: <defaults>
</compile_context>

<pallas_src>
import jax
import jax.numpy as jnp
from jax.experimental import pallas as pl
from jax.experimental.pallas import tpu as pltpu


def _make_kernel(cin, cout, h, w):
    ho, wo = 2 * h, 2 * w
    P = wo + 3                      # row pitch of every flat padded buffer
    Hp = ho + 2                     # rows of the activation / output buffers
    L = (ho - 1) * P + wo           # contiguous window covering all data rows
    q0 = P + 1                      # flat offset of output pixel (Y=0, X=0)
    total = Hp * P

    def kernel(xd_ref, w1_ref, b1_ref, w2_ref, b2_ref, w3_ref, b3_ref, m_ref,
               o_ref, ypad_ref, p_ref):
        # Re-zero the few ring positions the masked window store never touches
        # (top pad row + trailing ring / bottom pad row).  Done every iteration
        # so correctness never depends on scratch history (megacore-safe).
        ypad_ref[:, 0:q0] = jnp.zeros((cout, q0), ypad_ref.dtype)
        ypad_ref[:, q0 + L:total] = jnp.zeros((cout, total - q0 - L),
                                              ypad_ref.dtype)

        int_mask = m_ref[4:5, :]                       # (1, L) interior mask

        # ---- Stage 1: ConvTranspose2d(k=4, s=2, p=1) + BN + ReLU ----------
        # Each of the 16 kernel taps (a, b) is a contiguous lane slice of the
        # 2x-duplicated padded input (same pitch P as the output), so a single
        # bf16 matmul produces all four sub-pixel phases directly in output
        # coordinates; parity masks select the valid phase per lane.
        for a in range(4):
            for b in range(4):
                k = a * 4 + b
                s = (3 - a) * P + (3 - b)
                p_ref[k * cin:(k + 1) * cin, 0:L] = xd_ref[0, :, s:s + L]
        r1 = jnp.dot(w1_ref[...], p_ref[0:16 * cin, 0:L],
                     preferred_element_type=jnp.float32)       # (4*cout, L) f32
        y1 = (r1[0:cout] * m_ref[0:1, :]
              + r1[cout:2 * cout] * m_ref[1:2, :]
              + r1[2 * cout:3 * cout] * m_ref[2:3, :]
              + r1[3 * cout:4 * cout] * m_ref[3:4, :])
        y1 = jnp.maximum(y1 + b1_ref[...], 0.0) * int_mask     # folded BN1+ReLU
        ypad_ref[:, q0:q0 + L] = y1.astype(ypad_ref.dtype)

        # ---- Stages 2 & 3: Conv2d(3x3, pad=1) + BN + ReLU -----------------
        def conv3x3(w_ref, b_ref):
            for u in range(3):
                for v in range(3):
                    k = u * 3 + v
                    s = u * P + v
                    p_ref[k * cout:(k + 1) * cout, 0:L] = ypad_ref[:, s:s + L]
            r = jnp.dot(w_ref[...], p_ref[0:9 * cout, 0:L],
                        preferred_element_type=jnp.float32)    # (cout, L) f32
            return jnp.maximum(r + b_ref[...], 0.0) * int_mask

        y2 = conv3x3(w2_ref, b2_ref)
        ypad_ref[:, q0:q0 + L] = y2.astype(ypad_ref.dtype)

        y3 = conv3x3(w3_ref, b3_ref)
        o_ref[0, :, 0:q0] = jnp.zeros((cout, q0), o_ref.dtype)
        o_ref[0, :, q0:q0 + L] = y3.astype(o_ref.dtype)
        o_ref[0, :, q0 + L:total] = jnp.zeros((cout, total - q0 - L),
                                              o_ref.dtype)

    return kernel, P, Hp, L, q0


@jax.jit
def upsampling_forward(x_nchw, params):
    n, cin, h, w = x_nchw.shape
    cout = params["b2"].shape[0]
    ho, wo = 2 * h, 2 * w
    kernel, P, Hp, L, q0 = _make_kernel(cin, cout, h, w)

    # Channel-major input: no NCHW->NHWC transpose.  Zero-pad by 1, duplicate
    # each pixel 2x2 (so every ConvTranspose tap is a uniform lane shift) and
    # flatten spatially with row pitch P.
    xp = jnp.pad(x_nchw, ((0, 0), (0, 0), (1, 1), (1, 1)))
    xd = jnp.repeat(jnp.repeat(xp, 2, axis=2), 2, axis=3)
    xd = xd[:, :, :ho + 3, :P].reshape(n, cin, (ho + 3) * P).astype(jnp.bfloat16)

    # Parity + interior masks over the window (shape-only constants).
    t = jnp.arange(L, dtype=jnp.int32)
    q = q0 + t
    yy = q // P - 1
    xx = q % P - 1
    valid = (xx >= 0) & (xx < wo)
    masks = jnp.stack(
        [valid & (yy % 2 == py) & (xx % 2 == px)
         for py in (0, 1) for px in (0, 1)] + [valid]).astype(jnp.float32)

    n_patch_rows = max(16 * cin, 9 * cout)

    out = pl.pallas_call(
        kernel,
        out_shape=jax.ShapeDtypeStruct((n, cout, Hp * P), jnp.float32),
        grid_spec=pltpu.PrefetchScalarGridSpec(
            num_scalar_prefetch=0,
            grid=(n,),
            in_specs=[
                pl.BlockSpec((1, cin, (ho + 3) * P), lambda i: (i, 0, 0)),
                pl.BlockSpec((4 * cout, 16 * cin), lambda i: (0, 0)),
                pl.BlockSpec((cout, 1), lambda i: (0, 0)),
                pl.BlockSpec((cout, 9 * cout), lambda i: (0, 0)),
                pl.BlockSpec((cout, 1), lambda i: (0, 0)),
                pl.BlockSpec((cout, 9 * cout), lambda i: (0, 0)),
                pl.BlockSpec((cout, 1), lambda i: (0, 0)),
                pl.BlockSpec((5, L), lambda i: (0, 0)),
            ],
            out_specs=pl.BlockSpec((1, cout, Hp * P), lambda i: (i, 0, 0)),
            scratch_shapes=[
                pltpu.VMEM((cout, Hp * P), jnp.bfloat16),   # fused activations
                pltpu.VMEM((n_patch_rows, L), jnp.bfloat16),  # transposed im2col
            ],
        ),
        compiler_params=pltpu.CompilerParams(
            dimension_semantics=("parallel",),
        ),
    )(xd, params["w1"], params["b1"], params["w2"], params["b2"],
      params["w3"], params["b3"], masks)

    # (N, Cout, Hp*P) -> NCHW: pure reshape + interior slice (cheap XLA ops).
    return out.reshape(n, cout, Hp, P)[:, :, 1:1 + ho, 1:1 + wo]


def _fold_bn(gamma, beta, mean, var, eps=1e-5):
    scale = gamma / jnp.sqrt(var + eps)
    bias = beta - mean * scale
    return scale, bias


def init_params(key, in_ch, out_ch):
    ks = jax.random.split(key, 15)
    # Deterministic synthetic weights in PyTorch layouts.
    wt_pt = 0.1 * jax.random.normal(ks[0], (in_ch, out_ch, 4, 4), jnp.float32)
    w2_pt = 0.1 * jax.random.normal(ks[1], (out_ch, out_ch, 3, 3), jnp.float32)
    w3_pt = 0.1 * jax.random.normal(ks[2], (out_ch, out_ch, 3, 3), jnp.float32)

    def bn(k0, k1, k2, k3, c):
        gamma = 1.0 + 0.1 * jax.random.normal(k0, (c,), jnp.float32)
        beta = 0.1 * jax.random.normal(k1, (c,), jnp.float32)
        mean = 0.1 * jax.random.normal(k2, (c,), jnp.float32)
        var = jnp.abs(jax.random.normal(k3, (c,), jnp.float32)) + 0.5
        return _fold_bn(gamma, beta, mean, var)

    s1, b1 = bn(ks[3], ks[4], ks[5], ks[6], out_ch)
    s2, b2 = bn(ks[7], ks[8], ks[9], ks[10], out_ch)
    s3, b3 = bn(ks[11], ks[12], ks[13], ks[14], out_ch)

    # Stage-1 weight (4*out, 16*in): row block p = 2*py+px holds, for each
    # ConvTranspose2d tap (a, b) of matching parity (a = py+1, b = px+1 mod 2),
    # the (out, in) kernel slice; other taps belong to other phases and are 0.
    # BN1 scale folded in.
    w1 = jnp.zeros((4 * out_ch, 16 * in_ch), jnp.float32)
    for py in range(2):
        for px in range(2):
            p = 2 * py + px
            for a in range(4):
                if a % 2 != (py + 1) % 2:
                    continue
                for b in range(4):
                    if b % 2 != (px + 1) % 2:
                        continue
                    blk = jnp.transpose(wt_pt[:, :, a, b]) * s1[:, None]
                    w1 = w1.at[p * out_ch:(p + 1) * out_ch,
                               (a * 4 + b) * in_ch:(a * 4 + b + 1) * in_ch].set(blk)

    # 3x3 convs: (out,in,kh,kw) -> (out, kh, kw, in) -> (out, 9*in); BN folded.
    w2 = jnp.transpose(w2_pt, (0, 2, 3, 1)).reshape(out_ch, 9 * out_ch) * s2[:, None]
    w3 = jnp.transpose(w3_pt, (0, 2, 3, 1)).reshape(out_ch, 9 * out_ch) * s3[:, None]

    params = dict(
        w1=w1.astype(jnp.bfloat16), b1=b1[:, None],
        w2=w2.astype(jnp.bfloat16), b2=b2[:, None],
        w3=w3.astype(jnp.bfloat16), b3=b3[:, None],
    )
    raw = dict(wt_pt=wt_pt, w2_pt=w2_pt, w3_pt=w3_pt,
               s1=s1, b1=b1, s2=s2, b2=b2, s3=s3, b3=b3)
    return params, raw


def reference_forward(x_nchw, raw):
    """Pure-XLA reference of the same (inference-mode-BN) forward pass."""
    dn = ("NCHW", "OIHW", "NCHW")
    hi = jax.lax.Precision.HIGHEST

    def bn_relu(y, s, b):
        return jnp.maximum(y * s[None, :, None, None] + b[None, :, None, None], 0.0)

    # ConvTranspose2d(4,2,1) == dilate-by-2 + pad 2 + flipped/transposed kernel.
    w1_eq = jnp.transpose(raw["wt_pt"][:, :, ::-1, ::-1], (1, 0, 2, 3))
    y = jax.lax.conv_general_dilated(x_nchw, w1_eq, (1, 1), ((2, 2), (2, 2)),
                                     lhs_dilation=(2, 2), dimension_numbers=dn,
                                     precision=hi)
    y = bn_relu(y, raw["s1"], raw["b1"])
    y = jax.lax.conv_general_dilated(y, raw["w2_pt"], (1, 1), ((1, 1), (1, 1)),
                                     dimension_numbers=dn, precision=hi)
    y = bn_relu(y, raw["s2"], raw["b2"])
    y = jax.lax.conv_general_dilated(y, raw["w3_pt"], (1, 1), ((1, 1), (1, 1)),
                                     dimension_numbers=dn, precision=hi)
    y = bn_relu(y, raw["s3"], raw["b3"])
    return y


if __name__ == "__main__":
    key = jax.random.PRNGKey(0)
    kx_, kp_ = jax.random.split(key)

    N, IN_CH, OUT_CH, H, W = 2, 4, 8, 16, 16
    x = jax.random.normal(kx_, (N, IN_CH, H, W), jnp.float32)
    params, raw = init_params(kp_, IN_CH, OUT_CH)

    y = upsampling_forward(x, params)
    y = jax.block_until_ready(y)

    assert y.shape == (N, OUT_CH, 2 * H, 2 * W), y.shape
    assert bool(jnp.all(jnp.isfinite(y)))
    assert bool(jnp.all(y >= 0.0))          # ends with ReLU

    # Tolerance accounts for bf16 matmul operands (f32 accumulation).
    y_ref = reference_forward(x, raw)
    assert bool(jnp.allclose(y, y_ref, atol=3e-2, rtol=3e-2)), float(
        jnp.max(jnp.abs(y - y_ref)))

    print("KERNEL_OK")
</pallas_src>

<mosaic_0001>
module attributes {stable_mosaic.version = 11 : i64} {
  func.func @kernel(%arg0: i32, %arg1: memref<1x4x1225xbf16, #tpu.memory_space<vmem>>, %arg2: memref<32x64xbf16, #tpu.memory_space<vmem>>, %arg3: memref<8x1xf32, #tpu.memory_space<vmem>>, %arg4: memref<8x72xbf16, #tpu.memory_space<vmem>>, %arg5: memref<8x1xf32, #tpu.memory_space<vmem>>, %arg6: memref<8x72xbf16, #tpu.memory_space<vmem>>, %arg7: memref<8x1xf32, #tpu.memory_space<vmem>>, %arg8: memref<5x1117xf32, #tpu.memory_space<vmem>>, %arg9: memref<1x8x1190xf32, #tpu.memory_space<vmem>>, %arg10: memref<8x1190xbf16, #tpu.memory_space<vmem>>, %arg11: memref<72x1117xbf16, #tpu.memory_space<vmem>>) attributes {dimension_semantics = [#tpu.dimension_semantics<parallel>], iteration_bounds = array<i64: 2>, scalar_prefetch = 0 : i64, scratch_operands = 2 : i64, tpu.core_type = #tpu.core_type<tc>, window_params = [{transform_indices = @transform_0, window_bounds = array<i64: 1, 4, 1225>}, {pipeline_mode = #tpu.pipeline_mode<synchronous>, transform_indices = @transform_1, window_bounds = array<i64: 32, 64>}, {pipeline_mode = #tpu.pipeline_mode<synchronous>, transform_indices = @transform_2, window_bounds = array<i64: 8, 1>}, {pipeline_mode = #tpu.pipeline_mode<synchronous>, transform_indices = @transform_3, window_bounds = array<i64: 8, 72>}, {pipeline_mode = #tpu.pipeline_mode<synchronous>, transform_indices = @transform_4, window_bounds = array<i64: 8, 1>}, {pipeline_mode = #tpu.pipeline_mode<synchronous>, transform_indices = @transform_5, window_bounds = array<i64: 8, 72>}, {pipeline_mode = #tpu.pipeline_mode<synchronous>, transform_indices = @transform_6, window_bounds = array<i64: 8, 1>}, {pipeline_mode = #tpu.pipeline_mode<synchronous>, transform_indices = @transform_7, window_bounds = array<i64: 5, 1117>}, {transform_indices = @transform_8, window_bounds = array<i64: 1, 8, 1190>}]} {
    %cst = arith.constant 0.000000e+00 : bf16
    %0 = vector.broadcast %cst : bf16 to vector<8x36xbf16>
    %c0 = arith.constant 0 : index
    %c0_0 = arith.constant 0 : index
    %1 = vector.load %arg10[%c0, %c0_0] : memref<8x1190xbf16, #tpu.memory_space<vmem>>, vector<8x36xbf16>
    tpu.vector_store %arg10[%c0, %c0_0], %0 {strides = array<i32>} : memref<8x1190xbf16, #tpu.memory_space<vmem>>, vector<8x36xbf16>,
    %cst_1 = arith.constant 0.000000e+00 : bf16
    %2 = vector.broadcast %cst_1 : bf16 to vector<8x37xbf16>
    %c0_2 = arith.constant 0 : index
    %c1153 = arith.constant 1153 : index
    %3 = vector.load %arg10[%c0_2, %c1153] : memref<8x1190xbf16, #tpu.memory_space<vmem>>, vector<8x37xbf16>
    tpu.vector_store %arg10[%c0_2, %c1153], %2 {strides = array<i32>} : memref<8x1190xbf16, #tpu.memory_space<vmem>>, vector<8x37xbf16>,
    %c4 = arith.constant 4 : index
    %c0_3 = arith.constant 0 : index
    %4 = vector.load %arg8[%c4, %c0_3] : memref<5x1117xf32, #tpu.memory_space<vmem>>, vector<1x1117xf32>
    %c0_4 = arith.constant 0 : index
    %c0_5 = arith.constant 0 : index
    %c108 = arith.constant 108 : index
    %5 = vector.load %arg1[%c0_4, %c0_5, %c108] : memref<1x4x1225xbf16, #tpu.memory_space<vmem>>, vector<1x4x1117xbf16>
    %6 = vector.shape_cast %5 : vector<1x4x1117xbf16> to vector<4x1117xbf16>
    %c0_6 = arith.constant 0 : index
    %c0_7 = arith.constant 0 : index
    %7 = vector.load %arg11[%c0_6, %c0_7] : memref<72x1117xbf16, #tpu.memory_space<vmem>>, vector<4x1117xbf16>
    tpu.vector_store %arg11[%c0_6, %c0_7], %6 {strides = array<i32>} : memref<72x1117xbf16, #tpu.memory_space<vmem>>, vector<4x1117xbf16>,
    %c0_8 = arith.constant 0 : index
    %c0_9 = arith.constant 0 : index
    %c107 = arith.constant 107 : index
    %8 = vector.load %arg1[%c0_8, %c0_9, %c107] : memref<1x4x1225xbf16, #tpu.memory_space<vmem>>, vector<1x4x1117xbf16>
    %9 = vector.shape_cast %8 : vector<1x4x1117xbf16> to vector<4x1117xbf16>
    %c4_10 = arith.constant 4 : index
    %c0_11 = arith.constant 0 : index
    %10 = vector.load %arg11[%c4_10, %c0_11] : memref<72x1117xbf16, #tpu.memory_space<vmem>>, vector<4x1117xbf16>
    tpu.vector_store %arg11[%c4_10, %c0_11], %9 {strides = array<i32>} : memref<72x1117xbf16, #tpu.memory_space<vmem>>, vector<4x1117xbf16>,
    %c0_12 = arith.constant 0 : index
    %c0_13 = arith.constant 0 : index
    %c106 = arith.constant 106 : index
    %11 = vector.load %arg1[%c0_12, %c0_13, %c106] : memref<1x4x1225xbf16, #tpu.memory_space<vmem>>, vector<1x4x1117xbf16>
    %12 = vector.shape_cast %11 : vector<1x4x1117xbf16> to vector<4x1117xbf16>
    %c8 = arith.constant 8 : index
    %c0_14 = arith.constant 0 : index
    %13 = vector.load %arg11[%c8, %c0_14] : memref<72x1117xbf16, #tpu.memory_space<vmem>>, vector<4x1117xbf16>
    tpu.vector_store %arg11[%c8, %c0_14], %12 {strides = array<i32>} : memref<72x1117xbf16, #tpu.memory_space<vmem>>, vector<4x1117xbf16>,
    %c0_15 = arith.constant 0 : index
    %c0_16 = arith.constant 0 : index
    %c105 = arith.constant 105 : index
    %14 = vector.load %arg1[%c0_15, %c0_16, %c105] : memref<1x4x1225xbf16, #tpu.memory_space<vmem>>, vector<1x4x1117xbf16>
    %15 = vector.shape_cast %14 : vector<1x4x1117xbf16> to vector<4x1117xbf16>
    %c12 = arith.constant 12 : index
    %c0_17 = arith.constant 0 : index
    %16 = vector.load %arg11[%c12, %c0_17] : memref<72x1117xbf16, #tpu.memory_space<vmem>>, vector<4x1117xbf16>
    tpu.vector_store %arg11[%c12, %c0_17], %15 {strides = array<i32>} : memref<72x1117xbf16, #tpu.memory_space<vmem>>, vector<4x1117xbf16>,
    %c0_18 = arith.constant 0 : index
    %c0_19 = arith.constant 0 : index
    %c73 = arith.constant 73 : index
    %17 = vector.load %arg1[%c0_18, %c0_19, %c73] : memref<1x4x1225xbf16, #tpu.memory_space<vmem>>, vector<1x4x1117xbf16>
    %18 = vector.shape_cast %17 : vector<1x4x1117xbf16> to vector<4x1117xbf16>
    %c16 = arith.constant 16 : index
    %c0_20 = arith.constant 0 : index
    %19 = vector.load %arg11[%c16, %c0_20] : memref<72x1117xbf16, #tpu.memory_space<vmem>>, vector<4x1117xbf16>
    tpu.vector_store %arg11[%c16, %c0_20], %18 {strides = array<i32>} : memref<72x1117xbf16, #tpu.memory_space<vmem>>, vector<4x1117xbf16>,
    %c0_21 = arith.constant 0 : index
    %c0_22 = arith.constant 0 : index
    %c72 = arith.constant 72 : index
    %20 = vector.load %arg1[%c0_21, %c0_22, %c72] : memref<1x4x1225xbf16, #tpu.memory_space<vmem>>, vector<1x4x1117xbf16>
    %21 = vector.shape_cast %20 : vector<1x4x1117xbf16> to vector<4x1117xbf16>
    %c20 = arith.constant 20 : index
    %c0_23 = arith.constant 0 : index
    %22 = vector.load %arg11[%c20, %c0_23] : memref<72x1117xbf16, #tpu.memory_space<vmem>>, vector<4x1117xbf16>
    tpu.vector_store %arg11[%c20, %c0_23], %21 {strides = array<i32>} : memref<72x1117xbf16, #tpu.memory_space<vmem>>, vector<4x1117xbf16>,
    %c0_24 = arith.constant 0 : index
    %c0_25 = arith.constant 0 : index
    %c71 = arith.constant 71 : index
    %23 = vector.load %arg1[%c0_24, %c0_25, %c71] : memref<1x4x1225xbf16, #tpu.memory_space<vmem>>, vector<1x4x1117xbf16>
    %24 = vector.shape_cast %23 : vector<1x4x1117xbf16> to vector<4x1117xbf16>
    %c24 = arith.constant 24 : index
    %c0_26 = arith.constant 0 : index
    %25 = vector.load %arg11[%c24, %c0_26] : memref<72x1117xbf16, #tpu.memory_space<vmem>>, vector<4x1117xbf16>
    tpu.vector_store %arg11[%c24, %c0_26], %24 {strides = array<i32>} : memref<72x1117xbf16, #tpu.memory_space<vmem>>, vector<4x1117xbf16>,
    %c0_27 = arith.constant 0 : index
    %c0_28 = arith.constant 0 : index
    %c70 = arith.constant 70 : index
    %26 = vector.load %arg1[%c0_27, %c0_28, %c70] : memref<1x4x1225xbf16, #tpu.memory_space<vmem>>, vector<1x4x1117xbf16>
    %27 = vector.shape_cast %26 : vector<1x4x1117xbf16> to vector<4x1117xbf16>
    %c28 = arith.constant 28 : index
    %c0_29 = arith.constant 0 : index
    %28 = vector.load %arg11[%c28, %c0_29] : memref<72x1117xbf16, #tpu.memory_space<vmem>>, vector<4x1117xbf16>
    tpu.vector_store %arg11[%c28, %c0_29], %27 {strides = array<i32>} : memref<72x1117xbf16, #tpu.memory_space<vmem>>, vector<4x1117xbf16>,
    %c0_30 = arith.constant 0 : index
    %c0_31 = arith.constant 0 : index
    %c38 = arith.constant 38 : index
    %29 = vector.load %arg1[%c0_30, %c0_31, %c38] : memref<1x4x1225xbf16, #tpu.memory_space<vmem>>, vector<1x4x1117xbf16>
    %30 = vector.shape_cast %29 : vector<1x4x1117xbf16> to vector<4x1117xbf16>
    %c32 = arith.constant 32 : index
    %c0_32 = arith.constant 0 : index
    %31 = vector.load %arg11[%c32, %c0_32] : memref<72x1117xbf16, #tpu.memory_space<vmem>>, vector<4x1117xbf16>
    tpu.vector_store %arg11[%c32, %c0_32], %30 {strides = array<i32>} : memref<72x1117xbf16, #tpu.memory_space<vmem>>, vector<4x1117xbf16>,
    %c0_33 = arith.constant 0 : index
    %c0_34 = arith.constant 0 : index
    %c37 = arith.constant 37 : index
    %32 = vector.load %arg1[%c0_33, %c0_34, %c37] : memref<1x4x1225xbf16, #tpu.memory_space<vmem>>, vector<1x4x1117xbf16>
    %33 = vector.shape_cast %32 : vector<1x4x1117xbf16> to vector<4x1117xbf16>
    %c36 = arith.constant 36 : index
    %c0_35 = arith.constant 0 : index
    %34 = vector.load %arg11[%c36, %c0_35] : memref<72x1117xbf16, #tpu.memory_space<vmem>>, vector<4x1117xbf16>
    tpu.vector_store %arg11[%c36, %c0_35], %33 {strides = array<i32>} : memref<72x1117xbf16, #tpu.memory_space<vmem>>, vector<4x1117xbf16>,
    %c0_36 = arith.constant 0 : index
    %c0_37 = arith.constant 0 : index
    %c36_38 = arith.constant 36 : index
    %35 = vector.load %arg1[%c0_36, %c0_37, %c36_38] : memref<1x4x1225xbf16, #tpu.memory_space<vmem>>, vector<1x4x1117xbf16>
    %36 = vector.shape_cast %35 : vector<1x4x1117xbf16> to vector<4x1117xbf16>
    %c40 = arith.constant 40 : index
    %c0_39 = arith.constant 0 : index
    %37 = vector.load %arg11[%c40, %c0_39] : memref<72x1117xbf16, #tpu.memory_space<vmem>>, vector<4x1117xbf16>
    tpu.vector_store %arg11[%c40, %c0_39], %36 {strides = array<i32>} : memref<72x1117xbf16, #tpu.memory_space<vmem>>, vector<4x1117xbf16>,
    %c0_40 = arith.constant 0 : index
    %c0_41 = arith.constant 0 : index
    %c35 = arith.constant 35 : index
    %38 = vector.load %arg1[%c0_40, %c0_41, %c35] : memref<1x4x1225xbf16, #tpu.memory_space<vmem>>, vector<1x4x1117xbf16>
    %39 = vector.shape_cast %38 : vector<1x4x1117xbf16> to vector<4x1117xbf16>
    %c44 = arith.constant 44 : index
    %c0_42 = arith.constant 0 : index
    %40 = vector.load %arg11[%c44, %c0_42] : memref<72x1117xbf16, #tpu.memory_space<vmem>>, vector<4x1117xbf16>
    tpu.vector_store %arg11[%c44, %c0_42], %39 {strides = array<i32>} : memref<72x1117xbf16, #tpu.memory_space<vmem>>, vector<4x1117xbf16>,
    %c0_43 = arith.constant 0 : index
    %c0_44 = arith.constant 0 : index
    %c3 = arith.constant 3 : index
    %41 = vector.load %arg1[%c0_43, %c0_44, %c3] : memref<1x4x1225xbf16, #tpu.memory_space<vmem>>, vector<1x4x1117xbf16>
    %42 = vector.shape_cast %41 : vector<1x4x1117xbf16> to vector<4x1117xbf16>
    %c48 = arith.constant 48 : index
    %c0_45 = arith.constant 0 : index
    %43 = vector.load %arg11[%c48, %c0_45] : memref<72x1117xbf16, #tpu.memory_space<vmem>>, vector<4x1117xbf16>
    tpu.vector_store %arg11[%c48, %c0_45], %42 {strides = array<i32>} : memref<72x1117xbf16, #tpu.memory_space<vmem>>, vector<4x1117xbf16>,
    %c0_46 = arith.constant 0 : index
    %c0_47 = arith.constant 0 : index
    %c2 = arith.constant 2 : index
    %44 = vector.load %arg1[%c0_46, %c0_47, %c2] : memref<1x4x1225xbf16, #tpu.memory_space<vmem>>, vector<1x4x1117xbf16>
    %45 = vector.shape_cast %44 : vector<1x4x1117xbf16> to vector<4x1117xbf16>
    %c52 = arith.constant 52 : index
    %c0_48 = arith.constant 0 : index
    %46 = vector.load %arg11[%c52, %c0_48] : memref<72x1117xbf16, #tpu.memory_space<vmem>>, vector<4x1117xbf16>
    tpu.vector_store %arg11[%c52, %c0_48], %45 {strides = array<i32>} : memref<72x1117xbf16, #tpu.memory_space<vmem>>, vector<4x1117xbf16>,
    %c0_49 = arith.constant 0 : index
    %c0_50 = arith.constant 0 : index
    %c1 = arith.constant 1 : index
    %47 = vector.load %arg1[%c0_49, %c0_50, %c1] : memref<1x4x1225xbf16, #tpu.memory_space<vmem>>, vector<1x4x1117xbf16>
    %48 = vector.shape_cast %47 : vector<1x4x1117xbf16> to vector<4x1117xbf16>
    %c56 = arith.constant 56 : index
    %c0_51 = arith.constant 0 : index
    %49 = vector.load %arg11[%c56, %c0_51] : memref<72x1117xbf16, #tpu.memory_space<vmem>>, vector<4x1117xbf16>
    tpu.vector_store %arg11[%c56, %c0_51], %48 {strides = array<i32>} : memref<72x1117xbf16, #tpu.memory_space<vmem>>, vector<4x1117xbf16>,
    %c0_52 = arith.constant 0 : index
    %c0_53 = arith.constant 0 : index
    %c0_54 = arith.constant 0 : index
    %50 = vector.load %arg1[%c0_52, %c0_53, %c0_54] : memref<1x4x1225xbf16, #tpu.memory_space<vmem>>, vector<1x4x1117xbf16>
    %51 = vector.shape_cast %50 : vector<1x4x1117xbf16> to vector<4x1117xbf16>
    %c60 = arith.constant 60 : index
    %c0_55 = arith.constant 0 : index
    %52 = vector.load %arg11[%c60, %c0_55] : memref<72x1117xbf16, #tpu.memory_space<vmem>>, vector<4x1117xbf16>
    tpu.vector_store %arg11[%c60, %c0_55], %51 {strides = array<i32>} : memref<72x1117xbf16, #tpu.memory_space<vmem>>, vector<4x1117xbf16>,
    %c0_56 = arith.constant 0 : index
    %c0_57 = arith.constant 0 : index
    %53 = vector.load %arg2[%c0_56, %c0_57] : memref<32x64xbf16, #tpu.memory_space<vmem>>, vector<32x64xbf16>
    %c0_58 = arith.constant 0 : index
    %c0_59 = arith.constant 0 : index
    %54 = vector.load %arg11[%c0_58, %c0_59] : memref<72x1117xbf16, #tpu.memory_space<vmem>>, vector<64x1117xbf16>
    %cst_60 = arith.constant dense<0.000000e+00> : vector<32x1117xf32>
    %55 = tpu.matmul %53, %54, %cst_60 {dimension_numbers = #tpu.dot_dimension_numbers<[1], [0], [0], [1], [0, 0, 1, 1], [], []>} : vector<32x64xbf16>, vector<64x1117xbf16>, vector<32x1117xf32> -> vector<32x1117xf32>
    %56 = vector.extract_strided_slice %55 {offsets = [0, 0], sizes = [8, 1117], strides = [1, 1]} : vector<32x1117xf32> to vector<8x1117xf32>
    %c0_61 = arith.constant 0 : index
    %c0_62 = arith.constant 0 : index
    %57 = vector.load %arg8[%c0_61, %c0_62] : memref<5x1117xf32, #tpu.memory_space<vmem>>, vector<1x1117xf32>
    %58 = vector.broadcast %57 : vector<1x1117xf32> to vector<8x1117xf32>
    %59 = arith.mulf %56, %58 : vector<8x1117xf32>
    %60 = vector.extract_strided_slice %55 {offsets = [8, 0], sizes = [8, 1117], strides = [1, 1]} : vector<32x1117xf32> to vector<8x1117xf32>
    %c1_63 = arith.constant 1 : index
    %c0_64 = arith.constant 0 : index
    %61 = vector.load %arg8[%c1_63, %c0_64] : memref<5x1117xf32, #tpu.memory_space<vmem>>, vector<1x1117xf32>
    %62 = vector.broadcast %61 : vector<1x1117xf32> to vector<8x1117xf32>
    %63 = arith.mulf %60, %62 : vector<8x1117xf32>
    %64 = arith.addf %59, %63 : vector<8x1117xf32>
    %65 = vector.extract_strided_slice %55 {offsets = [16, 0], sizes = [8, 1117], strides = [1, 1]} : vector<32x1117xf32> to vector<8x1117xf32>
    %c2_65 = arith.constant 2 : index
    %c0_66 = arith.constant 0 : index
    %66 = vector.load %arg8[%c2_65, %c0_66] : memref<5x1117xf32, #tpu.memory_space<vmem>>, vector<1x1117xf32>
    %67 = vector.broadcast %66 : vector<1x1117xf32> to vector<8x1117xf32>
    %68 = arith.mulf %65, %67 : vector<8x1117xf32>
    %69 = arith.addf %64, %68 : vector<8x1117xf32>
    %70 = vector.extract_strided_slice %55 {offsets = [24, 0], sizes = [8, 1117], strides = [1, 1]} : vector<32x1117xf32> to vector<8x1117xf32>
    %c3_67 = arith.constant 3 : index
    %c0_68 = arith.constant 0 : index
    %71 = vector.load %arg8[%c3_67, %c0_68] : memref<5x1117xf32, #tpu.memory_space<vmem>>, vector<1x1117xf32>
    %72 = vector.broadcast %71 : vector<1x1117xf32> to vector<8x1117xf32>
    %73 = arith.mulf %70, %72 : vector<8x1117xf32>
    %74 = arith.addf %69, %73 : vector<8x1117xf32>
    %c0_69 = arith.constant 0 : index
    %c0_70 = arith.constant 0 : index
    %75 = vector.load %arg3[%c0_69, %c0_70] : memref<8x1xf32, #tpu.memory_space<vmem>>, vector<8x1xf32>
    %76 = vector.broadcast %75 : vector<8x1xf32> to vector<8x1117xf32>
    %77 = arith.addf %74, %76 : vector<8x1117xf32>
    %cst_71 = arith.constant 0.000000e+00 : f32
    %78 = vector.broadcast %cst_71 : f32 to vector<8x1117xf32>
    %79 = arith.maximumf %77, %78 : vector<8x1117xf32>
    %80 = vector.broadcast %4 : vector<1x1117xf32> to vector<8x1117xf32>
    %81 = arith.mulf %79, %80 : vector<8x1117xf32>
    %82 = arith.truncf %81 : vector<8x1117xf32> to vector<8x1117xbf16>
    %c0_72 = arith.constant 0 : index
    %c36_73 = arith.constant 36 : index
    %83 = vector.load %arg10[%c0_72, %c36_73] : memref<8x1190xbf16, #tpu.memory_space<vmem>>, vector<8x1117xbf16>
    tpu.vector_store %arg10[%c0_72, %c36_73], %82 {strides = array<i32>} : memref<8x1190xbf16, #tpu.memory_space<vmem>>, vector<8x1117xbf16>,
    %c0_74 = arith.constant 0 : index
    %c0_75 = arith.constant 0 : index
    %84 = vector.load %arg10[%c0_74, %c0_75] : memref<8x1190xbf16, #tpu.memory_space<vmem>>, vector<8x1117xbf16>
    %c0_76 = arith.constant 0 : index
    %c0_77 = arith.constant 0 : index
    %85 = vector.load %arg11[%c0_76, %c0_77] : memref<72x1117xbf16, #tpu.memory_space<vmem>>, vector<8x1117xbf16>
    tpu.vector_store %arg11[%c0_76, %c0_77], %84 {strides = array<i32>} : memref<72x1117xbf16, #tpu.memory_space<vmem>>, vector<8x1117xbf16>,
    %c0_78 = arith.constant 0 : index
    %c1_79 = arith.constant 1 : index
    %86 = vector.load %arg10[%c0_78, %c1_79] : memref<8x1190xbf16, #tpu.memory_space<vmem>>, vector<8x1117xbf16>
    %c8_80 = arith.constant 8 : index
    %c0_81 = arith.constant 0 : index
    %87 = vector.load %arg11[%c8_80, %c0_81] : memref<72x1117xbf16, #tpu.memory_space<vmem>>, vector<8x1117xbf16>
    tpu.vector_store %arg11[%c8_80, %c0_81], %86 {strides = array<i32>} : memref<72x1117xbf16, #tpu.memory_space<vmem>>, vector<8x1117xbf16>,
    %c0_82 = arith.constant 0 : index
    %c2_83 = arith.constant 2 : index
    %88 = vector.load %arg10[%c0_82, %c2_83] : memref<8x1190xbf16, #tpu.memory_space<vmem>>, vector<8x1117xbf16>
    %c16_84 = arith.constant 16 : index
    %c0_85 = arith.constant 0 : index
    %89 = vector.load %arg11[%c16_84, %c0_85] : memref<72x1117xbf16, #tpu.memory_space<vmem>>, vector<8x1117xbf16>
    tpu.vector_store %arg11[%c16_84, %c0_85], %88 {strides = array<i32>} : memref<72x1117xbf16, #tpu.memory_space<vmem>>, vector<8x1117xbf16>,
    %c0_86 = arith.constant 0 : index
    %c35_87 = arith.constant 35 : index
    %90 = vector.load %arg10[%c0_86, %c35_87] : memref<8x1190xbf16, #tpu.memory_space<vmem>>, vector<8x1117xbf16>
    %c24_88 = arith.constant 24 : index
    %c0_89 = arith.constant 0 : index
    %91 = vector.load %arg11[%c24_88, %c0_89] : memref<72x1117xbf16, #tpu.memory_space<vmem>>, vector<8x1117xbf16>
    tpu.vector_store %arg11[%c24_88, %c0_89], %90 {strides = array<i32>} : memref<72x1117xbf16, #tpu.memory_space<vmem>>, vector<8x1117xbf16>,
    %c0_90 = arith.constant 0 : index
    %c36_91 = arith.constant 36 : index
    %92 = vector.load %arg10[%c0_90, %c36_91] : memref<8x1190xbf16, #tpu.memory_space<vmem>>, vector<8x1117xbf16>
    %c32_92 = arith.constant 32 : index
    %c0_93 = arith.constant 0 : index
    %93 = vector.load %arg11[%c32_92, %c0_93] : memref<72x1117xbf16, #tpu.memory_space<vmem>>, vector<8x1117xbf16>
    tpu.vector_store %arg11[%c32_92, %c0_93], %92 {strides = array<i32>} : memref<72x1117xbf16, #tpu.memory_space<vmem>>, vector<8x1117xbf16>,
    %c0_94 = arith.constant 0 : index
    %c37_95 = arith.constant 37 : index
    %94 = vector.load %arg10[%c0_94, %c37_95] : memref<8x1190xbf16, #tpu.memory_space<vmem>>, vector<8x1117xbf16>
    %c40_96 = arith.constant 40 : index
    %c0_97 = arith.constant 0 : index
    %95 = vector.load %arg11[%c40_96, %c0_97] : memref<72x1117xbf16, #tpu.memory_space<vmem>>, vector<8x1117xbf16>
    tpu.vector_store %arg11[%c40_96, %c0_97], %94 {strides = array<i32>} : memref<72x1117xbf16, #tpu.memory_space<vmem>>, vector<8x1117xbf16>,
    %c0_98 = arith.constant 0 : index
    %c70_99 = arith.constant 70 : index
    %96 = vector.load %arg10[%c0_98, %c70_99] : memref<8x1190xbf16, #tpu.memory_space<vmem>>, vector<8x1117xbf16>
    %c48_100 = arith.constant 48 : index
    %c0_101 = arith.constant 0 : index
    %97 = vector.load %arg11[%c48_100, %c0_101] : memref<72x1117xbf16, #tpu.memory_space<vmem>>, vector<8x1117xbf16>
    tpu.vector_store %arg11[%c48_100, %c0_101], %96 {strides = array<i32>} : memref<72x1117xbf16, #tpu.memory_space<vmem>>, vector<8x1117xbf16>,
    %c0_102 = arith.constant 0 : index
    %c71_103 = arith.constant 71 : index
    %98 = vector.load %arg10[%c0_102, %c71_103] : memref<8x1190xbf16, #tpu.memory_space<vmem>>, vector<8x1117xbf16>
    %c56_104 = arith.constant 56 : index
    %c0_105 = arith.constant 0 : index
    %99 = vector.load %arg11[%c56_104, %c0_105] : memref<72x1117xbf16, #tpu.memory_space<vmem>>, vector<8x1117xbf16>
    tpu.vector_store %arg11[%c56_104, %c0_105], %98 {strides = array<i32>} : memref<72x1117xbf16, #tpu.memory_space<vmem>>, vector<8x1117xbf16>,
    %c0_106 = arith.constant 0 : index
    %c72_107 = arith.constant 72 : index
    %100 = vector.load %arg10[%c0_106, %c72_107] : memref<8x1190xbf16, #tpu.memory_space<vmem>>, vector<8x1117xbf16>
    %c64 = arith.constant 64 : index
    %c0_108 = arith.constant 0 : index
    %101 = vector.load %arg11[%c64, %c0_108] : memref<72x1117xbf16, #tpu.memory_space<vmem>>, vector<8x1117xbf16>
    tpu.vector_store %arg11[%c64, %c0_108], %100 {strides = array<i32>} : memref<72x1117xbf16, #tpu.memory_space<vmem>>, vector<8x1117xbf16>,
    %c0_109 = arith.constant 0 : index
    %c0_110 = arith.constant 0 : index
    %102 = vector.load %arg4[%c0_109, %c0_110] : memref<8x72xbf16, #tpu.memory_space<vmem>>, vector<8x72xbf16>
    %c0_111 = arith.constant 0 : index
    %c0_112 = arith.constant 0 : index
    %103 = vector.load %arg11[%c0_111, %c0_112] : memref<72x1117xbf16, #tpu.memory_space<vmem>>, vector<72x1117xbf16>
    %cst_113 = arith.constant dense<0.000000e+00> : vector<8x1117xf32>
    %104 = tpu.matmul %102, %103, %cst_113 {dimension_numbers = #tpu.dot_dimension_numbers<[1], [0], [0], [1], [0, 0, 1, 1], [], []>} : vector<8x72xbf16>, vector<72x1117xbf16>, vector<8x1117xf32> -> vector<8x1117xf32>
    %c0_114 = arith.constant 0 : index
    %c0_115 = arith.constant 0 : index
    %105 = vector.load %arg5[%c0_114, %c0_115] : memref<8x1xf32, #tpu.memory_space<vmem>>, vector<8x1xf32>
    %106 = vector.broadcast %105 : vector<8x1xf32> to vector<8x1117xf32>
    %107 = arith.addf %104, %106 : vector<8x1117xf32>
    %cst_116 = arith.constant 0.000000e+00 : f32
    %108 = vector.broadcast %cst_116 : f32 to vector<8x1117xf32>
    %109 = arith.maximumf %107, %108 : vector<8x1117xf32>
    %110 = vector.broadcast %4 : vector<1x1117xf32> to vector<8x1117xf32>
    %111 = arith.mulf %109, %110 : vector<8x1117xf32>
    %112 = arith.truncf %111 : vector<8x1117xf32> to vector<8x1117xbf16>
    %c0_117 = arith.constant 0 : index
    %c36_118 = arith.constant 36 : index
    %113 = vector.load %arg10[%c0_117, %c36_118] : memref<8x1190xbf16, #tpu.memory_space<vmem>>, vector<8x1117xbf16>
    tpu.vector_store %arg10[%c0_117, %c36_118], %112 {strides = array<i32>} : memref<8x1190xbf16, #tpu.memory_space<vmem>>, vector<8x1117xbf16>,
    %c0_119 = arith.constant 0 : index
    %c0_120 = arith.constant 0 : index
    %114 = vector.load %arg10[%c0_119, %c0_120] : memref<8x1190xbf16, #tpu.memory_space<vmem>>, vector<8x1117xbf16>
    %c0_121 = arith.constant 0 : index
    %c0_122 = arith.constant 0 : index
    %115 = vector.load %arg11[%c0_121, %c0_122] : memref<72x1117xbf16, #tpu.memory_space<vmem>>, vector<8x1117xbf16>
    tpu.vector_store %arg11[%c0_121, %c0_122], %114 {strides = array<i32>} : memref<72x1117xbf16, #tpu.memory_space<vmem>>, vector<8x1117xbf16>,
    %c0_123 = arith.constant 0 : index
    %c1_124 = arith.constant 1 : index
    %116 = vector.load %arg10[%c0_123, %c1_124] : memref<8x1190xbf16, #tpu.memory_space<vmem>>, vector<8x1117xbf16>
    %c8_125 = arith.constant 8 : index
    %c0_126 = arith.constant 0 : index
    %117 = vector.load %arg11[%c8_125, %c0_126] : memref<72x1117xbf16, #tpu.memory_space<vmem>>, vector<8x1117xbf16>
    tpu.vector_store %arg11[%c8_125, %c0_126], %116 {strides = array<i32>} : memref<72x1117xbf16, #tpu.memory_space<vmem>>, vector<8x1117xbf16>,
    %c0_127 = arith.constant 0 : index
    %c2_128 = arith.constant 2 : index
    %118 = vector.load %arg10[%c0_127, %c2_128] : memref<8x1190xbf16, #tpu.memory_space<vmem>>, vector<8x1117xbf16>
    %c16_129 = arith.constant 16 : index
    %c0_130 = arith.constant 0 : index
    %119 = vector.load %arg11[%c16_129, %c0_130] : memref<72x1117xbf16, #tpu.memory_space<vmem>>, vector<8x1117xbf16>
    tpu.vector_store %arg11[%c16_129, %c0_130], %118 {strides = array<i32>} : memref<72x1117xbf16, #tpu.memory_space<vmem>>, vector<8x1117xbf16>,
    %c0_131 = arith.constant 0 : index
    %c35_132 = arith.constant 35 : index
    %120 = vector.load %arg10[%c0_131, %c35_132] : memref<8x1190xbf16, #tpu.memory_space<vmem>>, vector<8x1117xbf16>
    %c24_133 = arith.constant 24 : index
    %c0_134 = arith.constant 0 : index
    %121 = vector.load %arg11[%c24_133, %c0_134] : memref<72x1117xbf16, #tpu.memory_space<vmem>>, vector<8x1117xbf16>
    tpu.vector_store %arg11[%c24_133, %c0_134], %120 {strides = array<i32>} : memref<72x1117xbf16, #tpu.memory_space<vmem>>, vector<8x1117xbf16>,
    %c0_135 = arith.constant 0 : index
    %c36_136 = arith.constant 36 : index
    %122 = vector.load %arg10[%c0_135, %c36_136] : memref<8x1190xbf16, #tpu.memory_space<vmem>>, vector<8x1117xbf16>
    %c32_137 = arith.constant 32 : index
    %c0_138 = arith.constant 0 : index
    %123 = vector.load %arg11[%c32_137, %c0_138] : memref<72x1117xbf16, #tpu.memory_space<vmem>>, vector<8x1117xbf16>
    tpu.vector_store %arg11[%c32_137, %c0_138], %122 {strides = array<i32>} : memref<72x1117xbf16, #tpu.memory_space<vmem>>, vector<8x1117xbf16>,
    %c0_139 = arith.constant 0 : index
    %c37_140 = arith.constant 37 : index
    %124 = vector.load %arg10[%c0_139, %c37_140] : memref<8x1190xbf16, #tpu.memory_space<vmem>>, vector<8x1117xbf16>
    %c40_141 = arith.constant 40 : index
    %c0_142 = arith.constant 0 : index
    %125 = vector.load %arg11[%c40_141, %c0_142] : memref<72x1117xbf16, #tpu.memory_space<vmem>>, vector<8x1117xbf16>
    tpu.vector_store %arg11[%c40_141, %c0_142], %124 {strides = array<i32>} : memref<72x1117xbf16, #tpu.memory_space<vmem>>, vector<8x1117xbf16>,
    %c0_143 = arith.constant 0 : index
    %c70_144 = arith.constant 70 : index
    %126 = vector.load %arg10[%c0_143, %c70_144] : memref<8x1190xbf16, #tpu.memory_space<vmem>>, vector<8x1117xbf16>
    %c48_145 = arith.constant 48 : index
    %c0_146 = arith.constant 0 : index
    %127 = vector.load %arg11[%c48_145, %c0_146] : memref<72x1117xbf16, #tpu.memory_space<vmem>>, vector<8x1117xbf16>
    tpu.vector_store %arg11[%c48_145, %c0_146], %126 {strides = array<i32>} : memref<72x1117xbf16, #tpu.memory_space<vmem>>, vector<8x1117xbf16>,
    %c0_147 = arith.constant 0 : index
    %c71_148 = arith.constant 71 : index
    %128 = vector.load %arg10[%c0_147, %c71_148] : memref<8x1190xbf16, #tpu.memory_space<vmem>>, vector<8x1117xbf16>
    %c56_149 = arith.constant 56 : index
    %c0_150 = arith.constant 0 : index
    %129 = vector.load %arg11[%c56_149, %c0_150] : memref<72x1117xbf16, #tpu.memory_space<vmem>>, vector<8x1117xbf16>
    tpu.vector_store %arg11[%c56_149, %c0_150], %128 {strides = array<i32>} : memref<72x1117xbf16, #tpu.memory_space<vmem>>, vector<8x1117xbf16>,
    %c0_151 = arith.constant 0 : index
    %c72_152 = arith.constant 72 : index
    %130 = vector.load %arg10[%c0_151, %c72_152] : memref<8x1190xbf16, #tpu.memory_space<vmem>>, vector<8x1117xbf16>
    %c64_153 = arith.constant 64 : index
    %c0_154 = arith.constant 0 : index
    %131 = vector.load %arg11[%c64_153, %c0_154] : memref<72x1117xbf16, #tpu.memory_space<vmem>>, vector<8x1117xbf16>
    tpu.vector_store %arg11[%c64_153, %c0_154], %130 {strides = array<i32>} : memref<72x1117xbf16, #tpu.memory_space<vmem>>, vector<8x1117xbf16>,
    %c0_155 = arith.constant 0 : index
    %c0_156 = arith.constant 0 : index
    %132 = vector.load %arg6[%c0_155, %c0_156] : memref<8x72xbf16, #tpu.memory_space<vmem>>, vector<8x72xbf16>
    %c0_157 = arith.constant 0 : index
    %c0_158 = arith.constant 0 : index
    %133 = vector.load %arg11[%c0_157, %c0_158] : memref<72x1117xbf16, #tpu.memory_space<vmem>>, vector<72x1117xbf16>
    %cst_159 = arith.constant dense<0.000000e+00> : vector<8x1117xf32>
    %134 = tpu.matmul %132, %133, %cst_159 {dimension_numbers = #tpu.dot_dimension_numbers<[1], [0], [0], [1], [0, 0, 1, 1], [], []>} : vector<8x72xbf16>, vector<72x1117xbf16>, vector<8x1117xf32> -> vector<8x1117xf32>
    %c0_160 = arith.constant 0 : index
    %c0_161 = arith.constant 0 : index
    %135 = vector.load %arg7[%c0_160, %c0_161] : memref<8x1xf32, #tpu.memory_space<vmem>>, vector<8x1xf32>
    %136 = vector.broadcast %135 : vector<8x1xf32> to vector<8x1117xf32>
    %137 = arith.addf %134, %136 : vector<8x1117xf32>
    %cst_162 = arith.constant 0.000000e+00 : f32
    %138 = vector.broadcast %cst_162 : f32 to vector<8x1117xf32>
    %139 = arith.maximumf %137, %138 : vector<8x1117xf32>
    %140 = vector.broadcast %4 : vector<1x1117xf32> to vector<8x1117xf32>
    %141 = arith.mulf %139, %140 : vector<8x1117xf32>
    %cst_163 = arith.constant 0.000000e+00 : f32
    %142 = vector.broadcast %cst_163 : f32 to vector<8x36xf32>
    %c0_164 = arith.constant 0 : index
    %c0_165 = arith.constant 0 : index
    %c0_166 = arith.constant 0 : index
    %143 = vector.load %arg9[%c0_164, %c0_165, %c0_166] : memref<1x8x1190xf32, #tpu.memory_space<vmem>>, vector<1x8x36xf32>
    %144 = vector.shape_cast %143 : vector<1x8x36xf32> to vector<8x36xf32>
    %145 = vector.shape_cast %142 : vector<8x36xf32> to vector<1x8x36xf32>
    tpu.vector_store %arg9[%c0_164, %c0_165, %c0_166], %145 {strides = array<i32>} : memref<1x8x1190xf32, #tpu.memory_space<vmem>>, vector<1x8x36xf32>,
    %c0_167 = arith.constant 0 : index
    %c0_168 = arith.constant 0 : index
    %c36_169 = arith.constant 36 : index
    %146 = vector.load %arg9[%c0_167, %c0_168, %c36_169] : memref<1x8x1190xf32, #tpu.memory_space<vmem>>, vector<1x8x1117xf32>
    %147 = vector.shape_cast %146 : vector<1x8x1117xf32> to vector<8x1117xf32>
    %148 = vector.shape_cast %141 : vector<8x1117xf32> to vector<1x8x1117xf32>
    tpu.vector_store %arg9[%c0_167, %c0_168, %c36_169], %148 {strides = array<i32>} : memref<1x8x1190xf32, #tpu.memory_space<vmem>>, vector<1x8x1117xf32>,
    %cst_170 = arith.constant 0.000000e+00 : f32
    %149 = vector.broadcast %cst_170 : f32 to vector<8x37xf32>
    %c0_171 = arith.constant 0 : index
    %c0_172 = arith.constant 0 : index
    %c1153_173 = arith.constant 1153 : index
    %150 = vector.load %arg9[%c0_171, %c0_172, %c1153_173] : memref<1x8x1190xf32, #tpu.memory_space<vmem>>, vector<1x8x37xf32>
    %151 = vector.shape_cast %150 : vector<1x8x37xf32> to vector<8x37xf32>
    %152 = vector.shape_cast %149 : vector<8x37xf32> to vector<1x8x37xf32>
    tpu.vector_store %arg9[%c0_171, %c0_172, %c1153_173], %152 {strides = array<i32>} : memref<1x8x1190xf32, #tpu.memory_space<vmem>>, vector<1x8x37xf32>,
    return
  }
  func.func @transform_0(%arg0: i32) -> (i32, i32, i32) {
    %c0_i32 = arith.constant 0 : i32
    %c0_i32_0 = arith.constant 0 : i32
    %c0_i32_1 = arith.constant 0 : i32
    return %arg0, %c0_i32, %c0_i32_0 : i32, i32, i32
  }
  func.func @transform_1(%arg0: i32) -> (i32, i32) {
    %c0_i32 = arith.constant 0 : i32
    %c0_i32_0 = arith.constant 0 : i32
    %c0_i32_1 = arith.constant 0 : i32
    return %c0_i32, %c0_i32_0 : i32, i32
  }
  func.func @transform_2(%arg0: i32) -> (i32, i32) {
    %c0_i32 = arith.constant 0 : i32
    %c0_i32_0 = arith.constant 0 : i32
    %c0_i32_1 = arith.constant 0 : i32
    return %c0_i32, %c0_i32_0 : i32, i32
  }
  func.func @transform_3(%arg0: i32) -> (i32, i32) {
    %c0_i32 = arith.constant 0 : i32
    %c0_i32_0 = arith.constant 0 : i32
    %c0_i32_1 = arith.constant 0 : i32
    return %c0_i32, %c0_i32_0 : i32, i32
  }
  func.func @transform_4(%arg0: i32) -> (i32, i32) {
    %c0_i32 = arith.constant 0 : i32
    %c0_i32_0 = arith.constant 0 : i32
    %c0_i32_1 = arith.constant 0 : i32
    return %c0_i32, %c0_i32_0 : i32, i32
  }
  func.func @transform_5(%arg0: i32) -> (i32, i32) {
    %c0_i32 = arith.constant 0 : i32
    %c0_i32_0 = arith.constant 0 : i32
    %c0_i32_1 = arith.constant 0 : i32
    return %c0_i32, %c0_i32_0 : i32, i32
  }
  func.func @transform_6(%arg0: i32) -> (i32, i32) {
    %c0_i32 = arith.constant 0 : i32
    %c0_i32_0 = arith.constant 0 : i32
    %c0_i32_1 = arith.constant 0 : i32
    return %c0_i32, %c0_i32_0 : i32, i32
  }
  func.func @transform_7(%arg0: i32) -> (i32, i32) {
    %c0_i32 = arith.constant 0 : i32
    %c0_i32_0 = arith.constant 0 : i32
    %c0_i32_1 = arith.constant 0 : i32
    return %c0_i32, %c0_i32_0 : i32, i32
  }
  func.func @transform_8(%arg0: i32) -> (i32, i32, i32) {
    %c0_i32 = arith.constant 0 : i32
    %c0_i32_0 = arith.constant 0 : i32
    %c0_i32_1 = arith.constant 0 : i32
    return %arg0, %c0_i32, %c0_i32_0 : i32, i32, i32
  }
}

</mosaic_0001>

<llo_original>
// kernel: upsampling_forward.1
$region0: #{upsampling_forward.1}
  #allocation0 [shape = 'u32[]', space=smem, size = 0x4, offset = 0x4, fixed_abs, tag = 'smem constant byte address 0x4 - core index']
  #allocation1 [shape = 'u32[144,128]{1,0:T(1,128)}', space=vmem, size = 0x12000, scoped, tag = 'internal scratch']
  #allocation2 [shape = 'bf16[8,1190]{1,0:T(8,128)(2,1)}', space=vmem, size = 0x5000, scoped, tag = 'scratch operand']
  #allocation3 [shape = 'bf16[72,1117]{1,0:T(8,128)(2,1)}', space=vmem, size = 0x28800, scoped, tag = 'scratch operand']
  %s0 = inlined_call_operand.vmem [shape: bf16[2,4,1225], index: 0, kind: input, shape index: {}]
  %s1 = inlined_call_operand.vmem [shape: bf16[32,64], index: 1, kind: input, shape index: {}]
  %s2 = inlined_call_operand.vmem [shape: f32[8,1], index: 2, kind: input, shape index: {}]
  %s3 = inlined_call_operand.vmem [shape: bf16[8,72], index: 3, kind: input, shape index: {}]
  %s4 = inlined_call_operand.vmem [shape: f32[8,1], index: 4, kind: input, shape index: {}]
  %s5 = inlined_call_operand.vmem [shape: bf16[8,72], index: 5, kind: input, shape index: {}]
  %s6 = inlined_call_operand.vmem [shape: f32[8,1], index: 6, kind: input, shape index: {}]
  %s7 = inlined_call_operand.vmem [shape: f32[5,1117], index: 7, kind: input, shape index: {}]
  %s8 = inlined_call_operand.vmem [shape: f32[2,8,1190], index: 8, kind: output, shape index: {}]
  %s9 = sld [smem:[#allocation0]]
  $region65: #{upsampling_forward.1} parent=0
    _
  %s11 = ssub.s32 1, %s9
  %s12 = scalar_select 0, %s11, %s9
  loop: start=0, step=1, limit=4
  $region2: #{upsampling_forward.1} parent=0 // loop_pre_header
    _
  $region3: #{upsampling_forward.1} parent=0 // loop_header
    %s14 = sphi 0, %s18
    %p15 = scmp.ge.s32.totalorder %s14, 4
    %s24 = sphi 0, %s26
    %s27 = sphi 0, %s24
    %s28 = sphi 0, %s27
    %s44 = sphi 0, %s28
    %s48 = sphi 0, %s48
    %s50 = sphi 0, %s48
    %s51 = sphi 0, %s50
    %s65 = sphi 0, %s51
    %s69 = sphi 0, %s69
    %s71 = sphi 0, %s69
    %s72 = sphi 0, %s71
    %s86 = sphi 0, %s72
    %s90 = sphi 0, %s90
    %s92 = sphi 0, %s90
    %s93 = sphi 0, %s92
    %s107 = sphi 0, %s93
    %s111 = sphi 0, %s111
    %s113 = sphi 0, %s111
    %s114 = sphi 0, %s113
    %s128 = sphi 0, %s114
    %s132 = sphi 0, %s132
    %s134 = sphi 0, %s132
    %s135 = sphi 0, %s134
    %s149 = sphi 0, %s135
    %s153 = sphi 0, %s153
    %s155 = sphi 0, %s153
    %s156 = sphi 0, %s155
    %s170 = sphi 0, %s156
    %s174 = sphi 0, %s174
    %s176 = sphi 0, %s174
    %s177 = sphi 0, %s176
    %s191 = sphi 0, %s177
    %s197 = sphi 0, %s199
    %s200 = sphi 0, %s197
    %s201 = sphi 0, %s200
    %s217 = sphi 0, %s201
  $region4: #{upsampling_forward.1} parent=0 // loop_header_branch
    %17 = sbr.rel (%p15) target = $region8
  $region5: #{upsampling_forward.1} parent=0 // loop_body
    %s19 = ssub.s32 %s14, 1
    %s20 = ssub.s32 %s14, 2
    %s21 = sadd.s32 %s14, 1
    %s22 = ssub.s32 %s14, %s21
    %p23 = scmp.eq.s32.totalorder %s22, 0
    %s25 = sadd.s32 %s24, 1
    %s26 = scalar_select %p23, %s24, %s25
    %p29 = pneg %p23
    %p30 = scmp.eq.s32.totalorder %s14, 1
    %p31 = por %p29, %p30
    %p32 = scmp.ne.s32.totalorder %s24, %s27
    %p33 = scmp.eq.s32.totalorder %s14, 0
    %p34 = por %p32, %p33
    %p35 = scmp.ne.s32.totalorder %s24, %s27
    %p36 = scmp.eq.s32.totalorder %s19, 1
    %p37 = por %p35, %p36
    %p38 = scmp.ne.s32.totalorder %s27, %s28
    %p39 = scmp.eq.s32.totalorder %s19, 0
    %p40 = por %p38, %p39
    %p41 = scmp.ne.s32.totalorder %s27, %s28
    %p42 = scmp.eq.s32.totalorder %s20, 1
    %p43 = por %p41, %p42
    %p45 = scmp.ne.s32.totalorder %s28, %s44
    %p46 = scmp.eq.s32.totalorder %s20, 0
    %p47 = por %p45, %p46
    %s49 = sadd.s32 %s48, 1
    %p52 = scmp.eq.s32.totalorder %s14, 1
    %p53 = scmp.ne.s32.totalorder %s48, %s50
    %p54 = scmp.eq.s32.totalorder %s14, 0
    %p55 = por %p53, %p54
    %p56 = scmp.ne.s32.totalorder %s48, %s50
    %p57 = scmp.eq.s32.totalorder %s19, 1
    %p58 = por %p56, %p57
    %p59 = scmp.ne.s32.totalorder %s50, %s51
    %p60 = scmp.eq.s32.totalorder %s19, 0
    %p61 = por %p59, %p60
    %p62 = scmp.ne.s32.totalorder %s50, %s51
    %p63 = scmp.eq.s32.totalorder %s20, 1
    %p64 = por %p62, %p63
    %p66 = scmp.ne.s32.totalorder %s51, %s65
    %p67 = scmp.eq.s32.totalorder %s20, 0
    %p68 = por %p66, %p67
    %s70 = sadd.s32 %s69, 1
    %p73 = scmp.eq.s32.totalorder %s14, 1
    %p74 = scmp.ne.s32.totalorder %s69, %s71
    %p75 = scmp.eq.s32.totalorder %s14, 0
    %p76 = por %p74, %p75
    %p77 = scmp.ne.s32.totalorder %s69, %s71
    %p78 = scmp.eq.s32.totalorder %s19, 1
    %p79 = por %p77, %p78
    %p80 = scmp.ne.s32.totalorder %s71, %s72
    %p81 = scmp.eq.s32.totalorder %s19, 0
    %p82 = por %p80, %p81
    %p83 = scmp.ne.s32.totalorder %s71, %s72
    %p84 = scmp.eq.s32.totalorder %s20, 1
    %p85 = por %p83, %p84
    %p87 = scmp.ne.s32.totalorder %s72, %s86
    %p88 = scmp.eq.s32.totalorder %s20, 0
    %p89 = por %p87, %p88
    %s91 = sadd.s32 %s90, 1
    %p94 = scmp.eq.s32.totalorder %s14, 1
    %p95 = scmp.ne.s32.totalorder %s90, %s92
    %p96 = scmp.eq.s32.totalorder %s14, 0
    %p97 = por %p95, %p96
    %p98 = scmp.ne.s32.totalorder %s90, %s92
    %p99 = scmp.eq.s32.totalorder %s19, 1
    %p100 = por %p98, %p99
    %p101 = scmp.ne.s32.totalorder %s92, %s93
    %p102 = scmp.eq.s32.totalorder %s19, 0
    %p103 = por %p101, %p102
    %p104 = scmp.ne.s32.totalorder %s92, %s93
    %p105 = scmp.eq.s32.totalorder %s20, 1
    %p106 = por %p104, %p105
    %p108 = scmp.ne.s32.totalorder %s93, %s107
    %p109 = scmp.eq.s32.totalorder %s20, 0
    %p110 = por %p108, %p109
    %s112 = sadd.s32 %s111, 1
    %p115 = scmp.eq.s32.totalorder %s14, 1
    %p116 = scmp.ne.s32.totalorder %s111, %s113
    %p117 = scmp.eq.s32.totalorder %s14, 0
    %p118 = por %p116, %p117
    %p119 = scmp.ne.s32.totalorder %s111, %s113
    %p120 = scmp.eq.s32.totalorder %s19, 1
    %p121 = por %p119, %p120
    %p122 = scmp.ne.s32.totalorder %s113, %s114
    %p123 = scmp.eq.s32.totalorder %s19, 0
    %p124 = por %p122, %p123
    %p125 = scmp.ne.s32.totalorder %s113, %s114
    %p126 = scmp.eq.s32.totalorder %s20, 1
    %p127 = por %p125, %p126
    %p129 = scmp.ne.s32.totalorder %s114, %s128
    %p130 = scmp.eq.s32.totalorder %s20, 0
    %p131 = por %p129, %p130
    %s133 = sadd.s32 %s132, 1
    %p136 = scmp.eq.s32.totalorder %s14, 1
    %p137 = scmp.ne.s32.totalorder %s132, %s134
    %p138 = scmp.eq.s32.totalorder %s14, 0
    %p139 = por %p137, %p138
    %p140 = scmp.ne.s32.totalorder %s132, %s134
    %p141 = scmp.eq.s32.totalorder %s19, 1
    %p142 = por %p140, %p141
    %p143 = scmp.ne.s32.totalorder %s134, %s135
    %p144 = scmp.eq.s32.totalorder %s19, 0
    %p145 = por %p143, %p144
    %p146 = scmp.ne.s32.totalorder %s134, %s135
    %p147 = scmp.eq.s32.totalorder %s20, 1
    %p148 = por %p146, %p147
    %p150 = scmp.ne.s32.totalorder %s135, %s149
    %p151 = scmp.eq.s32.totalorder %s20, 0
    %p152 = por %p150, %p151
    %s154 = sadd.s32 %s153, 1
    %p157 = scmp.eq.s32.totalorder %s14, 1
    %p158 = scmp.ne.s32.totalorder %s153, %s155
    %p159 = scmp.eq.s32.totalorder %s14, 0
    %p160 = por %p158, %p159
    %p161 = scmp.ne.s32.totalorder %s153, %s155
    %p162 = scmp.eq.s32.totalorder %s19, 1
    %p163 = por %p161, %p162
    %p164 = scmp.ne.s32.totalorder %s155, %s156
    %p165 = scmp.eq.s32.totalorder %s19, 0
    %p166 = por %p164, %p165
    %p167 = scmp.ne.s32.totalorder %s155, %s156
    %p168 = scmp.eq.s32.totalorder %s20, 1
    %p169 = por %p167, %p168
    %p171 = scmp.ne.s32.totalorder %s156, %s170
    %p172 = scmp.eq.s32.totalorder %s20, 0
    %p173 = por %p171, %p172
    %s175 = sadd.s32 %s174, 1
    %p178 = scmp.eq.s32.totalorder %s14, 1
    %p179 = scmp.ne.s32.totalorder %s174, %s176
    %p180 = scmp.eq.s32.totalorder %s14, 0
    %p181 = por %p179, %p180
    %p182 = scmp.ne.s32.totalorder %s174, %s176
    %p183 = scmp.eq.s32.totalorder %s19, 1
    %p184 = por %p182, %p183
    %p185 = scmp.ne.s32.totalorder %s176, %s177
    %p186 = scmp.eq.s32.totalorder %s19, 0
    %p187 = por %p185, %p186
    %p188 = scmp.ne.s32.totalorder %s176, %s177
    %p189 = scmp.eq.s32.totalorder %s20, 1
    %p190 = por %p188, %p189
    %p192 = scmp.ne.s32.totalorder %s177, %s191
    %p193 = scmp.eq.s32.totalorder %s20, 0
    %p194 = por %p192, %p193
    %s195 = ssub.s32 %s14, %s21
    %p196 = scmp.eq.s32.totalorder %s195, 0
    %s198 = sadd.s32 %s197, 1
    %s199 = scalar_select %p196, %s197, %s198
    %p202 = pneg %p196
    %p203 = scmp.eq.s32.totalorder %s14, 1
    %p204 = por %p202, %p203
    %p205 = scmp.ne.s32.totalorder %s197, %s200
    %p206 = scmp.eq.s32.totalorder %s14, 0
    %p207 = por %p205, %p206
    %p208 = scmp.ne.s32.totalorder %s197, %s200
    %p209 = scmp.eq.s32.totalorder %s19, 1
    %p210 = por %p208, %p209
    %p211 = scmp.ne.s32.totalorder %s200, %s201
    %p212 = scmp.eq.s32.totalorder %s19, 0
    %p213 = por %p211, %p212
    %p214 = scmp.ne.s32.totalorder %s200, %s201
    %p215 = scmp.eq.s32.totalorder %s20, 1
    %p216 = por %p214, %p215
    %p218 = scmp.ne.s32.totalorder %s201, %s217
    %p219 = scmp.eq.s32.totalorder %s20, 0
    %p220 = por %p218, %p219
    %p221 = scmp.le.s32.totalorder 1, %s14
    %p222 = scmp.lt.s32.totalorder %s14, 3
    %p223 = pnand %p221, %p222
    %p224 = pneg %p223
    // Predicated region
    $region9: #{upsampling_forward.1} parent=5 // pred_check
      _
    $region10: #{upsampling_forward.1} parent=5 // pred_check_branch
      %226 = sbr.rel (%p223) target = $region12
    $region11: #{upsampling_forward.1} parent=5 // pred_region
      %s227 = ssub.s32 %s14, 1
      // Predicated region
      $region13: #{upsampling_forward.1} parent=11 // pred_check
        %p228 = pneg %p61
      $region14: #{upsampling_forward.1} parent=11 // pred_check_branch
        %230 = sbr.rel (%p228) target = $region16
      $region15: #{upsampling_forward.1} parent=11 // pred_region
        _
      $region16: #{upsampling_forward.1} parent=11 // pred_fallthru
        _
      // Predicated region
      $region17: #{upsampling_forward.1} parent=11 // pred_check
        %p231 = pneg %p82
      $region18: #{upsampling_forward.1} parent=11 // pred_check_branch
        %233 = sbr.rel (%p231) target = $region20
      $region19: #{upsampling_forward.1} parent=11 // pred_region
        _
      $region20: #{upsampling_forward.1} parent=11 // pred_fallthru
        _
      // Predicated region
      $region21: #{upsampling_forward.1} parent=11 // pred_check
        %p234 = pneg %p103
      $region22: #{upsampling_forward.1} parent=11 // pred_check_branch
        %236 = sbr.rel (%p234) target = $region24
      $region23: #{upsampling_forward.1} parent=11 // pred_region
        _
      $region24: #{upsampling_forward.1} parent=11 // pred_fallthru
        _
      // Predicated region
      $region25: #{upsampling_forward.1} parent=11 // pred_check
        %p237 = pneg %p124
      $region26: #{upsampling_forward.1} parent=11 // pred_check_branch
        %239 = sbr.rel (%p237) target = $region28
      $region27: #{upsampling_forward.1} parent=11 // pred_region
        _
      $region28: #{upsampling_forward.1} parent=11 // pred_fallthru
        _
      // Predicated region
      $region29: #{upsampling_forward.1} parent=11 // pred_check
        %p240 = pneg %p145
      $region30: #{upsampling_forward.1} parent=11 // pred_check_branch
        %242 = sbr.rel (%p240) target = $region32
      $region31: #{upsampling_forward.1} parent=11 // pred_region
        _
      $region32: #{upsampling_forward.1} parent=11 // pred_fallthru
        _
      // Predicated region
      $region33: #{upsampling_forward.1} parent=11 // pred_check
        %p243 = pneg %p166
      $region34: #{upsampling_forward.1} parent=11 // pred_check_branch
        %245 = sbr.rel (%p243) target = $region36
      $region35: #{upsampling_forward.1} parent=11 // pred_region
        _
      $region36: #{upsampling_forward.1} parent=11 // pred_fallthru
        _
      // Predicated region
      $region37: #{upsampling_forward.1} parent=11 // pred_check
        %p246 = pneg %p187
      $region38: #{upsampling_forward.1} parent=11 // pred_check_branch
        %248 = sbr.rel (%p246) target = $region40
      $region39: #{upsampling_forward.1} parent=11 // pred_region
        _
      $region40: #{upsampling_forward.1} parent=11 // pred_fallthru
        _
    $region12: #{upsampling_forward.1} parent=5 // pred_fallthru
      _
    %p249 = scmp.lt.s32.totalorder %s14, 2
    // Predicated region
    $region41: #{upsampling_forward.1} parent=5 // pred_check
      %p250 = pneg %p249
    $region42: #{upsampling_forward.1} parent=5 // pred_check_branch
      %252 = sbr.rel (%p250) target = $region44
    $region43: #{upsampling_forward.1} parent=5 // pred_region
      // Predicated region
      $region45: #{upsampling_forward.1} parent=43 // pred_check
        %p253 = pneg %p34
      $region46: #{upsampling_forward.1} parent=43 // pred_check_branch
        %255 = sbr.rel (%p253) target = $region48
      $region47: #{upsampling_forward.1} parent=43 // pred_region
        %p256 = scmp.lt.s32.totalorder %s14, 1
        %s257 = scalar_select %p256, %s14, 1
        %s258 = smul.addr %s257, 10
        %s259 = smul.addr %s258, 2
        %s260 = scalar_lea.vmem %s0, %s259
      $region48: #{upsampling_forward.1} parent=43 // pred_fallthru
        _
    $region44: #{upsampling_forward.1} parent=5 // pred_fallthru
      _
    %p261 = scmp.le.s32.totalorder 1, %s14
    %p262 = scmp.lt.s32.totalorder %s14, 3
    %p263 = pnand %p261, %p262
    %p264 = pneg %p263
    // Predicated region
    $region49: #{upsampling_forward.1} parent=5 // pred_check
      _
    $region50: #{upsampling_forward.1} parent=5 // pred_check_branch
      %266 = sbr.rel (%p263) target = $region52
    $region51: #{upsampling_forward.1} parent=5 // pred_region
      %s267 = ssub.s32 %s14, 1
      %p268 = scmp.lt.s32.totalorder %s19, 1
      %s269 = scalar_select %p268, %s19, 1
      %s270 = smul.addr %s269, 10
      %s271 = smul.addr %s270, 2
      %s272 = scalar_lea.vmem %s0, %s271
      %p273 = pneg %p40
      %p274 = pneg %p37
      %p275 = pneg %p61
      %p276 = pneg %p58
      %p277 = pneg %p82
      %p278 = pneg %p79
      %p279 = pneg %p103
      %p280 = pneg %p100
      %p281 = pneg %p124
      %p282 = pneg %p121
      %p283 = pneg %p145
      %p284 = pneg %p142
      %p285 = pneg %p166
      %p286 = pneg %p163
      %p287 = pneg %p187
      %p288 = pneg %p184
      %p289 = pneg %p213
      %p290 = pneg %p210
      %p291 = scmp.lt.s32.totalorder %s19, 1
      %s292 = scalar_select %p291, %s19, 1
      %s293 = smul.addr %s292, 10
      %s294 = smul.addr %s293, 8
      %s295 = scalar_lea.vmem %s8, %s294
      %p296 = scmp.lt.s32.totalorder %s19, 1
      %s297 = scalar_select %p296, %s19, 1
      %s298 = smul.addr %s297, 10
      %s299 = smul.addr %s298, 2
      %s300 = scalar_lea.vmem %s0, %s299
      %p301 = scmp.lt.s32.totalorder %s19, 1
      %s302 = scalar_select %p301, %s19, 1
      %s303 = smul.addr %s302, 10
      %s304 = smul.addr %s303, 8
      %s305 = scalar_lea.vmem %s8, %s304
      %vm307 = vcmask 289792
      %308 = vst.msk [vmem:[#allocation2] sm:$0xf] %vm307, 0
      %vm309 = vcmask 306184
      %310 = vst.msk [vmem:[#allocation2 + $0x24] sm:$0xf] %vm309, 0
      %s311 = scalar_lea.vmem %s7, 4
      %v312 = vld [vmem:[%s311] ss:$8 sm:$0xf]
      %v313 = vld [vmem:[%s311] ss:$8 sm:$0xf0]
      %v314 = vor.u32 %v312, %v313
      %s315 = scalar_lea.vmem %s7, 68
      %v316 = vld [vmem:[%s315] ss:$8 sm:$0x1]
      %v317 = vld [vmem:[%s300] sm:$0xff]
      %v318 = vld [vmem:[%s300 + $0x8] sm:$0xff]
      %v319 = vld [vmem:[%s300 + $0x10] sm:$0xf]
      %v323 = vcombine.high %v317, %v317
      %v325 = vunpack.c.l.s4 1983009808
      %v326 = vunpack.c.0.s8 %v325
      %v327 = vlaneseq
      %v328 = vshrl.u32 %v327, 7
      %v329 = vsub.s32 %v326, %v328
      %v330 = vrot.slane %v317, %v329
      %v332 = vunpack.c.l.s4 1983009808
      %v333 = vunpack.c.0.s8 %v332
      %v334 = vlaneseq
      %v335 = vshrl.u32 %v334, 7
      %v336 = vsub.s32 %v333, %v335
      %v337 = vrot.slane %v323, %v336
      %v338 = vcombine.high %v318, %v318
      %v340 = vunpack.c.l.s4 1983009808
      %v341 = vunpack.c.0.s8 %v340
      %v342 = vlaneseq
      %v343 = vshrl.u32 %v342, 7
      %v344 = vsub.s32 %v341, %v343
      %v345 = vrot.slane %v318, %v344
      %v347 = vunpack.c.l.s4 1983009808
      %v348 = vunpack.c.0.s8 %v347
      %v349 = vlaneseq
      %v350 = vshrl.u32 %v349, 7
      %v351 = vsub.s32 %v348, %v350
      %v352 = vrot.slane %v338, %v351
      %v354 = vunpack.c.l.s4 1983009808
      %v355 = vunpack.c.0.s8 %v354
      %v356 = vlaneseq
      %v357 = vshrl.u32 %v356, 7
      %v358 = vsub.s32 %v355, %v357
      %v359 = vrot.slane %v319, %v358
      %360 = vrot.lane.b32.xlu0 %v330, 20
      %v361 = vpop.permute.xlu0 %360
      %362 = vrot.lane.b32.xlu0 %v337, 20
      %v363 = vpop.permute.xlu0 %362
      %364 = vrot.lane.b32.xlu0 %v345, 20
      %v365 = vpop.permute.xlu0 %364
      %366 = vrot.lane.b32.xlu0 %v352, 20
      %v367 = vpop.permute.xlu0 %366
      %368 = vrot.lane.b32.xlu0 %v359, 20
      %v369 = vpop.permute.xlu0 %368
      %v370 = vrot.slane %v361, 4
      %v371 = vrot.slane %v363, 4
      %v372 = vrot.slane %v365, 4
      %v373 = vrot.slane %v367, 4
      %v374 = vrot.slane %v369, 4
      %vm375 = vcmask 1043456
      %v376 = vsel %vm375, %v370, %v371
      %vm377 = vcmask 162816
      %v378 = vsel %vm377, %v361, %v376
      %v379 = vsel %vm375, %v371, %v372
      %v380 = vsel %vm377, %v363, %v379
      %v381 = vsel %vm375, %v372, %v373
      %v382 = vsel %vm377, %v365, %v381
      %v383 = vsel %vm375, %v373, %v374
      %v384 = vsel %vm377, %v367, %v383
      %v385 = vsel %vm377, %v369, %v374
      %391 = vst [vmem:[#allocation3] sm:$0x33] %v378
      %392 = vst [vmem:[#allocation3 + $0x8] sm:$0x33] %v380
      %393 = vst [vmem:[#allocation3 + $0x10] sm:$0x33] %v382
      %394 = vst [vmem:[#allocation3 + $0x18] sm:$0x33] %v384
      %vm395 = vcmask 754688
      %396 = vst.msk [vmem:[#allocation3 + $0x20] sm:$0x3] %vm395, %v385
      %v397 = vld [vmem:[%s300] sm:$0xff]
      %v398 = vld [vmem:[%s300 + $0x8] sm:$0xff]
      %v399 = vld [vmem:[%s300 + $0x10] sm:$0xf]
      %v403 = vcombine.low %v397, %v397
      %v405 = vunpack.c.l.s4 1983009808
      %v406 = vunpack.c.0.s8 %v405
      %v407 = vlaneseq
      %v408 = vshrl.u32 %v407, 7
      %v409 = vsub.s32 %v406, %v408
      %v410 = vrot.slane %v403, %v409
      %v412 = vunpack.c.l.s4 1983009808
      %v413 = vunpack.c.0.s8 %v412
      %v414 = vlaneseq
      %v415 = vshrl.u32 %v414, 7
      %v416 = vsub.s32 %v413, %v415
      %v417 = vrot.slane %v397, %v416
      %v418 = vcombine.low %v398, %v398
      %v420 = vunpack.c.l.s4 1983009808
      %v421 = vunpack.c.0.s8 %v420
      %v422 = vlaneseq
      %v423 = vshrl.u32 %v422, 7
      %v424 = vsub.s32 %v421, %v423
      %v425 = vrot.slane %v418, %v424
      %v427 = vunpack.c.l.s4 1983009808
      %v428 = vunpack.c.0.s8 %v427
      %v429 = vlaneseq
      %v430 = vshrl.u32 %v429, 7
      %v431 = vsub.s32 %v428, %v430
      %v432 = vrot.slane %v398, %v431
      %v433 = vcombine.low %v399, %v399
      %v435 = vunpack.c.l.s4 1983009808
      %v436 = vunpack.c.0.s8 %v435
      %v437 = vlaneseq
      %v438 = vshrl.u32 %v437, 7
      %v439 = vsub.s32 %v436, %v438
      %v440 = vrot.slane %v433, %v439
      %441 = vrot.lane.b32.xlu0 %v410, 21
      %v442 = vpop.permute.xlu0 %441
      %443 = vrot.lane.b32.xlu0 %v417, 21
      %v444 = vpop.permute.xlu0 %443
      %445 = vrot.lane.b32.xlu0 %v425, 21
      %v446 = vpop.permute.xlu0 %445
      %447 = vrot.lane.b32.xlu0 %v432, 21
      %v448 = vpop.permute.xlu0 %447
      %449 = vrot.lane.b32.xlu0 %v440, 21
      %v450 = vpop.permute.xlu0 %449
      %v451 = vrot.slane %v442, 4
      %v452 = vrot.slane %v444, 4
      %v453 = vrot.slane %v446, 4
      %v454 = vrot.slane %v448, 4
      %v455 = vrot.slane %v450, 4
      %v456 = vsel %vm375, %v451, %v452
      %vm457 = vcmask 171008
      %v458 = vsel %vm457, %v442, %v456
      %v459 = vsel %vm375, %v452, %v453
      %v460 = vsel %vm457, %v444, %v459
      %v461 = vsel %vm375, %v453, %v454
      %v462 = vsel %vm457, %v446, %v461
      %v463 = vsel %vm375, %v454, %v455
      %v464 = vsel %vm457, %v448, %v463
      %v465 = vsel %vm457, %v450, %v455
      %471 = vst [vmem:[#allocation3] sm:$0xcc] %v458
      %472 = vst [vmem:[#allocation3 + $0x8] sm:$0xcc] %v460
      %473 = vst [vmem:[#allocation3 + $0x10] sm:$0xcc] %v462
      %474 = vst [vmem:[#allocation3 + $0x18] sm:$0xcc] %v464
      %vm475 = vcmask 756738
      %476 = vst.msk [vmem:[#allocation3 + $0x20] sm:$0xc] %vm475, %v465
      %v477 = vld [vmem:[%s300] sm:$0xff]
      %v478 = vld [vmem:[%s300 + $0x8] sm:$0xff]
      %v479 = vld [vmem:[%s300 + $0x10] sm:$0xf]
      %v483 = vcombine.high %v477, %v477
      %v485 = vunpack.c.l.s4 1983009808
      %v486 = vunpack.c.0.s8 %v485
      %v487 = vlaneseq
      %v488 = vshrl.u32 %v487, 7
      %v489 = vsub.s32 %v486, %v488
      %v490 = vrot.slane %v477, %v489
      %v492 = vunpack.c.l.s4 1983009808
      %v493 = vunpack.c.0.s8 %v492
      %v494 = vlaneseq
      %v495 = vshrl.u32 %v494, 7
      %v496 = vsub.s32 %v493, %v495
      %v497 = vrot.slane %v483, %v496
      %v498 = vcombine.high %v478, %v478
      %v500 = vunpack.c.l.s4 1983009808
      %v501 = vunpack.c.0.s8 %v500
      %v502 = vlaneseq
      %v503 = vshrl.u32 %v502, 7
      %v504 = vsub.s32 %v501, %v503
      %v505 = vrot.slane %v478, %v504
      %v507 = vunpack.c.l.s4 1983009808
      %v508 = vunpack.c.0.s8 %v507
      %v509 = vlaneseq
      %v510 = vshrl.u32 %v509, 7
      %v511 = vsub.s32 %v508, %v510
      %v512 = vrot.slane %v498, %v511
      %v514 = vunpack.c.l.s4 1983009808
      %v515 = vunpack.c.0.s8 %v514
      %v516 = vlaneseq
      %v517 = vshrl.u32 %v516, 7
      %v518 = vsub.s32 %v515, %v517
      %v519 = vrot.slane %v479, %v518
      %520 = vrot.lane.b32.xlu0 %v490, 22
      %v521 = vpop.permute.xlu0 %520
      %522 = vrot.lane.b32.xlu0 %v497, 22
      %v523 = vpop.permute.xlu0 %522
      %524 = vrot.lane.b32.xlu0 %v505, 22
      %v525 = vpop.permute.xlu0 %524
      %526 = vrot.lane.b32.xlu0 %v512, 22
      %v527 = vpop.permute.xlu0 %526
      %528 = vrot.lane.b32.xlu0 %v519, 22
      %v529 = vpop.permute.xlu0 %528
      %v530 = vrot.slane %v521, 4
      %v531 = vrot.slane %v523, 4
      %v532 = vrot.slane %v525, 4
      %v533 = vrot.slane %v527, 4
      %v534 = vrot.slane %v529, 4
      %v535 = vsel %vm375, %v530, %v531
      %vm536 = vcmask 179200
      %v537 = vsel %vm536, %v521, %v535
      %v538 = vsel %vm375, %v531, %v532
      %v539 = vsel %vm536, %v523, %v538
      %v540 = vsel %vm375, %v532, %v533
      %v541 = vsel %vm536, %v525, %v540
      %v542 = vsel %vm375, %v533, %v534
      %v543 = vsel %vm536, %v527, %v542
      %v544 = vsel %vm536, %v529, %v534
      %550 = vst [vmem:[#allocation3 + $0x24] sm:$0x33] %v537
      %551 = vst [vmem:[#allocation3 + $0x2c] sm:$0x33] %v539
      %552 = vst [vmem:[#allocation3 + $0x34] sm:$0x33] %v541
      %553 = vst [vmem:[#allocation3 + $0x3c] sm:$0x33] %v543
      %554 = vst.msk [vmem:[#allocation3 + $0x44] sm:$0x3] %vm395, %v544
      %v555 = vld [vmem:[%s300] sm:$0xff]
      %v556 = vld [vmem:[%s300 + $0x8] sm:$0xff]
      %v557 = vld [vmem:[%s300 + $0x10] sm:$0xf]
      %v561 = vcombine.low %v555, %v555
      %v563 = vunpack.c.l.s4 1983009808
      %v564 = vunpack.c.0.s8 %v563
      %v565 = vlaneseq
      %v566 = vshrl.u32 %v565, 7
      %v567 = vsub.s32 %v564, %v566
      %v568 = vrot.slane %v561, %v567
      %v570 = vunpack.c.l.s4 1983009808
      %v571 = vunpack.c.0.s8 %v570
      %v572 = vlaneseq
      %v573 = vshrl.u32 %v572, 7
      %v574 = vsub.s32 %v571, %v573
      %v575 = vrot.slane %v555, %v574
      %v576 = vcombine.low %v556, %v556
      %v578 = vunpack.c.l.s4 1983009808
      %v579 = vunpack.c.0.s8 %v578
      %v580 = vlaneseq
      %v581 = vshrl.u32 %v580, 7
      %v582 = vsub.s32 %v579, %v581
      %v583 = vrot.slane %v576, %v582
      %v585 = vunpack.c.l.s4 1983009808
      %v586 = vunpack.c.0.s8 %v585
      %v587 = vlaneseq
      %v588 = vshrl.u32 %v587, 7
      %v589 = vsub.s32 %v586, %v588
      %v590 = vrot.slane %v556, %v589
      %v591 = vcombine.low %v557, %v557
      %v593 = vunpack.c.l.s4 1983009808
      %v594 = vunpack.c.0.s8 %v593
      %v595 = vlaneseq
      %v596 = vshrl.u32 %v595, 7
      %v597 = vsub.s32 %v594, %v596
      %v598 = vrot.slane %v591, %v597
      %599 = vrot.lane.b32.xlu0 %v568, 23
      %v600 = vpop.permute.xlu0 %599
      %601 = vrot.lane.b32.xlu0 %v575, 23
      %v602 = vpop.permute.xlu0 %601
      %603 = vrot.lane.b32.xlu0 %v583, 23
      %v604 = vpop.permute.xlu0 %603
      %605 = vrot.lane.b32.xlu0 %v590, 23
      %v606 = vpop.permute.xlu0 %605
      %607 = vrot.lane.b32.xlu0 %v598, 23
      %v608 = vpop.permute.xlu0 %607
      %v609 = vrot.slane %v600, 4
      %v610 = vrot.slane %v602, 4
      %v611 = vrot.slane %v604, 4
      %v612 = vrot.slane %v606, 4
      %v613 = vrot.slane %v608, 4
      %v614 = vsel %vm375, %v609, %v610
      %vm615 = vcmask 187392
      %v616 = vsel %vm615, %v600, %v614
      %v617 = vsel %vm375, %v610, %v611
      %v618 = vsel %vm615, %v602, %v617
      %v619 = vsel %vm375, %v611, %v612
      %v620 = vsel %vm615, %v604, %v619
      %v621 = vsel %vm375, %v612, %v613
      %v622 = vsel %vm615, %v606, %v621
      %v623 = vsel %vm615, %v608, %v613
      %629 = vst [vmem:[#allocation3 + $0x24] sm:$0xcc] %v616
      %630 = vst [vmem:[#allocation3 + $0x2c] sm:$0xcc] %v618
      %631 = vst [vmem:[#allocation3 + $0x34] sm:$0xcc] %v620
      %632 = vst [vmem:[#allocation3 + $0x3c] sm:$0xcc] %v622
      %633 = vst.msk [vmem:[#allocation3 + $0x44] sm:$0xc] %vm475, %v623
      %v634 = vld [vmem:[%s300] sm:$0xff]
      %v635 = vld [vmem:[%s300 + $0x8] sm:$0xff]
      %v636 = vld [vmem:[%s300 + $0x10] sm:$0xf]
      %v640 = vcombine.high %v634, %v634
      %v642 = vunpack.c.l.s4 1983009808
      %v643 = vunpack.c.0.s8 %v642
      %v644 = vlaneseq
      %v645 = vshrl.u32 %v644, 7
      %v646 = vsub.s32 %v643, %v645
      %v647 = vrot.slane %v634, %v646
      %v649 = vunpack.c.l.s4 1983009808
      %v650 = vunpack.c.0.s8 %v649
      %v651 = vlaneseq
      %v652 = vshrl.u32 %v651, 7
      %v653 = vsub.s32 %v650, %v652
      %v654 = vrot.slane %v640, %v653
      %v655 = vcombine.high %v635, %v635
      %v657 = vunpack.c.l.s4 1983009808
      %v658 = vunpack.c.0.s8 %v657
      %v659 = vlaneseq
      %v660 = vshrl.u32 %v659, 7
      %v661 = vsub.s32 %v658, %v660
      %v662 = vrot.slane %v635, %v661
      %v664 = vunpack.c.l.s4 1983009808
      %v665 = vunpack.c.0.s8 %v664
      %v666 = vlaneseq
      %v667 = vshrl.u32 %v666, 7
      %v668 = vsub.s32 %v665, %v667
      %v669 = vrot.slane %v655, %v668
      %v671 = vunpack.c.l.s4 1983009808
      %v672 = vunpack.c.0.s8 %v671
      %v673 = vlaneseq
      %v674 = vshrl.u32 %v673, 7
      %v675 = vsub.s32 %v672, %v674
      %v676 = vrot.slane %v636, %v675
      %677 = vrot.lane.b32.xlu0 %v647, 55
      %v678 = vpop.permute.xlu0 %677
      %679 = vrot.lane.b32.xlu0 %v654, 55
      %v680 = vpop.permute.xlu0 %679
      %681 = vrot.lane.b32.xlu0 %v662, 55
      %v682 = vpop.permute.xlu0 %681
      %683 = vrot.lane.b32.xlu0 %v669, 55
      %v684 = vpop.permute.xlu0 %683
      %685 = vrot.lane.b32.xlu0 %v676, 55
      %v686 = vpop.permute.xlu0 %685
      %v687 = vrot.slane %v678, 4
      %v688 = vrot.slane %v680, 4
      %v689 = vrot.slane %v682, 4
      %v690 = vrot.slane %v684, 4
      %v691 = vrot.slane %v686, 4
      %v692 = vsel %vm375, %v687, %v688
      %vm693 = vcmask 449536
      %v694 = vsel %vm693, %v678, %v692
      %v695 = vsel %vm375, %v688, %v689
      %v696 = vsel %vm693, %v680, %v695
      %v697 = vsel %vm375, %v689, %v690
      %v698 = vsel %vm693, %v682, %v697
      %v699 = vsel %vm375, %v690, %v691
      %v700 = vsel %vm693, %v684, %v699
      %v701 = vsel %vm693, %v686, %v691
      %707 = vst [vmem:[#allocation3 + $0x48] sm:$0x33] %v694
      %708 = vst [vmem:[#allocation3 + $0x50] sm:$0x33] %v696
      %709 = vst [vmem:[#allocation3 + $0x58] sm:$0x33] %v698
      %710 = vst [vmem:[#allocation3 + $0x60] sm:$0x33] %v700
      %711 = vst.msk [vmem:[#allocation3 + $0x68] sm:$0x3] %vm395, %v701
      %v712 = vld [vmem:[%s300] sm:$0xff]
      %v713 = vld [vmem:[%s300 + $0x8] sm:$0xff]
      %v714 = vld [vmem:[%s300 + $0x10] sm:$0xf]
      %v718 = vcombine.low %v712, %v712
      %v720 = vunpack.c.l.s4 1983009808
      %v721 = vunpack.c.0.s8 %v720
      %v722 = vlaneseq
      %v723 = vshrl.u32 %v722, 7
      %v724 = vsub.s32 %v721, %v723
      %v725 = vrot.slane %v718, %v724
      %v727 = vunpack.c.l.s4 1983009808
      %v728 = vunpack.c.0.s8 %v727
      %v729 = vlaneseq
      %v730 = vshrl.u32 %v729, 7
      %v731 = vsub.s32 %v728, %v730
      %v732 = vrot.slane %v712, %v731
      %v733 = vcombine.low %v713, %v713
      %v735 = vunpack.c.l.s4 1983009808
      %v736 = vunpack.c.0.s8 %v735
      %v737 = vlaneseq
      %v738 = vshrl.u32 %v737, 7
      %v739 = vsub.s32 %v736, %v738
      %v740 = vrot.slane %v733, %v739
      %v742 = vunpack.c.l.s4 1983009808
      %v743 = vunpack.c.0.s8 %v742
      %v744 = vlaneseq
      %v745 = vshrl.u32 %v744, 7
      %v746 = vsub.s32 %v743, %v745
      %v747 = vrot.slane %v713, %v746
      %v748 = vcombine.low %v714, %v714
      %v750 = vunpack.c.l.s4 1983009808
      %v751 = vunpack.c.0.s8 %v750
      %v752 = vlaneseq
      %v753 = vshrl.u32 %v752, 7
      %v754 = vsub.s32 %v751, %v753
      %v755 = vrot.slane %v748, %v754
      %756 = vrot.lane.b32.xlu0 %v725, 56
      %v757 = vpop.permute.xlu0 %756
      %758 = vrot.lane.b32.xlu0 %v732, 56
      %v759 = vpop.permute.xlu0 %758
      %760 = vrot.lane.b32.xlu0 %v740, 56
      %v761 = vpop.permute.xlu0 %760
      %762 = vrot.lane.b32.xlu0 %v747, 56
      %v763 = vpop.permute.xlu0 %762
      %764 = vrot.lane.b32.xlu0 %v755, 56
      %v765 = vpop.permute.xlu0 %764
      %v766 = vrot.slane %v757, 4
      %v767 = vrot.slane %v759, 4
      %v768 = vrot.slane %v761, 4
      %v769 = vrot.slane %v763, 4
      %v770 = vrot.slane %v765, 4
      %v771 = vsel %vm375, %v766, %v767
      %vm772 = vcmask 457728
      %v773 = vsel %vm772, %v757, %v771
      %v774 = vsel %vm375, %v767, %v768
      %v775 = vsel %vm772, %v759, %v774
      %v776 = vsel %vm375, %v768, %v769
      %v777 = vsel %vm772, %v761, %v776
      %v778 = vsel %vm375, %v769, %v770
      %v779 = vsel %vm772, %v763, %v778
      %v780 = vsel %vm772, %v765, %v770
      %786 = vst [vmem:[#allocation3 + $0x48] sm:$0xcc] %v773
      %787 = vst [vmem:[#allocation3 + $0x50] sm:$0xcc] %v775
      %788 = vst [vmem:[#allocation3 + $0x58] sm:$0xcc] %v777
      %789 = vst [vmem:[#allocation3 + $0x60] sm:$0xcc] %v779
      %790 = vst.msk [vmem:[#allocation3 + $0x68] sm:$0xc] %vm475, %v780
      %v791 = vld [vmem:[%s300] sm:$0xff]
      %v792 = vld [vmem:[%s300 + $0x8] sm:$0xff]
      %v793 = vld [vmem:[%s300 + $0x10] sm:$0xf]
      %v797 = vcombine.high %v791, %v791
      %v799 = vunpack.c.l.s4 1983009808
      %v800 = vunpack.c.0.s8 %v799
      %v801 = vlaneseq
      %v802 = vshrl.u32 %v801, 7
      %v803 = vsub.s32 %v800, %v802
      %v804 = vrot.slane %v791, %v803
      %v806 = vunpack.c.l.s4 1983009808
      %v807 = vunpack.c.0.s8 %v806
      %v808 = vlaneseq
      %v809 = vshrl.u32 %v808, 7
      %v810 = vsub.s32 %v807, %v809
      %v811 = vrot.slane %v797, %v810
      %v812 = vcombine.high %v792, %v792
      %v814 = vunpack.c.l.s4 1983009808
      %v815 = vunpack.c.0.s8 %v814
      %v816 = vlaneseq
      %v817 = vshrl.u32 %v816, 7
      %v818 = vsub.s32 %v815, %v817
      %v819 = vrot.slane %v792, %v818
      %v821 = vunpack.c.l.s4 1983009808
      %v822 = vunpack.c.0.s8 %v821
      %v823 = vlaneseq
      %v824 = vshrl.u32 %v823, 7
      %v825 = vsub.s32 %v822, %v824
      %v826 = vrot.slane %v812, %v825
      %v828 = vunpack.c.l.s4 1983009808
      %v829 = vunpack.c.0.s8 %v828
      %v830 = vlaneseq
      %v831 = vshrl.u32 %v830, 7
      %v832 = vsub.s32 %v829, %v831
      %v833 = vrot.slane %v793, %v832
      %834 = vrot.lane.b32.xlu0 %v804, 57
      %v835 = vpop.permute.xlu0 %834
      %836 = vrot.lane.b32.xlu0 %v811, 57
      %v837 = vpop.permute.xlu0 %836
      %838 = vrot.lane.b32.xlu0 %v819, 57
      %v839 = vpop.permute.xlu0 %838
      %840 = vrot.lane.b32.xlu0 %v826, 57
      %v841 = vpop.permute.xlu0 %840
      %842 = vrot.lane.b32.xlu0 %v833, 57
      %v843 = vpop.permute.xlu0 %842
      %v844 = vrot.slane %v835, 4
      %v845 = vrot.slane %v837, 4
      %v846 = vrot.slane %v839, 4
      %v847 = vrot.slane %v841, 4
      %v848 = vrot.slane %v843, 4
      %v849 = vsel %vm375, %v844, %v845
      %vm850 = vcmask 465920
      %v851 = vsel %vm850, %v835, %v849
      %v852 = vsel %vm375, %v845, %v846
      %v853 = vsel %vm850, %v837, %v852
      %v854 = vsel %vm375, %v846, %v847
      %v855 = vsel %vm850, %v839, %v854
      %v856 = vsel %vm375, %v847, %v848
      %v857 = vsel %vm850, %v841, %v856
      %v858 = vsel %vm850, %v843, %v848
      %864 = vst [vmem:[#allocation3 + $0x6c] sm:$0x33] %v851
      %865 = vst [vmem:[#allocation3 + $0x74] sm:$0x33] %v853
      %866 = vst [vmem:[#allocation3 + $0x7c] sm:$0x33] %v855
      %867 = vst [vmem:[#allocation3 + $0x84] sm:$0x33] %v857
      %868 = vst.msk [vmem:[#allocation3 + $0x8c] sm:$0x3] %vm395, %v858
      %v869 = vld [vmem:[%s300] sm:$0xff]
      %v870 = vld [vmem:[%s300 + $0x8] sm:$0xff]
      %v871 = vld [vmem:[%s300 + $0x10] sm:$0xf]
      %v875 = vcombine.low %v869, %v869
      %v877 = vunpack.c.l.s4 1983009808
      %v878 = vunpack.c.0.s8 %v877
      %v879 = vlaneseq
      %v880 = vshrl.u32 %v879, 7
      %v881 = vsub.s32 %v878, %v880
      %v882 = vrot.slane %v875, %v881
      %v884 = vunpack.c.l.s4 1983009808
      %v885 = vunpack.c.0.s8 %v884
      %v886 = vlaneseq
      %v887 = vshrl.u32 %v886, 7
      %v888 = vsub.s32 %v885, %v887
      %v889 = vrot.slane %v869, %v888
      %v890 = vcombine.low %v870, %v870
      %v892 = vunpack.c.l.s4 1983009808
      %v893 = vunpack.c.0.s8 %v892
      %v894 = vlaneseq
      %v895 = vshrl.u32 %v894, 7
      %v896 = vsub.s32 %v893, %v895
      %v897 = vrot.slane %v890, %v896
      %v899 = vunpack.c.l.s4 1983009808
      %v900 = vunpack.c.0.s8 %v899
      %v901 = vlaneseq
      %v902 = vshrl.u32 %v901, 7
      %v903 = vsub.s32 %v900, %v902
      %v904 = vrot.slane %v870, %v903
      %v905 = vcombine.low %v871, %v871
      %v907 = vunpack.c.l.s4 1983009808
      %v908 = vunpack.c.0.s8 %v907
      %v909 = vlaneseq
      %v910 = vshrl.u32 %v909, 7
      %v911 = vsub.s32 %v908, %v910
      %v912 = vrot.slane %v905, %v911
      %913 = vrot.lane.b32.xlu0 %v882, 58
      %v914 = vpop.permute.xlu0 %913
      %915 = vrot.lane.b32.xlu0 %v889, 58
      %v916 = vpop.permute.xlu0 %915
      %917 = vrot.lane.b32.xlu0 %v897, 58
      %v918 = vpop.permute.xlu0 %917
      %919 = vrot.lane.b32.xlu0 %v904, 58
      %v920 = vpop.permute.xlu0 %919
      %921 = vrot.lane.b32.xlu0 %v912, 58
      %v922 = vpop.permute.xlu0 %921
      %v923 = vrot.slane %v914, 4
      %v924 = vrot.slane %v916, 4
      %v925 = vrot.slane %v918, 4
      %v926 = vrot.slane %v920, 4
      %v927 = vrot.slane %v922, 4
      %v928 = vsel %vm375, %v923, %v924
      %vm929 = vcmask 474112
      %v930 = vsel %vm929, %v914, %v928
      %v931 = vsel %vm375, %v924, %v925
      %v932 = vsel %vm929, %v916, %v931
      %v933 = vsel %vm375, %v925, %v926
      %v934 = vsel %vm929, %v918, %v933
      %v935 = vsel %vm375, %v926, %v927
      %v936 = vsel %vm929, %v920, %v935
      %v937 = vsel %vm929, %v922, %v927
      %943 = vst [vmem:[#allocation3 + $0x6c] sm:$0xcc] %v930
      %944 = vst [vmem:[#allocation3 + $0x74] sm:$0xcc] %v932
      %945 = vst [vmem:[#allocation3 + $0x7c] sm:$0xcc] %v934
      %946 = vst [vmem:[#allocation3 + $0x84] sm:$0xcc] %v936
      %947 = vst.msk [vmem:[#allocation3 + $0x8c] sm:$0xc] %vm475, %v937
      %v948 = vld [vmem:[%s300] sm:$0xff]
      %v949 = vld [vmem:[%s300 + $0x8] sm:$0xff]
      %v950 = vld [vmem:[%s300 + $0x10] sm:$0xf]
      %v954 = vcombine.high %v948, %v948
      %v956 = vunpack.c.l.s4 1983009808
      %v957 = vunpack.c.0.s8 %v956
      %v958 = vlaneseq
      %v959 = vshrl.u32 %v958, 7
      %v960 = vsub.s32 %v957, %v959
      %v961 = vrot.slane %v948, %v960
      %v963 = vunpack.c.l.s4 1983009808
      %v964 = vunpack.c.0.s8 %v963
      %v965 = vlaneseq
      %v966 = vshrl.u32 %v965, 7
      %v967 = vsub.s32 %v964, %v966
      %v968 = vrot.slane %v954, %v967
      %v969 = vcombine.high %v949, %v949
      %v971 = vunpack.c.l.s4 1983009808
      %v972 = vunpack.c.0.s8 %v971
      %v973 = vlaneseq
      %v974 = vshrl.u32 %v973, 7
      %v975 = vsub.s32 %v972, %v974
      %v976 = vrot.slane %v949, %v975
      %v978 = vunpack.c.l.s4 1983009808
      %v979 = vunpack.c.0.s8 %v978
      %v980 = vlaneseq
      %v981 = vshrl.u32 %v980, 7
      %v982 = vsub.s32 %v979, %v981
      %v983 = vrot.slane %v969, %v982
      %v985 = vunpack.c.l.s4 1983009808
      %v986 = vunpack.c.0.s8 %v985
      %v987 = vlaneseq
      %v988 = vshrl.u32 %v987, 7
      %v989 = vsub.s32 %v986, %v988
      %v990 = vrot.slane %v950, %v989
      %991 = vrot.lane.b32.xlu0 %v961, 90
      %v992 = vpop.permute.xlu0 %991
      %993 = vrot.lane.b32.xlu0 %v968, 90
      %v994 = vpop.permute.xlu0 %993
      %995 = vrot.lane.b32.xlu0 %v976, 90
      %v996 = vpop.permute.xlu0 %995
      %997 = vrot.lane.b32.xlu0 %v983, 90
      %v998 = vpop.permute.xlu0 %997
      %999 = vrot.lane.b32.xlu0 %v990, 90
      %v1000 = vpop.permute.xlu0 %999
      %v1001 = vrot.slane %v992, 4
      %v1002 = vrot.slane %v994, 4
      %v1003 = vrot.slane %v996, 4
      %v1004 = vrot.slane %v998, 4
      %v1005 = vrot.slane %v1000, 4
      %v1006 = vsel %vm375, %v1001, %v1002
      %vm1007 = vcmask 736256
      %v1008 = vsel %vm1007, %v992, %v1006
      %v1009 = vsel %vm375, %v1002, %v1003
      %v1010 = vsel %vm1007, %v994, %v1009
      %v1011 = vsel %vm375, %v1003, %v1004
      %v1012 = vsel %vm1007, %v996, %v1011
      %v1013 = vsel %vm375, %v1004, %v1005
      %v1014 = vsel %vm1007, %v998, %v1013
      %v1015 = vsel %vm1007, %v1000, %v1005
      %1021 = vst [vmem:[#allocation3 + $0x90] sm:$0x33] %v1008
      %1022 = vst [vmem:[#allocation3 + $0x98] sm:$0x33] %v1010
      %1023 = vst [vmem:[#allocation3 + $0xa0] sm:$0x33] %v1012
      %1024 = vst [vmem:[#allocation3 + $0xa8] sm:$0x33] %v1014
      %1025 = vst.msk [vmem:[#allocation3 + $0xb0] sm:$0x3] %vm395, %v1015
      %v1026 = vld [vmem:[%s300] sm:$0xff]
      %v1027 = vld [vmem:[%s300 + $0x8] sm:$0xff]
      %v1028 = vld [vmem:[%s300 + $0x10] sm:$0xf]
      %v1032 = vcombine.low %v1026, %v1026
      %v1034 = vunpack.c.l.s4 1983009808
      %v1035 = vunpack.c.0.s8 %v1034
      %v1036 = vlaneseq
      %v1037 = vshrl.u32 %v1036, 7
      %v1038 = vsub.s32 %v1035, %v1037
      %v1039 = vrot.slane %v1032, %v1038
      %v1041 = vunpack.c.l.s4 1983009808
      %v1042 = vunpack.c.0.s8 %v1041
      %v1043 = vlaneseq
      %v1044 = vshrl.u32 %v1043, 7
      %v1045 = vsub.s32 %v1042, %v1044
      %v1046 = vrot.slane %v1026, %v1045
      %v1047 = vcombine.low %v1027, %v1027
      %v1049 = vunpack.c.l.s4 1983009808
      %v1050 = vunpack.c.0.s8 %v1049
      %v1051 = vlaneseq
      %v1052 = vshrl.u32 %v1051, 7
      %v1053 = vsub.s32 %v1050, %v1052
      %v1054 = vrot.slane %v1047, %v1053
      %v1056 = vunpack.c.l.s4 1983009808
      %v1057 = vunpack.c.0.s8 %v1056
      %v1058 = vlaneseq
      %v1059 = vshrl.u32 %v1058, 7
      %v1060 = vsub.s32 %v1057, %v1059
      %v1061 = vrot.slane %v1027, %v1060
      %v1062 = vcombine.low %v1028, %v1028
      %v1064 = vunpack.c.l.s4 1983009808
      %v1065 = vunpack.c.0.s8 %v1064
      %v1066 = vlaneseq
      %v1067 = vshrl.u32 %v1066, 7
      %v1068 = vsub.s32 %v1065, %v1067
      %v1069 = vrot.slane %v1062, %v1068
      %1070 = vrot.lane.b32.xlu0 %v1039, 91
      %v1071 = vpop.permute.xlu0 %1070
      %1072 = vrot.lane.b32.xlu0 %v1046, 91
      %v1073 = vpop.permute.xlu0 %1072
      %1074 = vrot.lane.b32.xlu0 %v1054, 91
      %v1075 = vpop.permute.xlu0 %1074
      %1076 = vrot.lane.b32.xlu0 %v1061, 91
      %v1077 = vpop.permute.xlu0 %1076
      %1078 = vrot.lane.b32.xlu0 %v1069, 91
      %v1079 = vpop.permute.xlu0 %1078
      %v1080 = vrot.slane %v1071, 4
      %v1081 = vrot.slane %v1073, 4
      %v1082 = vrot.slane %v1075, 4
      %v1083 = vrot.slane %v1077, 4
      %v1084 = vrot.slane %v1079, 4
      %v1085 = vsel %vm375, %v1080, %v1081
      %vm1086 = vcmask 744448
      %v1087 = vsel %vm1086, %v1071, %v1085
      %v1088 = vsel %vm375, %v1081, %v1082
      %v1089 = vsel %vm1086, %v1073, %v1088
      %v1090 = vsel %vm375, %v1082, %v1083
      %v1091 = vsel %vm1086, %v1075, %v1090
      %v1092 = vsel %vm375, %v1083, %v1084
      %v1093 = vsel %vm1086, %v1077, %v1092
      %v1094 = vsel %vm1086, %v1079, %v1084
      %1100 = vst [vmem:[#allocation3 + $0x90] sm:$0xcc] %v1087
      %1101 = vst [vmem:[#allocation3 + $0x98] sm:$0xcc] %v1089
      %1102 = vst [vmem:[#allocation3 + $0xa0] sm:$0xcc] %v1091
      %1103 = vst [vmem:[#allocation3 + $0xa8] sm:$0xcc] %v1093
      %1104 = vst.msk [vmem:[#allocation3 + $0xb0] sm:$0xc] %vm475, %v1094
      %v1105 = vld [vmem:[%s300] sm:$0xff]
      %v1106 = vld [vmem:[%s300 + $0x8] sm:$0xff]
      %v1107 = vld [vmem:[%s300 + $0x10] sm:$0xf]
      %v1111 = vcombine.high %v1105, %v1105
      %v1113 = vunpack.c.l.s4 1983009808
      %v1114 = vunpack.c.0.s8 %v1113
      %v1115 = vlaneseq
      %v1116 = vshrl.u32 %v1115, 7
      %v1117 = vsub.s32 %v1114, %v1116
      %v1118 = vrot.slane %v1105, %v1117
      %v1120 = vunpack.c.l.s4 1983009808
      %v1121 = vunpack.c.0.s8 %v1120
      %v1122 = vlaneseq
      %v1123 = vshrl.u32 %v1122, 7
      %v1124 = vsub.s32 %v1121, %v1123
      %v1125 = vrot.slane %v1111, %v1124
      %v1126 = vcombine.high %v1106, %v1106
      %v1128 = vunpack.c.l.s4 1983009808
      %v1129 = vunpack.c.0.s8 %v1128
      %v1130 = vlaneseq
      %v1131 = vshrl.u32 %v1130, 7
      %v1132 = vsub.s32 %v1129, %v1131
      %v1133 = vrot.slane %v1106, %v1132
      %v1135 = vunpack.c.l.s4 1983009808
      %v1136 = vunpack.c.0.s8 %v1135
      %v1137 = vlaneseq
      %v1138 = vshrl.u32 %v1137, 7
      %v1139 = vsub.s32 %v1136, %v1138
      %v1140 = vrot.slane %v1126, %v1139
      %v1142 = vunpack.c.l.s4 1983009808
      %v1143 = vunpack.c.0.s8 %v1142
      %v1144 = vlaneseq
      %v1145 = vshrl.u32 %v1144, 7
      %v1146 = vsub.s32 %v1143, %v1145
      %v1147 = vrot.slane %v1107, %v1146
      %1148 = vrot.lane.b32.xlu0 %v1118, 92
      %v1149 = vpop.permute.xlu0 %1148
      %1150 = vrot.lane.b32.xlu0 %v1125, 92
      %v1151 = vpop.permute.xlu0 %1150
      %1152 = vrot.lane.b32.xlu0 %v1133, 92
      %v1153 = vpop.permute.xlu0 %1152
      %1154 = vrot.lane.b32.xlu0 %v1140, 92
      %v1155 = vpop.permute.xlu0 %1154
      %1156 = vrot.lane.b32.xlu0 %v1147, 92
      %v1157 = vpop.permute.xlu0 %1156
      %v1158 = vrot.slane %v1149, 4
      %v1159 = vrot.slane %v1151, 4
      %v1160 = vrot.slane %v1153, 4
      %v1161 = vrot.slane %v1155, 4
      %v1162 = vrot.slane %v1157, 4
      %v1163 = vsel %vm375, %v1158, %v1159
      %vm1164 = vcmask 752640
      %v1165 = vsel %vm1164, %v1149, %v1163
      %v1166 = vsel %vm375, %v1159, %v1160
      %v1167 = vsel %vm1164, %v1151, %v1166
      %v1168 = vsel %vm375, %v1160, %v1161
      %v1169 = vsel %vm1164, %v1153, %v1168
      %v1170 = vsel %vm375, %v1161, %v1162
      %v1171 = vsel %vm1164, %v1155, %v1170
      %v1172 = vsel %vm1164, %v1157, %v1162
      %1178 = vst [vmem:[#allocation3 + $0xb4] sm:$0x33] %v1165
      %1179 = vst [vmem:[#allocation3 + $0xbc] sm:$0x33] %v1167
      %1180 = vst [vmem:[#allocation3 + $0xc4] sm:$0x33] %v1169
      %1181 = vst [vmem:[#allocation3 + $0xcc] sm:$0x33] %v1171
      %1182 = vst.msk [vmem:[#allocation3 + $0xd4] sm:$0x3] %vm395, %v1172
      %v1183 = vld [vmem:[%s300] sm:$0xff]
      %v1184 = vld [vmem:[%s300 + $0x8] sm:$0xff]
      %v1185 = vld [vmem:[%s300 + $0x10] sm:$0x3]
      %v1189 = vcombine.low %v1183, %v1183
      %v1191 = vunpack.c.l.s4 1983009808
      %v1192 = vunpack.c.0.s8 %v1191
      %v1193 = vlaneseq
      %v1194 = vshrl.u32 %v1193, 7
      %v1195 = vsub.s32 %v1192, %v1194
      %v1196 = vrot.slane %v1189, %v1195
      %v1198 = vunpack.c.l.s4 1983009808
      %v1199 = vunpack.c.0.s8 %v1198
      %v1200 = vlaneseq
      %v1201 = vshrl.u32 %v1200, 7
      %v1202 = vsub.s32 %v1199, %v1201
      %v1203 = vrot.slane %v1183, %v1202
      %v1204 = vcombine.low %v1184, %v1184
      %v1206 = vunpack.c.l.s4 1983009808
      %v1207 = vunpack.c.0.s8 %v1206
      %v1208 = vlaneseq
      %v1209 = vshrl.u32 %v1208, 7
      %v1210 = vsub.s32 %v1207, %v1209
      %v1211 = vrot.slane %v1204, %v1210
      %v1213 = vunpack.c.l.s4 1983009808
      %v1214 = vunpack.c.0.s8 %v1213
      %v1215 = vlaneseq
      %v1216 = vshrl.u32 %v1215, 7
      %v1217 = vsub.s32 %v1214, %v1216
      %v1218 = vrot.slane %v1184, %v1217
      %v1219 = vcombine.low %v1185, %v1185
      %v1221 = vunpack.c.l.s4 1983009808
      %v1222 = vunpack.c.0.s8 %v1221
      %v1223 = vlaneseq
      %v1224 = vshrl.u32 %v1223, 7
      %v1225 = vsub.s32 %v1222, %v1224
      %v1226 = vrot.slane %v1219, %v1225
      %1227 = vrot.lane.b32.xlu0 %v1196, 93
      %v1228 = vpop.permute.xlu0 %1227
      %1229 = vrot.lane.b32.xlu0 %v1203, 93
      %v1230 = vpop.permute.xlu0 %1229
      %1231 = vrot.lane.b32.xlu0 %v1211, 93
      %v1232 = vpop.permute.xlu0 %1231
      %1233 = vrot.lane.b32.xlu0 %v1218, 93
      %v1234 = vpop.permute.xlu0 %1233
      %1235 = vrot.lane.b32.xlu0 %v1226, 93
      %v1236 = vpop.permute.xlu0 %1235
      %v1237 = vrot.slane %v1228, 4
      %v1238 = vrot.slane %v1230, 4
      %v1239 = vrot.slane %v1232, 4
      %v1240 = vrot.slane %v1234, 4
      %v1241 = vrot.slane %v1236, 4
      %v1242 = vsel %vm375, %v1237, %v1238
      %vm1243 = vcmask 760832
      %v1244 = vsel %vm1243, %v1228, %v1242
      %v1245 = vsel %vm375, %v1238, %v1239
      %v1246 = vsel %vm1243, %v1230, %v1245
      %v1247 = vsel %vm375, %v1239, %v1240
      %v1248 = vsel %vm1243, %v1232, %v1247
      %v1249 = vsel %vm375, %v1240, %v1241
      %v1250 = vsel %vm1243, %v1234, %v1249
      %1256 = vst [vmem:[#allocation3 + $0xb4] sm:$0xcc] %v1244
      %1257 = vst [vmem:[#allocation3 + $0xbc] sm:$0xcc] %v1246
      %1258 = vst [vmem:[#allocation3 + $0xc4] sm:$0xcc] %v1248
      %1259 = vst [vmem:[#allocation3 + $0xcc] sm:$0xcc] %v1250
      %1260 = vst.msk [vmem:[#allocation3 + $0xd4] sm:$0xc] %vm475, %v1236
      %v1261 = vld [vmem:[%s300] sm:$0xff]
      %v1262 = vld [vmem:[%s300 + $0x8] sm:$0xff]
      %v1263 = vld [vmem:[%s300 + $0x10] sm:$0x3]
      %v1267 = vcombine.high %v1261, %v1261
      %v1269 = vunpack.c.l.s4 1983009808
      %v1270 = vunpack.c.0.s8 %v1269
      %v1271 = vlaneseq
      %v1272 = vshrl.u32 %v1271, 7
      %v1273 = vsub.s32 %v1270, %v1272
      %v1274 = vrot.slane %v1261, %v1273
      %v1276 = vunpack.c.l.s4 1983009808
      %v1277 = vunpack.c.0.s8 %v1276
      %v1278 = vlaneseq
      %v1279 = vshrl.u32 %v1278, 7
      %v1280 = vsub.s32 %v1277, %v1279
      %v1281 = vrot.slane %v1267, %v1280
      %v1282 = vcombine.high %v1262, %v1262
      %v1284 = vunpack.c.l.s4 1983009808
      %v1285 = vunpack.c.0.s8 %v1284
      %v1286 = vlaneseq
      %v1287 = vshrl.u32 %v1286, 7
      %v1288 = vsub.s32 %v1285, %v1287
      %v1289 = vrot.slane %v1262, %v1288
      %v1291 = vunpack.c.l.s4 1983009808
      %v1292 = vunpack.c.0.s8 %v1291
      %v1293 = vlaneseq
      %v1294 = vshrl.u32 %v1293, 7
      %v1295 = vsub.s32 %v1292, %v1294
      %v1296 = vrot.slane %v1282, %v1295
      %v1298 = vunpack.c.l.s4 1983009808
      %v1299 = vunpack.c.0.s8 %v1298
      %v1300 = vlaneseq
      %v1301 = vshrl.u32 %v1300, 7
      %v1302 = vsub.s32 %v1299, %v1301
      %v1303 = vrot.slane %v1263, %v1302
      %1304 = vrot.lane.b32.xlu0 %v1274, 125
      %v1305 = vpop.permute.xlu0 %1304
      %1306 = vrot.lane.b32.xlu0 %v1281, 125
      %v1307 = vpop.permute.xlu0 %1306
      %1308 = vrot.lane.b32.xlu0 %v1289, 125
      %v1309 = vpop.permute.xlu0 %1308
      %1310 = vrot.lane.b32.xlu0 %v1296, 125
      %v1311 = vpop.permute.xlu0 %1310
      %1312 = vrot.lane.b32.xlu0 %v1303, 125
      %v1313 = vpop.permute.xlu0 %1312
      %v1314 = vrot.slane %v1305, 4
      %v1315 = vrot.slane %v1307, 4
      %v1316 = vrot.slane %v1309, 4
      %v1317 = vrot.slane %v1311, 4
      %v1318 = vrot.slane %v1313, 4
      %v1319 = vsel %vm375, %v1314, %v1315
      %vm1320 = vcmask 1022976
      %v1321 = vsel %vm1320, %v1305, %v1319
      %v1322 = vsel %vm375, %v1315, %v1316
      %v1323 = vsel %vm1320, %v1307, %v1322
      %v1324 = vsel %vm375, %v1316, %v1317
      %v1325 = vsel %vm1320, %v1309, %v1324
      %v1326 = vsel %vm375, %v1317, %v1318
      %v1327 = vsel %vm1320, %v1311, %v1326
      %1333 = vst [vmem:[#allocation3 + $0xd8] sm:$0x33] %v1321
      %1334 = vst [vmem:[#allocation3 + $0xe0] sm:$0x33] %v1323
      %1335 = vst [vmem:[#allocation3 + $0xe8] sm:$0x33] %v1325
      %1336 = vst [vmem:[#allocation3 + $0xf0] sm:$0x33] %v1327
      %1337 = vst.msk [vmem:[#allocation3 + $0xf8] sm:$0x3] %vm395, %v1313
      %v1338 = vld [vmem:[%s300] sm:$0xff]
      %v1339 = vld [vmem:[%s300 + $0x8] sm:$0xff]
      %v1340 = vld [vmem:[%s300 + $0x10] sm:$0x3]
      %v1344 = vcombine.low %v1338, %v1338
      %v1346 = vunpack.c.l.s4 1983009808
      %v1347 = vunpack.c.0.s8 %v1346
      %v1348 = vlaneseq
      %v1349 = vshrl.u32 %v1348, 7
      %v1350 = vsub.s32 %v1347, %v1349
      %v1351 = vrot.slane %v1344, %v1350
      %v1353 = vunpack.c.l.s4 1983009808
      %v1354 = vunpack.c.0.s8 %v1353
      %v1355 = vlaneseq
      %v1356 = vshrl.u32 %v1355, 7
      %v1357 = vsub.s32 %v1354, %v1356
      %v1358 = vrot.slane %v1338, %v1357
      %v1359 = vcombine.low %v1339, %v1339
      %v1361 = vunpack.c.l.s4 1983009808
      %v1362 = vunpack.c.0.s8 %v1361
      %v1363 = vlaneseq
      %v1364 = vshrl.u32 %v1363, 7
      %v1365 = vsub.s32 %v1362, %v1364
      %v1366 = vrot.slane %v1359, %v1365
      %v1368 = vunpack.c.l.s4 1983009808
      %v1369 = vunpack.c.0.s8 %v1368
      %v1370 = vlaneseq
      %v1371 = vshrl.u32 %v1370, 7
      %v1372 = vsub.s32 %v1369, %v1371
      %v1373 = vrot.slane %v1339, %v1372
      %v1374 = vcombine.low %v1340, %v1340
      %v1376 = vunpack.c.l.s4 1983009808
      %v1377 = vunpack.c.0.s8 %v1376
      %v1378 = vlaneseq
      %v1379 = vshrl.u32 %v1378, 7
      %v1380 = vsub.s32 %v1377, %v1379
      %v1381 = vrot.slane %v1374, %v1380
      %1382 = vrot.lane.b32.xlu0 %v1351, 126
      %v1383 = vpop.permute.xlu0 %1382
      %1384 = vrot.lane.b32.xlu0 %v1358, 126
      %v1385 = vpop.permute.xlu0 %1384
      %1386 = vrot.lane.b32.xlu0 %v1366, 126
      %v1387 = vpop.permute.xlu0 %1386
      %1388 = vrot.lane.b32.xlu0 %v1373, 126
      %v1389 = vpop.permute.xlu0 %1388
      %1390 = vrot.lane.b32.xlu0 %v1381, 126
      %v1391 = vpop.permute.xlu0 %1390
      %v1392 = vrot.slane %v1383, 4
      %v1393 = vrot.slane %v1385, 4
      %v1394 = vrot.slane %v1387, 4
      %v1395 = vrot.slane %v1389, 4
      %v1396 = vrot.slane %v1391, 4
      %v1397 = vsel %vm375, %v1392, %v1393
      %vm1398 = vcmask 1031168
      %v1399 = vsel %vm1398, %v1383, %v1397
      %v1400 = vsel %vm375, %v1393, %v1394
      %v1401 = vsel %vm1398, %v1385, %v1400
      %v1402 = vsel %vm375, %v1394, %v1395
      %v1403 = vsel %vm1398, %v1387, %v1402
      %v1404 = vsel %vm375, %v1395, %v1396
      %v1405 = vsel %vm1398, %v1389, %v1404
      %1411 = vst [vmem:[#allocation3 + $0xd8] sm:$0xcc] %v1399
      %1412 = vst [vmem:[#allocation3 + $0xe0] sm:$0xcc] %v1401
      %1413 = vst [vmem:[#allocation3 + $0xe8] sm:$0xcc] %v1403
      %1414 = vst [vmem:[#allocation3 + $0xf0] sm:$0xcc] %v1405
      %1415 = vst.msk [vmem:[#allocation3 + $0xf8] sm:$0xc] %vm475, %v1391
      %v1416 = vld [vmem:[%s300] sm:$0xff]
      %v1417 = vld [vmem:[%s300 + $0x8] sm:$0xff]
      %v1418 = vld [vmem:[%s300 + $0x10] sm:$0x3]
      %v1422 = vcombine.high %v1416, %v1416
      %v1424 = vunpack.c.l.s4 1983009808
      %v1425 = vunpack.c.0.s8 %v1424
      %v1426 = vlaneseq
      %v1427 = vshrl.u32 %v1426, 7
      %v1428 = vsub.s32 %v1425, %v1427
      %v1429 = vrot.slane %v1416, %v1428
      %v1431 = vunpack.c.l.s4 1983009808
      %v1432 = vunpack.c.0.s8 %v1431
      %v1433 = vlaneseq
      %v1434 = vshrl.u32 %v1433, 7
      %v1435 = vsub.s32 %v1432, %v1434
      %v1436 = vrot.slane %v1422, %v1435
      %v1437 = vcombine.high %v1417, %v1417
      %v1439 = vunpack.c.l.s4 1983009808
      %v1440 = vunpack.c.0.s8 %v1439
      %v1441 = vlaneseq
      %v1442 = vshrl.u32 %v1441, 7
      %v1443 = vsub.s32 %v1440, %v1442
      %v1444 = vrot.slane %v1417, %v1443
      %v1446 = vunpack.c.l.s4 1983009808
      %v1447 = vunpack.c.0.s8 %v1446
      %v1448 = vlaneseq
      %v1449 = vshrl.u32 %v1448, 7
      %v1450 = vsub.s32 %v1447, %v1449
      %v1451 = vrot.slane %v1437, %v1450
      %v1453 = vunpack.c.l.s4 1983009808
      %v1454 = vunpack.c.0.s8 %v1453
      %v1455 = vlaneseq
      %v1456 = vshrl.u32 %v1455, 7
      %v1457 = vsub.s32 %v1454, %v1456
      %v1458 = vrot.slane %v1418, %v1457
      %1459 = vrot.lane.b32.xlu0 %v1429, 127
      %v1460 = vpop.permute.xlu0 %1459
      %1461 = vrot.lane.b32.xlu0 %v1436, 127
      %v1462 = vpop.permute.xlu0 %1461
      %1463 = vrot.lane.b32.xlu0 %v1444, 127
      %v1464 = vpop.permute.xlu0 %1463
      %1465 = vrot.lane.b32.xlu0 %v1451, 127
      %v1466 = vpop.permute.xlu0 %1465
      %1467 = vrot.lane.b32.xlu0 %v1458, 127
      %v1468 = vpop.permute.xlu0 %1467
      %v1469 = vrot.slane %v1460, 4
      %v1470 = vrot.slane %v1462, 4
      %v1471 = vrot.slane %v1464, 4
      %v1472 = vrot.slane %v1466, 4
      %v1473 = vrot.slane %v1468, 4
      %v1474 = vsel %vm375, %v1469, %v1470
      %vm1475 = vcmask 1039360
      %v1476 = vsel %vm1475, %v1460, %v1474
      %v1477 = vsel %vm375, %v1470, %v1471
      %v1478 = vsel %vm1475, %v1462, %v1477
      %v1479 = vsel %vm375, %v1471, %v1472
      %v1480 = vsel %vm1475, %v1464, %v1479
      %v1481 = vsel %vm375, %v1472, %v1473
      %v1482 = vsel %vm1475, %v1466, %v1481
      %1488 = vst [vmem:[#allocation3 + $0xfc] sm:$0x33] %v1476
      %1489 = vst [vmem:[#allocation3 + $0x104] sm:$0x33] %v1478
      %1490 = vst [vmem:[#allocation3 + $0x10c] sm:$0x33] %v1480
      %1491 = vst [vmem:[#allocation3 + $0x114] sm:$0x33] %v1482
      %1492 = vst.msk [vmem:[#allocation3 + $0x11c] sm:$0x3] %vm395, %v1468
      %v1493 = vld [vmem:[%s300] sm:$0xff]
      %v1494 = vld [vmem:[%s300 + $0x8] sm:$0xff]
      %v1495 = vld [vmem:[%s300 + $0x10] sm:$0x3]
      %v1499 = vcombine.low %v1493, %v1493
      %v1501 = vunpack.c.l.s4 1983009808
      %v1502 = vunpack.c.0.s8 %v1501
      %v1503 = vlaneseq
      %v1504 = vshrl.u32 %v1503, 7
      %v1505 = vsub.s32 %v1502, %v1504
      %v1506 = vrot.slane %v1499, %v1505
      %v1508 = vunpack.c.l.s4 1983009808
      %v1509 = vunpack.c.0.s8 %v1508
      %v1510 = vlaneseq
      %v1511 = vshrl.u32 %v1510, 7
      %v1512 = vsub.s32 %v1509, %v1511
      %v1513 = vrot.slane %v1493, %v1512
      %v1514 = vcombine.low %v1494, %v1494
      %v1516 = vunpack.c.l.s4 1983009808
      %v1517 = vunpack.c.0.s8 %v1516
      %v1518 = vlaneseq
      %v1519 = vshrl.u32 %v1518, 7
      %v1520 = vsub.s32 %v1517, %v1519
      %v1521 = vrot.slane %v1514, %v1520
      %v1523 = vunpack.c.l.s4 1983009808
      %v1524 = vunpack.c.0.s8 %v1523
      %v1525 = vlaneseq
      %v1526 = vshrl.u32 %v1525, 7
      %v1527 = vsub.s32 %v1524, %v1526
      %v1528 = vrot.slane %v1494, %v1527
      %v1529 = vcombine.low %v1495, %v1495
      %v1531 = vunpack.c.l.s4 1983009808
      %v1532 = vunpack.c.0.s8 %v1531
      %v1533 = vlaneseq
      %v1534 = vshrl.u32 %v1533, 7
      %v1535 = vsub.s32 %v1532, %v1534
      %v1536 = vrot.slane %v1529, %v1535
      %1542 = vst [vmem:[#allocation3 + $0xfc] sm:$0xcc] %v1506
      %1543 = vst [vmem:[#allocation3 + $0x104] sm:$0xcc] %v1513
      %1544 = vst [vmem:[#allocation3 + $0x10c] sm:$0xcc] %v1521
      %1545 = vst [vmem:[#allocation3 + $0x114] sm:$0xcc] %v1528
      %1546 = vst.msk [vmem:[#allocation3 + $0x11c] sm:$0xc] %vm475, %v1536
      %v1547 = vld [vmem:[%s1] sm:$0xf]
      %v1548 = vld [vmem:[%s1 + $0x4] sm:$0xf]
      %v1549 = vld [vmem:[%s1 + $0x8] sm:$0xf]
      %v1550 = vld [vmem:[%s1 + $0xc] sm:$0xf]
      %v1551 = vld [vmem:[#allocation3] sm:$0xff]
      %v1552 = vld [vmem:[#allocation3 + $0x8] sm:$0xff]
      %v1553 = vld [vmem:[#allocation3 + $0x10] sm:$0xff]
      %v1554 = vld [vmem:[#allocation3 + $0x18] sm:$0xff]
      %v1555 = vld [vmem:[#allocation3 + $0x20] sm:$0xf]
      %v1556 = vld [vmem:[#allocation3 + $0x24] sm:$0xff]
      %v1557 = vld [vmem:[#allocation3 + $0x2c] sm:$0xff]
      %v1558 = vld [vmem:[#allocation3 + $0x34] sm:$0xff]
      %v1559 = vld [vmem:[#allocation3 + $0x3c] sm:$0xff]
      %v1560 = vld [vmem:[#allocation3 + $0x44] sm:$0xf]
      %v1561 = vld [vmem:[#allocation3 + $0x48] sm:$0xff]
      %v1562 = vld [vmem:[#allocation3 + $0x50] sm:$0xff]
      %v1563 = vld [vmem:[#allocation3 + $0x58] sm:$0xff]
      %v1564 = vld [vmem:[#allocation3 + $0x60] sm:$0xff]
      %v1565 = vld [vmem:[#allocation3 + $0x68] sm:$0xf]
      %v1566 = vld [vmem:[#allocation3 + $0x6c] sm:$0xff]
      %v1567 = vld [vmem:[#allocation3 + $0x74] sm:$0xff]
      %v1568 = vld [vmem:[#allocation3 + $0x7c] sm:$0xff]
      %v1569 = vld [vmem:[#allocation3 + $0x84] sm:$0xff]
      %v1570 = vld [vmem:[#allocation3 + $0x8c] sm:$0xf]
      %v1571 = vld [vmem:[#allocation3 + $0x90] sm:$0xff]
      %v1572 = vld [vmem:[#allocation3 + $0x98] sm:$0xff]
      %v1573 = vld [vmem:[#allocation3 + $0xa0] sm:$0xff]
      %v1574 = vld [vmem:[#allocation3 + $0xa8] sm:$0xff]
      %v1575 = vld [vmem:[#allocation3 + $0xb0] sm:$0xf]
      %v1576 = vld [vmem:[#allocation3 + $0xb4] sm:$0xff]
      %v1577 = vld [vmem:[#allocation3 + $0xbc] sm:$0xff]
      %v1578 = vld [vmem:[#allocation3 + $0xc4] sm:$0xff]
      %v1579 = vld [vmem:[#allocation3 + $0xcc] sm:$0xff]
      %v1580 = vld [vmem:[#allocation3 + $0xd4] sm:$0xf]
      %v1581 = vld [vmem:[#allocation3 + $0xd8] sm:$0xff]
      %v1582 = vld [vmem:[#allocation3 + $0xe0] sm:$0xff]
      %v1583 = vld [vmem:[#allocation3 + $0xe8] sm:$0xff]
      %v1584 = vld [vmem:[#allocation3 + $0xf0] sm:$0xff]
      %v1585 = vld [vmem:[#allocation3 + $0xf8] sm:$0xf]
      %v1586 = vld [vmem:[#allocation3 + $0xfc] sm:$0xff]
      %v1587 = vld [vmem:[#allocation3 + $0x104] sm:$0xff]
      %v1588 = vld [vmem:[#allocation3 + $0x10c] sm:$0xff]
      %v1589 = vld [vmem:[#allocation3 + $0x114] sm:$0xff]
      %v1590 = vld [vmem:[#allocation3 + $0x11c] sm:$0xf]
      %v1595 = vunpack.c.l.b16 %v1547
      %v1596 = vunpack.c.l.b16 %v1548
      %v1597 = vunpack.c.l.b16 %v1549
      %v1598 = vunpack.c.l.b16 %v1550
      %v1599 = vpack.c.b16 %v1596, %v1595
      %v1600 = vpack.c.b16 %v1598, %v1597
      %v1641 = vunpack.c.l.b16 %v1551
      %v1642 = vunpack.c.h.b16 %v1551
      %v1643 = vunpack.c.l.b16 %v1552
      %v1644 = vunpack.c.h.b16 %v1552
      %v1645 = vunpack.c.l.b16 %v1553
      %v1646 = vunpack.c.h.b16 %v1553
      %v1647 = vunpack.c.l.b16 %v1554
      %v1648 = vunpack.c.h.b16 %v1554
      %v1649 = vunpack.c.l.b16 %v1555
      %v1650 = vunpack.c.l.b16 %v1556
      %v1651 = vunpack.c.h.b16 %v1556
      %v1652 = vunpack.c.l.b16 %v1557
      %v1653 = vunpack.c.h.b16 %v1557
      %v1654 = vunpack.c.l.b16 %v1558
      %v1655 = vunpack.c.h.b16 %v1558
      %v1656 = vunpack.c.l.b16 %v1559
      %v1657 = vunpack.c.h.b16 %v1559
      %v1658 = vunpack.c.l.b16 %v1560
      %v1659 = vunpack.c.l.b16 %v1561
      %v1660 = vunpack.c.h.b16 %v1561
      %v1661 = vunpack.c.l.b16 %v1562
      %v1662 = vunpack.c.h.b16 %v1562
      %v1663 = vunpack.c.l.b16 %v1563
      %v1664 = vunpack.c.h.b16 %v1563
      %v1665 = vunpack.c.l.b16 %v1564
      %v1666 = vunpack.c.h.b16 %v1564
      %v1667 = vunpack.c.l.b16 %v1565
      %v1668 = vunpack.c.l.b16 %v1566
      %v1669 = vunpack.c.h.b16 %v1566
      %v1670 = vunpack.c.l.b16 %v1567
      %v1671 = vunpack.c.h.b16 %v1567
      %v1672 = vunpack.c.l.b16 %v1568
      %v1673 = vunpack.c.h.b16 %v1568
      %v1674 = vunpack.c.l.b16 %v1569
      %v1675 = vunpack.c.h.b16 %v1569
      %v1676 = vunpack.c.l.b16 %v1570
      %v1677 = vunpack.c.l.b16 %v1571
      %v1678 = vunpack.c.h.b16 %v1571
      %v1679 = vunpack.c.l.b16 %v1572
      %v1680 = vunpack.c.h.b16 %v1572
      %v1681 = vunpack.c.l.b16 %v1573
      %v1682 = vunpack.c.h.b16 %v1573
      %v1683 = vunpack.c.l.b16 %v1574
      %v1684 = vunpack.c.h.b16 %v1574
      %v1685 = vunpack.c.l.b16 %v1575
      %v1686 = vunpack.c.l.b16 %v1576
      %v1687 = vunpack.c.h.b16 %v1576
      %v1688 = vunpack.c.l.b16 %v1577
      %v1689 = vunpack.c.h.b16 %v1577
      %v1690 = vunpack.c.l.b16 %v1578
      %v1691 = vunpack.c.h.b16 %v1578
      %v1692 = vunpack.c.l.b16 %v1579
      %v1693 = vunpack.c.h.b16 %v1579
      %v1694 = vunpack.c.l.b16 %v1580
      %v1695 = vunpack.c.l.b16 %v1581
      %v1696 = vunpack.c.h.b16 %v1581
      %v1697 = vunpack.c.l.b16 %v1582
      %v1698 = vunpack.c.h.b16 %v1582
      %v1699 = vunpack.c.l.b16 %v1583
      %v1700 = vunpack.c.h.b16 %v1583
      %v1701 = vunpack.c.l.b16 %v1584
      %v1702 = vunpack.c.h.b16 %v1584
      %v1703 = vunpack.c.l.b16 %v1585
      %v1704 = vunpack.c.l.b16 %v1586
      %v1705 = vunpack.c.h.b16 %v1586
      %v1706 = vunpack.c.l.b16 %v1587
      %v1707 = vunpack.c.h.b16 %v1587
      %v1708 = vunpack.c.l.b16 %v1588
      %v1709 = vunpack.c.h.b16 %v1588
      %v1710 = vunpack.c.l.b16 %v1589
      %v1711 = vunpack.c.h.b16 %v1589
      %v1712 = vunpack.c.l.b16 %v1590
      %v1713 = vpack.c.b16 %v1650, %v1641
      %v1714 = vpack.c.b16 %v1651, %v1642
      %v1715 = vpack.c.b16 %v1652, %v1643
      %v1716 = vpack.c.b16 %v1653, %v1644
      %v1717 = vpack.c.b16 %v1654, %v1645
      %v1718 = vpack.c.b16 %v1655, %v1646
      %v1719 = vpack.c.b16 %v1656, %v1647
      %v1720 = vpack.c.b16 %v1657, %v1648
      %v1721 = vpack.c.b16 %v1658, %v1649
      %v1722 = vpack.c.b16 %v1668, %v1659
      %v1723 = vpack.c.b16 %v1669, %v1660
      %v1724 = vpack.c.b16 %v1670, %v1661
      %v1725 = vpack.c.b16 %v1671, %v1662
      %v1726 = vpack.c.b16 %v1672, %v1663
      %v1727 = vpack.c.b16 %v1673, %v1664
      %v1728 = vpack.c.b16 %v1674, %v1665
      %v1729 = vpack.c.b16 %v1675, %v1666
      %v1730 = vpack.c.b16 %v1676, %v1667
      %v1731 = vpack.c.b16 %v1686, %v1677
      %v1732 = vpack.c.b16 %v1687, %v1678
      %v1733 = vpack.c.b16 %v1688, %v1679
      %v1734 = vpack.c.b16 %v1689, %v1680
      %v1735 = vpack.c.b16 %v1690, %v1681
      %v1736 = vpack.c.b16 %v1691, %v1682
      %v1737 = vpack.c.b16 %v1692, %v1683
      %v1738 = vpack.c.b16 %v1693, %v1684
      %v1739 = vpack.c.b16 %v1694, %v1685
      %v1740 = vpack.c.b16 %v1704, %v1695
      %v1741 = vpack.c.b16 %v1705, %v1696
      %v1742 = vpack.c.b16 %v1706, %v1697
      %v1743 = vpack.c.b16 %v1707, %v1698
      %v1744 = vpack.c.b16 %v1708, %v1699
      %v1745 = vpack.c.b16 %v1709, %v1700
      %v1746 = vpack.c.b16 %v1710, %v1701
      %v1747 = vpack.c.b16 %v1711, %v1702
      %v1748 = vpack.c.b16 %v1712, %v1703
      %vm1785 = vcmask 523264
      %v1787 = vsel %vm1785, %v1599, 0
      %v1790 = vsel %vm1785, %v1600, 0
      %1792 = vmatprep.subr.bf16.mxu0 0
      %1793 = vmatpush1.bf16.msra.mxu0 0
      %1794 = vmatprep.subr.bf16.mxu0 0
      %1795 = vmatpush1.bf16.msra.mxu0 0
      %1796 = vmatprep.subr.bf16.mxu0 0
      %1797 = vmatpush1.bf16.msra.mxu0 0
      %1798 = vmatprep.subr.bf16.mxu0 0
      %1799 = vmatpush1.bf16.msra.mxu0 0
      %1800 = vmatprep.subr.bf16.mxu0 %v1741
      %1801 = vmatpush1.bf16.msra.mxu0 %v1740
      %1802 = vmatprep.subr.bf16.mxu0 %v1732
      %1803 = vmatpush1.bf16.msra.mxu0 %v1731
      %1804 = vmatprep.subr.bf16.mxu0 %v1723
      %1805 = vmatpush1.bf16.msra.mxu0 %v1722
      %1806 = vmatprep.subr.bf16.mxu0 %v1714
      %1807 = vmatpush1.bf16.msra.mxu0 %v1713
      %1808 = vmatprep.subr.bf16.mxu0 0
      %1809 = vmatpush2.bf16.msra.mxu0 0
      %1810 = vmatprep.subr.bf16.mxu0 0
      %1811 = vmatpush2.bf16.msra.mxu0 0
      %1812 = vmatprep.subr.bf16.mxu0 0
      %1813 = vmatpush2.bf16.msra.mxu0 0
      %1814 = vmatprep.subr.bf16.mxu0 0
      %1815 = vmatpush2.bf16.msra.mxu0 0
      %1816 = vmatprep.subr.bf16.mxu0 0
      %1817 = vmatpush2.bf16.msra.mxu0 0
      %1818 = vmatprep.subr.bf16.mxu0 0
      %1819 = vmatpush2.bf16.msra.mxu0 0
      %1820 = vmatprep.subr.bf16.mxu0 0
      %1821 = vmatpush2.bf16.msra.mxu0 0
      %1822 = vmatprep.subr.bf16.mxu0 0
      %1823 = vmatpush2.bf16.msra.mxu0 0
      %1824 = vmatprep.mubr.bf16.mxu0 0
      %1825 = vmatmul.mubr.bf16.gmra.mxu0 %v1787
      %v1826 = vpop.f32.mrf.mxu0
      %v1827 = vadd.f32 0.0, %v1826
      %v1828 = vpop.f32.mrf.mxu0
      %v1829 = vadd.f32 0.0, %v1828
      %v1830 = vpop.f32.mrf.mxu0
      %v1831 = vadd.f32 0.0, %v1830
      %v1832 = vpop.f32.mrf.mxu0
      %v1833 = vadd.f32 0.0, %v1832
      %1834 = vmatprep.mubr.bf16.mxu0 0
      %1835 = vmatmul.mubr.bf16.gmra.mxu0 %v1790
      %v1836 = vpop.f32.mrf.mxu0
      %v1837 = vadd.f32 0.0, %v1836
      %v1838 = vpop.f32.mrf.mxu0
      %v1839 = vadd.f32 0.0, %v1838
      %v1840 = vpop.f32.mrf.mxu0
      %v1841 = vadd.f32 0.0, %v1840
      %v1842 = vpop.f32.mrf.mxu0
      %v1843 = vadd.f32 0.0, %v1842
      %1844 = vdwg.mxu0
      %1845 = vmatprep.subr.bf16.mxu0 0
      %1846 = vmatpush1.bf16.msra.mxu0 0
      %1847 = vmatprep.subr.bf16.mxu0 0
      %1848 = vmatpush1.bf16.msra.mxu0 0
      %1849 = vmatprep.subr.bf16.mxu0 0
      %1850 = vmatpush1.bf16.msra.mxu0 0
      %1851 = vmatprep.subr.bf16.mxu0 0
      %1852 = vmatpush1.bf16.msra.mxu0 0
      %1853 = vmatprep.subr.bf16.mxu0 %v1743
      %1854 = vmatpush1.bf16.msra.mxu0 %v1742
      %1855 = vmatprep.subr.bf16.mxu0 %v1734
      %1856 = vmatpush1.bf16.msra.mxu0 %v1733
      %1857 = vmatprep.subr.bf16.mxu0 %v1725
      %1858 = vmatpush1.bf16.msra.mxu0 %v1724
      %1859 = vmatprep.subr.bf16.mxu0 %v1716
      %1860 = vmatpush1.bf16.msra.mxu0 %v1715
      %1861 = vmatprep.subr.bf16.mxu0 0
      %1862 = vmatpush2.bf16.msra.mxu0 0
      %1863 = vmatprep.subr.bf16.mxu0 0
      %1864 = vmatpush2.bf16.msra.mxu0 0
      %1865 = vmatprep.subr.bf16.mxu0 0
      %1866 = vmatpush2.bf16.msra.mxu0 0
      %1867 = vmatprep.subr.bf16.mxu0 0
      %1868 = vmatpush2.bf16.msra.mxu0 0
      %1869 = vmatprep.subr.bf16.mxu0 0
      %1870 = vmatpush2.bf16.msra.mxu0 0
      %1871 = vmatprep.subr.bf16.mxu0 0
      %1872 = vmatpush2.bf16.msra.mxu0 0
      %1873 = vmatprep.subr.bf16.mxu0 0
      %1874 = vmatpush2.bf16.msra.mxu0 0
      %1875 = vmatprep.subr.bf16.mxu0 0
      %1876 = vmatpush2.bf16.msra.mxu0 0
      %1877 = vmatprep.mubr.bf16.mxu0 0
      %1878 = vmatmul.mubr.bf16.gmra.mxu0 %v1787
      %v1879 = vpop.f32.mrf.mxu0
      %v1880 = vadd.f32 0.0, %v1879
      %v1881 = vpop.f32.mrf.mxu0
      %v1882 = vadd.f32 0.0, %v1881
      %v1883 = vpop.f32.mrf.mxu0
      %v1884 = vadd.f32 0.0, %v1883
      %v1885 = vpop.f32.mrf.mxu0
      %v1886 = vadd.f32 0.0, %v1885
      %1887 = vmatprep.mubr.bf16.mxu0 0
      %1888 = vmatmul.mubr.bf16.gmra.mxu0 %v1790
      %v1889 = vpop.f32.mrf.mxu0
      %v1890 = vadd.f32 0.0, %v1889
      %v1891 = vpop.f32.mrf.mxu0
      %v1892 = vadd.f32 0.0, %v1891
      %v1893 = vpop.f32.mrf.mxu0
      %v1894 = vadd.f32 0.0, %v1893
      %v1895 = vpop.f32.mrf.mxu0
      %v1896 = vadd.f32 0.0, %v1895
      %1897 = vdwg.mxu0
      %1898 = vmatprep.subr.bf16.mxu0 0
      %1899 = vmatpush1.bf16.msra.mxu0 0
      %1900 = vmatprep.subr.bf16.mxu0 0
      %1901 = vmatpush1.bf16.msra.mxu0 0
      %1902 = vmatprep.subr.bf16.mxu0 0
      %1903 = vmatpush1.bf16.msra.mxu0 0
      %1904 = vmatprep.subr.bf16.mxu0 0
      %1905 = vmatpush1.bf16.msra.mxu0 0
      %1906 = vmatprep.subr.bf16.mxu0 %v1745
      %1907 = vmatpush1.bf16.msra.mxu0 %v1744
      %1908 = vmatprep.subr.bf16.mxu0 %v1736
      %1909 = vmatpush1.bf16.msra.mxu0 %v1735
      %1910 = vmatprep.subr.bf16.mxu0 %v1727
      %1911 = vmatpush1.bf16.msra.mxu0 %v1726
      %1912 = vmatprep.subr.bf16.mxu0 %v1718
      %1913 = vmatpush1.bf16.msra.mxu0 %v1717
      %1914 = vmatprep.subr.bf16.mxu0 0
      %1915 = vmatpush2.bf16.msra.mxu0 0
      %1916 = vmatprep.subr.bf16.mxu0 0
      %1917 = vmatpush2.bf16.msra.mxu0 0
      %1918 = vmatprep.subr.bf16.mxu0 0
      %1919 = vmatpush2.bf16.msra.mxu0 0
      %1920 = vmatprep.subr.bf16.mxu0 0
      %1921 = vmatpush2.bf16.msra.mxu0 0
      %1922 = vmatprep.subr.bf16.mxu0 0
      %1923 = vmatpush2.bf16.msra.mxu0 0
      %1924 = vmatprep.subr.bf16.mxu0 0
      %1925 = vmatpush2.bf16.msra.mxu0 0
      %1926 = vmatprep.subr.bf16.mxu0 0
      %1927 = vmatpush2.bf16.msra.mxu0 0
      %1928 = vmatprep.subr.bf16.mxu0 0
      %1929 = vmatpush2.bf16.msra.mxu0 0
      %1930 = vmatprep.mubr.bf16.mxu0 0
      %1931 = vmatmul.mubr.bf16.gmra.mxu0 %v1787
      %v1932 = vpop.f32.mrf.mxu0
      %v1933 = vadd.f32 0.0, %v1932
      %v1934 = vpop.f32.mrf.mxu0
      %v1935 = vadd.f32 0.0, %v1934
      %v1936 = vpop.f32.mrf.mxu0
      %v1937 = vadd.f32 0.0, %v1936
      %v1938 = vpop.f32.mrf.mxu0
      %v1939 = vadd.f32 0.0, %v1938
      %1940 = vmatprep.mubr.bf16.mxu0 0
      %1941 = vmatmul.mubr.bf16.gmra.mxu0 %v1790
      %v1942 = vpop.f32.mrf.mxu0
      %v1943 = vadd.f32 0.0, %v1942
      %v1944 = vpop.f32.mrf.mxu0
      %v1945 = vadd.f32 0.0, %v1944
      %v1946 = vpop.f32.mrf.mxu0
      %v1947 = vadd.f32 0.0, %v1946
      %v1948 = vpop.f32.mrf.mxu0
      %v1949 = vadd.f32 0.0, %v1948
      %1950 = vdwg.mxu0
      %1951 = vmatprep.subr.bf16.mxu0 0
      %1952 = vmatpush1.bf16.msra.mxu0 0
      %1953 = vmatprep.subr.bf16.mxu0 0
      %1954 = vmatpush1.bf16.msra.mxu0 0
      %1955 = vmatprep.subr.bf16.mxu0 0
      %1956 = vmatpush1.bf16.msra.mxu0 0
      %1957 = vmatprep.subr.bf16.mxu0 0
      %1958 = vmatpush1.bf16.msra.mxu0 0
      %1959 = vmatprep.subr.bf16.mxu0 %v1747
      %1960 = vmatpush1.bf16.msra.mxu0 %v1746
      %1961 = vmatprep.subr.bf16.mxu0 %v1738
      %1962 = vmatpush1.bf16.msra.mxu0 %v1737
      %1963 = vmatprep.subr.bf16.mxu0 %v1729
      %1964 = vmatpush1.bf16.msra.mxu0 %v1728
      %1965 = vmatprep.subr.bf16.mxu0 %v1720
      %1966 = vmatpush1.bf16.msra.mxu0 %v1719
      %1967 = vmatprep.subr.bf16.mxu0 0
      %1968 = vmatpush2.bf16.msra.mxu0 0
      %1969 = vmatprep.subr.bf16.mxu0 0
      %1970 = vmatpush2.bf16.msra.mxu0 0
      %1971 = vmatprep.subr.bf16.mxu0 0
      %1972 = vmatpush2.bf16.msra.mxu0 0
      %1973 = vmatprep.subr.bf16.mxu0 0
      %1974 = vmatpush2.bf16.msra.mxu0 0
      %1975 = vmatprep.subr.bf16.mxu0 0
      %1976 = vmatpush2.bf16.msra.mxu0 0
      %1977 = vmatprep.subr.bf16.mxu0 0
      %1978 = vmatpush2.bf16.msra.mxu0 0
      %1979 = vmatprep.subr.bf16.mxu0 0
      %1980 = vmatpush2.bf16.msra.mxu0 0
      %1981 = vmatprep.subr.bf16.mxu0 0
      %1982 = vmatpush2.bf16.msra.mxu0 0
      %1983 = vmatprep.mubr.bf16.mxu0 0
      %1984 = vmatmul.mubr.bf16.gmra.mxu0 %v1787
      %v1985 = vpop.f32.mrf.mxu0
      %v1986 = vadd.f32 0.0, %v1985
      %v1987 = vpop.f32.mrf.mxu0
      %v1988 = vadd.f32 0.0, %v1987
      %v1989 = vpop.f32.mrf.mxu0
      %v1990 = vadd.f32 0.0, %v1989
      %v1991 = vpop.f32.mrf.mxu0
      %v1992 = vadd.f32 0.0, %v1991
      %1993 = vmatprep.mubr.bf16.mxu0 0
      %1994 = vmatmul.mubr.bf16.gmra.mxu0 %v1790
      %v1995 = vpop.f32.mrf.mxu0
      %v1996 = vadd.f32 0.0, %v1995
      %v1997 = vpop.f32.mrf.mxu0
      %v1998 = vadd.f32 0.0, %v1997
      %v1999 = vpop.f32.mrf.mxu0
      %v2000 = vadd.f32 0.0, %v1999
      %v2001 = vpop.f32.mrf.mxu0
      %v2002 = vadd.f32 0.0, %v2001
      %2003 = vdwg.mxu0
      %2004 = vmatprep.subr.bf16.mxu0 0
      %2005 = vmatpush1.bf16.msra.mxu0 0
      %2006 = vmatprep.subr.bf16.mxu0 0
      %2007 = vmatpush1.bf16.msra.mxu0 0
      %2008 = vmatprep.subr.bf16.mxu0 0
      %2009 = vmatpush1.bf16.msra.mxu0 0
      %2010 = vmatprep.subr.bf16.mxu0 0
      %2011 = vmatpush1.bf16.msra.mxu0 0
      %2012 = vmatprep.subr.bf16.mxu0 0
      %2013 = vmatpush1.bf16.msra.mxu0 %v1748
      %2014 = vmatprep.subr.bf16.mxu0 0
      %2015 = vmatpush1.bf16.msra.mxu0 %v1739
      %2016 = vmatprep.subr.bf16.mxu0 0
      %2017 = vmatpush1.bf16.msra.mxu0 %v1730
      %2018 = vmatprep.subr.bf16.mxu0 0
      %2019 = vmatpush1.bf16.msra.mxu0 %v1721
      %2020 = vmatprep.subr.bf16.mxu0 0
      %2021 = vmatpush2.bf16.msra.mxu0 0
      %2022 = vmatprep.subr.bf16.mxu0 0
      %2023 = vmatpush2.bf16.msra.mxu0 0
      %2024 = vmatprep.subr.bf16.mxu0 0
      %2025 = vmatpush2.bf16.msra.mxu0 0
      %2026 = vmatprep.subr.bf16.mxu0 0
      %2027 = vmatpush2.bf16.msra.mxu0 0
      %2028 = vmatprep.subr.bf16.mxu0 0
      %2029 = vmatpush2.bf16.msra.mxu0 0
      %2030 = vmatprep.subr.bf16.mxu0 0
      %2031 = vmatpush2.bf16.msra.mxu0 0
      %2032 = vmatprep.subr.bf16.mxu0 0
      %2033 = vmatpush2.bf16.msra.mxu0 0
      %2034 = vmatprep.subr.bf16.mxu0 0
      %2035 = vmatpush2.bf16.msra.mxu0 0
      %2036 = vmatprep.mubr.bf16.mxu0 0
      %2037 = vmatmul.mubr.bf16.gmra.mxu0 %v1787
      %v2038 = vpop.f32.mrf.mxu0
      %v2039 = vadd.f32 0.0, %v2038
      %v2040 = vpop.f32.mrf.mxu0
      %v2041 = vpop.f32.mrf.mxu0
      %v2042 = vadd.f32 0.0, %v2041
      %v2043 = vpop.f32.mrf.mxu0
      %2044 = vmatprep.mubr.bf16.mxu0 0
      %2045 = vmatmul.mubr.bf16.gmra.mxu0 %v1790
      %v2046 = vpop.f32.mrf.mxu0
      %v2047 = vadd.f32 0.0, %v2046
      %v2048 = vpop.f32.mrf.mxu0
      %v2049 = vpop.f32.mrf.mxu0
      %v2050 = vadd.f32 0.0, %v2049
      %v2051 = vpop.f32.mrf.mxu0
      %2052 = vdwg.mxu0
      %v2053 = vld [vmem:[%s7] ss:$8 sm:$0xf]
      %v2054 = vld [vmem:[%s7] ss:$8 sm:$0xf0]
      %v2055 = vor.u32 %v2053, %v2054
      %s2056 = scalar_lea.vmem %s7, 64
      %v2057 = vld [vmem:[%s2056] ss:$8 sm:$0x1]
      %v2060 = vlaneseq
      %v2061 = vshrl.u32 %v2060, 7
      %v2062 = vsub.s32 0, %v2061
      %v2063 = vrot.slane %v2055, %v2062
      %v2064 = vlaneseq
      %v2065 = vshrl.u32 %v2064, 7
      %v2066 = vsub.s32 1, %v2065
      %v2067 = vrot.slane %v2055, %v2066
      %v2068 = vlaneseq
      %v2069 = vshrl.u32 %v2068, 7
      %v2070 = vsub.s32 2, %v2069
      %v2071 = vrot.slane %v2055, %v2070
      %v2072 = vlaneseq
      %v2073 = vshrl.u32 %v2072, 7
      %v2074 = vsub.s32 3, %v2073
      %v2075 = vrot.slane %v2055, %v2074
      %v2076 = vlaneseq
      %v2077 = vshrl.u32 %v2076, 7
      %v2078 = vsub.s32 4, %v2077
      %v2079 = vrot.slane %v2055, %v2078
      %v2080 = vlaneseq
      %v2081 = vshrl.u32 %v2080, 7
      %v2082 = vsub.s32 5, %v2081
      %v2083 = vrot.slane %v2055, %v2082
      %v2084 = vlaneseq
      %v2085 = vshrl.u32 %v2084, 7
      %v2086 = vsub.s32 6, %v2085
      %v2087 = vrot.slane %v2055, %v2086
      %v2088 = vlaneseq
      %v2089 = vshrl.u32 %v2088, 7
      %v2090 = vsub.s32 7, %v2089
      %v2091 = vrot.slane %v2055, %v2090
      %v2092 = vlaneseq
      %v2093 = vshrl.u32 %v2092, 7
      %v2094 = vsub.s32 0, %v2093
      %v2095 = vrot.slane %v2057, %v2094
      %v2105 = vmul.f32 %v1827, %v2063
      %v2106 = vmul.f32 %v1829, %v2067
      %v2107 = vmul.f32 %v1880, %v2071
      %v2108 = vmul.f32 %v1882, %v2075
      %v2109 = vmul.f32 %v1933, %v2079
      %v2110 = vmul.f32 %v1935, %v2083
      %v2111 = vmul.f32 %v1986, %v2087
      %v2112 = vmul.f32 %v1988, %v2091
      %v2113 = vmul.f32 %v2039, %v2095
      %s2114 = scalar_lea.vmem %s7, 1
      %v2115 = vld [vmem:[%s2114] ss:$8 sm:$0xf]
      %v2116 = vld [vmem:[%s2114] ss:$8 sm:$0xf0]
      %v2117 = vor.u32 %v2115, %v2116
      %s2118 = scalar_lea.vmem %s7, 65
      %v2119 = vld [vmem:[%s2118] ss:$8 sm:$0x1]
      %v2122 = vlaneseq
      %v2123 = vshrl.u32 %v2122, 7
      %v2124 = vsub.s32 0, %v2123
      %v2125 = vrot.slane %v2117, %v2124
      %v2126 = vlaneseq
      %v2127 = vshrl.u32 %v2126, 7
      %v2128 = vsub.s32 1, %v2127
      %v2129 = vrot.slane %v2117, %v2128
      %v2130 = vlaneseq
      %v2131 = vshrl.u32 %v2130, 7
      %v2132 = vsub.s32 2, %v2131
      %v2133 = vrot.slane %v2117, %v2132
      %v2134 = vlaneseq
      %v2135 = vshrl.u32 %v2134, 7
      %v2136 = vsub.s32 3, %v2135
      %v2137 = vrot.slane %v2117, %v2136
      %v2138 = vlaneseq
      %v2139 = vshrl.u32 %v2138, 7
      %v2140 = vsub.s32 4, %v2139
      %v2141 = vrot.slane %v2117, %v2140
      %v2142 = vlaneseq
      %v2143 = vshrl.u32 %v2142, 7
      %v2144 = vsub.s32 5, %v2143
      %v2145 = vrot.slane %v2117, %v2144
      %v2146 = vlaneseq
      %v2147 = vshrl.u32 %v2146, 7
      %v2148 = vsub.s32 6, %v2147
      %v2149 = vrot.slane %v2117, %v2148
      %v2150 = vlaneseq
      %v2151 = vshrl.u32 %v2150, 7
      %v2152 = vsub.s32 7, %v2151
      %v2153 = vrot.slane %v2117, %v2152
      %v2154 = vlaneseq
      %v2155 = vshrl.u32 %v2154, 7
      %v2156 = vsub.s32 0, %v2155
      %v2157 = vrot.slane %v2119, %v2156
      %v2167 = vmul.f32 %v1831, %v2125
      %v2168 = vmul.f32 %v1833, %v2129
      %v2169 = vmul.f32 %v1884, %v2133
      %v2170 = vmul.f32 %v1886, %v2137
      %v2171 = vmul.f32 %v1937, %v2141
      %v2172 = vmul.f32 %v1939, %v2145
      %v2173 = vmul.f32 %v1990, %v2149
      %v2174 = vmul.f32 %v1992, %v2153
      %v2175 = vmul.f32 %v2042, %v2157
      %v2176 = vadd.f32 %v2105, %v2167
      %v2177 = vadd.f32 %v2106, %v2168
      %v2178 = vadd.f32 %v2107, %v2169
      %v2179 = vadd.f32 %v2108, %v2170
      %v2180 = vadd.f32 %v2109, %v2171
      %v2181 = vadd.f32 %v2110, %v2172
      %v2182 = vadd.f32 %v2111, %v2173
      %v2183 = vadd.f32 %v2112, %v2174
      %v2184 = vadd.f32 %v2113, %v2175
      %s2185 = scalar_lea.vmem %s7, 2
      %v2186 = vld [vmem:[%s2185] ss:$8 sm:$0xf]
      %v2187 = vld [vmem:[%s2185] ss:$8 sm:$0xf0]
      %v2188 = vor.u32 %v2186, %v2187
      %s2189 = scalar_lea.vmem %s7, 66
      %v2190 = vld [vmem:[%s2189] ss:$8 sm:$0x1]
      %v2193 = vlaneseq
      %v2194 = vshrl.u32 %v2193, 7
      %v2195 = vsub.s32 0, %v2194
      %v2196 = vrot.slane %v2188, %v2195
      %v2197 = vlaneseq
      %v2198 = vshrl.u32 %v2197, 7
      %v2199 = vsub.s32 1, %v2198
      %v2200 = vrot.slane %v2188, %v2199
      %v2201 = vlaneseq
      %v2202 = vshrl.u32 %v2201, 7
      %v2203 = vsub.s32 2, %v2202
      %v2204 = vrot.slane %v2188, %v2203
      %v2205 = vlaneseq
      %v2206 = vshrl.u32 %v2205, 7
      %v2207 = vsub.s32 3, %v2206
      %v2208 = vrot.slane %v2188, %v2207
      %v2209 = vlaneseq
      %v2210 = vshrl.u32 %v2209, 7
      %v2211 = vsub.s32 4, %v2210
      %v2212 = vrot.slane %v2188, %v2211
      %v2213 = vlaneseq
      %v2214 = vshrl.u32 %v2213, 7
      %v2215 = vsub.s32 5, %v2214
      %v2216 = vrot.slane %v2188, %v2215
      %v2217 = vlaneseq
      %v2218 = vshrl.u32 %v2217, 7
      %v2219 = vsub.s32 6, %v2218
      %v2220 = vrot.slane %v2188, %v2219
      %v2221 = vlaneseq
      %v2222 = vshrl.u32 %v2221, 7
      %v2223 = vsub.s32 7, %v2222
      %v2224 = vrot.slane %v2188, %v2223
      %v2225 = vlaneseq
      %v2226 = vshrl.u32 %v2225, 7
      %v2227 = vsub.s32 0, %v2226
      %v2228 = vrot.slane %v2190, %v2227
      %v2238 = vmul.f32 %v1837, %v2196
      %v2239 = vmul.f32 %v1839, %v2200
      %v2240 = vmul.f32 %v1890, %v2204
      %v2241 = vmul.f32 %v1892, %v2208
      %v2242 = vmul.f32 %v1943, %v2212
      %v2243 = vmul.f32 %v1945, %v2216
      %v2244 = vmul.f32 %v1996, %v2220
      %v2245 = vmul.f32 %v1998, %v2224
      %v2246 = vmul.f32 %v2047, %v2228
      %v2247 = vadd.f32 %v2176, %v2238
      %v2248 = vadd.f32 %v2177, %v2239
      %v2249 = vadd.f32 %v2178, %v2240
      %v2250 = vadd.f32 %v2179, %v2241
      %v2251 = vadd.f32 %v2180, %v2242
      %v2252 = vadd.f32 %v2181, %v2243
      %v2253 = vadd.f32 %v2182, %v2244
      %v2254 = vadd.f32 %v2183, %v2245
      %v2255 = vadd.f32 %v2184, %v2246
      %s2256 = scalar_lea.vmem %s7, 3
      %v2257 = vld [vmem:[%s2256] ss:$8 sm:$0xf]
      %v2258 = vld [vmem:[%s2256] ss:$8 sm:$0xf0]
      %v2259 = vor.u32 %v2257, %v2258
      %s2260 = scalar_lea.vmem %s7, 67
      %v2261 = vld [vmem:[%s2260] ss:$8 sm:$0x1]
      %v2264 = vlaneseq
      %v2265 = vshrl.u32 %v2264, 7
      %v2266 = vsub.s32 0, %v2265
      %v2267 = vrot.slane %v2259, %v2266
      %v2268 = vlaneseq
      %v2269 = vshrl.u32 %v2268, 7
      %v2270 = vsub.s32 1, %v2269
      %v2271 = vrot.slane %v2259, %v2270
      %v2272 = vlaneseq
      %v2273 = vshrl.u32 %v2272, 7
      %v2274 = vsub.s32 2, %v2273
      %v2275 = vrot.slane %v2259, %v2274
      %v2276 = vlaneseq
      %v2277 = vshrl.u32 %v2276, 7
      %v2278 = vsub.s32 3, %v2277
      %v2279 = vrot.slane %v2259, %v2278
      %v2280 = vlaneseq
      %v2281 = vshrl.u32 %v2280, 7
      %v2282 = vsub.s32 4, %v2281
      %v2283 = vrot.slane %v2259, %v2282
      %v2284 = vlaneseq
      %v2285 = vshrl.u32 %v2284, 7
      %v2286 = vsub.s32 5, %v2285
      %v2287 = vrot.slane %v2259, %v2286
      %v2288 = vlaneseq
      %v2289 = vshrl.u32 %v2288, 7
      %v2290 = vsub.s32 6, %v2289
      %v2291 = vrot.slane %v2259, %v2290
      %v2292 = vlaneseq
      %v2293 = vshrl.u32 %v2292, 7
      %v2294 = vsub.s32 7, %v2293
      %v2295 = vrot.slane %v2259, %v2294
      %v2296 = vlaneseq
      %v2297 = vshrl.u32 %v2296, 7
      %v2298 = vsub.s32 0, %v2297
      %v2299 = vrot.slane %v2261, %v2298
      %v2309 = vmul.f32 %v1841, %v2267
      %v2310 = vmul.f32 %v1843, %v2271
      %v2311 = vmul.f32 %v1894, %v2275
      %v2312 = vmul.f32 %v1896, %v2279
      %v2313 = vmul.f32 %v1947, %v2283
      %v2314 = vmul.f32 %v1949, %v2287
      %v2315 = vmul.f32 %v2000, %v2291
      %v2316 = vmul.f32 %v2002, %v2295
      %v2317 = vmul.f32 %v2050, %v2299
      %v2318 = vadd.f32 %v2247, %v2309
      %v2319 = vadd.f32 %v2248, %v2310
      %v2320 = vadd.f32 %v2249, %v2311
      %v2321 = vadd.f32 %v2250, %v2312
      %v2322 = vadd.f32 %v2251, %v2313
      %v2323 = vadd.f32 %v2252, %v2314
      %v2324 = vadd.f32 %v2253, %v2315
      %v2325 = vadd.f32 %v2254, %v2316
      %v2326 = vadd.f32 %v2255, %v2317
      %v2327 = vld [vmem:[%s2] sm:$0xff]
      %2329 = vset.pattern.permute.xlu0 0
      %2330 = vperm.xlu0 %2329, %v2327
      %v2331 = vpop.permute.xlu0 %2330
      %v2333 = vadd.f32 %v2318, %v2331
      %v2334 = vadd.f32 %v2319, %v2331
      %v2335 = vadd.f32 %v2320, %v2331
      %v2336 = vadd.f32 %v2321, %v2331
      %v2337 = vadd.f32 %v2322, %v2331
      %v2338 = vadd.f32 %v2323, %v2331
      %v2339 = vadd.f32 %v2324, %v2331
      %v2340 = vadd.f32 %v2325, %v2331
      %v2341 = vadd.f32 %v2326, %v2331
      %v2342 = vmax.f32 %v2333, 0.0
      %v2343 = vmax.f32 %v2334, 0.0
      %v2344 = vmax.f32 %v2335, 0.0
      %v2345 = vmax.f32 %v2336, 0.0
      %v2346 = vmax.f32 %v2337, 0.0
      %v2347 = vmax.f32 %v2338, 0.0
      %v2348 = vmax.f32 %v2339, 0.0
      %v2349 = vmax.f32 %v2340, 0.0
      %v2350 = vmax.f32 %v2341, 0.0
      %v2353 = vlaneseq
      %v2354 = vshrl.u32 %v2353, 7
      %v2355 = vsub.s32 0, %v2354
      %v2356 = vrot.slane %v314, %v2355
      %v2357 = vlaneseq
      %v2358 = vshrl.u32 %v2357, 7
      %v2359 = vsub.s32 1, %v2358
      %v2360 = vrot.slane %v314, %v2359
      %v2361 = vlaneseq
      %v2362 = vshrl.u32 %v2361, 7
      %v2363 = vsub.s32 2, %v2362
      %v2364 = vrot.slane %v314, %v2363
      %v2365 = vlaneseq
      %v2366 = vshrl.u32 %v2365, 7
      %v2367 = vsub.s32 3, %v2366
      %v2368 = vrot.slane %v314, %v2367
      %v2369 = vlaneseq
      %v2370 = vshrl.u32 %v2369, 7
      %v2371 = vsub.s32 4, %v2370
      %v2372 = vrot.slane %v314, %v2371
      %v2373 = vlaneseq
      %v2374 = vshrl.u32 %v2373, 7
      %v2375 = vsub.s32 5, %v2374
      %v2376 = vrot.slane %v314, %v2375
      %v2377 = vlaneseq
      %v2378 = vshrl.u32 %v2377, 7
      %v2379 = vsub.s32 6, %v2378
      %v2380 = vrot.slane %v314, %v2379
      %v2381 = vlaneseq
      %v2382 = vshrl.u32 %v2381, 7
      %v2383 = vsub.s32 7, %v2382
      %v2384 = vrot.slane %v314, %v2383
      %v2385 = vlaneseq
      %v2386 = vshrl.u32 %v2385, 7
      %v2387 = vsub.s32 0, %v2386
      %v2388 = vrot.slane %v316, %v2387
      %v2398 = vmul.f32 %v2342, %v2356
      %v2399 = vmul.f32 %v2343, %v2360
      %v2400 = vmul.f32 %v2344, %v2364
      %v2401 = vmul.f32 %v2345, %v2368
      %v2402 = vmul.f32 %v2346, %v2372
      %v2403 = vmul.f32 %v2347, %v2376
      %v2404 = vmul.f32 %v2348, %v2380
      %v2405 = vmul.f32 %v2349, %v2384
      %v2406 = vmul.f32 %v2350, %v2388
      %v2407 = vpack.c.bf16 %v2398, %v2398
      %v2408 = vpack.c.bf16 %v2399, %v2399
      %v2409 = vpack.c.bf16 %v2400, %v2400
      %v2410 = vpack.c.bf16 %v2401, %v2401
      %v2411 = vpack.c.bf16 %v2402, %v2402
      %v2412 = vpack.c.bf16 %v2403, %v2403
      %v2413 = vpack.c.bf16 %v2404, %v2404
      %v2414 = vpack.c.bf16 %v2405, %v2405
      %v2415 = vpack.c.bf16 %v2406, %v2406
      %v2425 = vunpack.c.l.b16 %v2407
      %v2426 = vunpack.c.l.b16 %v2408
      %v2427 = vunpack.c.l.b16 %v2409
      %v2428 = vunpack.c.l.b16 %v2410
      %v2429 = vunpack.c.l.b16 %v2411
      %v2430 = vunpack.c.l.b16 %v2412
      %v2431 = vunpack.c.l.b16 %v2413
      %v2432 = vunpack.c.l.b16 %v2414
      %v2433 = vunpack.c.l.b16 %v2415
      %v2434 = vpack.c.b16 %v2426, %v2425
      %v2435 = vpack.c.b16 %v2428, %v2427
      %v2436 = vpack.c.b16 %v2430, %v2429
      %v2437 = vpack.c.b16 %v2432, %v2431
      %v2438 = vpack.c.b16 %v2433, %v2433
      %2439 = vrot.lane.b32.xlu0 %v2434, 36
      %v2440 = vpop.permute.xlu0 %2439
      %2441 = vrot.lane.b32.xlu0 %v2435, 36
      %v2442 = vpop.permute.xlu0 %2441
      %2443 = vrot.lane.b32.xlu0 %v2436, 36
      %v2444 = vpop.permute.xlu0 %2443
      %2445 = vrot.lane.b32.xlu0 %v2437, 36
      %v2446 = vpop.permute.xlu0 %2445
      %2447 = vrot.lane.b32.xlu0 %v2438, 36
      %v2448 = vpop.permute.xlu0 %2447
      %v2449 = vrot.slane %v2440, 4
      %v2450 = vrot.slane %v2442, 4
      %v2451 = vrot.slane %v2444, 4
      %v2452 = vrot.slane %v2446, 4
      %v2453 = vrot.slane %v2448, 4
      %vm2454 = vcmask 293888
      %v2455 = vsel %vm2454, %v2449, %v2440
      %v2456 = vsel %vm375, %v2449, %v2450
      %v2457 = vsel %vm2454, %v2456, %v2442
      %v2458 = vsel %vm375, %v2450, %v2451
      %v2459 = vsel %vm2454, %v2458, %v2444
      %v2460 = vsel %vm375, %v2451, %v2452
      %v2461 = vsel %vm2454, %v2460, %v2446
      %v2462 = vsel %vm375, %v2452, %v2453
      %v2463 = vsel %vm2454, %v2462, %v2448
      %vm2469 = vcmask 1043744
      %vm2470 = vcmask 1047556
      %vm2471 = vmor %vm2470, %vm2469
      %2472 = vst.msk [vmem:[#allocation2] sm:$0xff] %vm2471, %v2455
      %2473 = vst [vmem:[#allocation2 + $0x8] sm:$0xff] %v2457
      %2474 = vst [vmem:[#allocation2 + $0x10] sm:$0xff] %v2459
      %2475 = vst [vmem:[#allocation2 + $0x18] sm:$0xff] %v2461
      %vm2476 = vcmask 1043456
      %vm2477 = vcmask 7172
      %vm2478 = vmor %vm2477, %vm2476
      %2479 = vst.msk [vmem:[#allocation2 + $0x20] sm:$0xff] %vm2478, %v2463
      %v2480 = vld [vmem:[#allocation2] sm:$0xff]
      %v2481 = vld [vmem:[#allocation2 + $0x8] sm:$0xff]
      %v2482 = vld [vmem:[#allocation2 + $0x10] sm:$0xff]
      %v2483 = vld [vmem:[#allocation2 + $0x18] sm:$0xff]
      %v2484 = vld [vmem:[#allocation2 + $0x20] sm:$0xf]
      %2485 = vst [vmem:[#allocation3] sm:$0xff] %v2480
      %2486 = vst [vmem:[#allocation3 + $0x8] sm:$0xff] %v2481
      %2487 = vst [vmem:[#allocation3 + $0x10] sm:$0xff] %v2482
      %2488 = vst [vmem:[#allocation3 + $0x18] sm:$0xff] %v2483
      %vm2489 = vcmask 756736
      %2490 = vst.msk [vmem:[#allocation3 + $0x20] sm:$0xf] %vm2489, %v2484
      %v2491 = vld [vmem:[#allocation2] sm:$0xff]
      %v2492 = vld [vmem:[#allocation2 + $0x8] sm:$0xff]
      %v2493 = vld [vmem:[#allocation2 + $0x10] sm:$0xff]
      %v2494 = vld [vmem:[#allocation2 + $0x18] sm:$0xff]
      %v2495 = vld [vmem:[#allocation2 + $0x20] sm:$0xf]
      %2501 = vrot.lane.b32.xlu0 %v2491, 127
      %v2502 = vpop.permute.xlu0 %2501
      %2503 = vrot.lane.b32.xlu0 %v2492, 127
      %v2504 = vpop.permute.xlu0 %2503
      %2505 = vrot.lane.b32.xlu0 %v2493, 127
      %v2506 = vpop.permute.xlu0 %2505
      %2507 = vrot.lane.b32.xlu0 %v2494, 127
      %v2508 = vpop.permute.xlu0 %2507
      %2509 = vrot.lane.b32.xlu0 %v2495, 127
      %v2510 = vpop.permute.xlu0 %2509
      %v2511 = vrot.slane %v2502, 4
      %v2512 = vrot.slane %v2504, 4
      %v2513 = vrot.slane %v2506, 4
      %v2514 = vrot.slane %v2508, 4
      %v2515 = vrot.slane %v2510, 4
      %v2516 = vsel %vm375, %v2511, %v2512
      %v2517 = vsel %vm1475, %v2502, %v2516
      %v2518 = vsel %vm375, %v2512, %v2513
      %v2519 = vsel %vm1475, %v2504, %v2518
      %v2520 = vsel %vm375, %v2513, %v2514
      %v2521 = vsel %vm1475, %v2506, %v2520
      %v2522 = vsel %vm375, %v2514, %v2515
      %v2523 = vsel %vm1475, %v2508, %v2522
      %2529 = vst [vmem:[#allocation3 + $0x24] sm:$0xff] %v2517
      %2530 = vst [vmem:[#allocation3 + $0x2c] sm:$0xff] %v2519
      %2531 = vst [vmem:[#allocation3 + $0x34] sm:$0xff] %v2521
      %2532 = vst [vmem:[#allocation3 + $0x3c] sm:$0xff] %v2523
      %2533 = vst.msk [vmem:[#allocation3 + $0x44] sm:$0xf] %vm2489, %v2510
      %v2534 = vld [vmem:[#allocation2] sm:$0xff]
      %v2535 = vld [vmem:[#allocation2 + $0x8] sm:$0xff]
      %v2536 = vld [vmem:[#allocation2 + $0x10] sm:$0xff]
      %v2537 = vld [vmem:[#allocation2 + $0x18] sm:$0xff]
      %v2538 = vld [vmem:[#allocation2 + $0x20] sm:$0xf]
      %2544 = vrot.lane.b32.xlu0 %v2534, 126
      %v2545 = vpop.permute.xlu0 %2544
      %2546 = vrot.lane.b32.xlu0 %v2535, 126
      %v2547 = vpop.permute.xlu0 %2546
      %2548 = vrot.lane.b32.xlu0 %v2536, 126
      %v2549 = vpop.permute.xlu0 %2548
      %2550 = vrot.lane.b32.xlu0 %v2537, 126
      %v2551 = vpop.permute.xlu0 %2550
      %2552 = vrot.lane.b32.xlu0 %v2538, 126
      %v2553 = vpop.permute.xlu0 %2552
      %v2554 = vrot.slane %v2545, 4
      %v2555 = vrot.slane %v2547, 4
      %v2556 = vrot.slane %v2549, 4
      %v2557 = vrot.slane %v2551, 4
      %v2558 = vrot.slane %v2553, 4
      %v2559 = vsel %vm375, %v2554, %v2555
      %v2560 = vsel %vm1398, %v2545, %v2559
      %v2561 = vsel %vm375, %v2555, %v2556
      %v2562 = vsel %vm1398, %v2547, %v2561
      %v2563 = vsel %vm375, %v2556, %v2557
      %v2564 = vsel %vm1398, %v2549, %v2563
      %v2565 = vsel %vm375, %v2557, %v2558
      %v2566 = vsel %vm1398, %v2551, %v2565
      %2572 = vst [vmem:[#allocation3 + $0x48] sm:$0xff] %v2560
      %2573 = vst [vmem:[#allocation3 + $0x50] sm:$0xff] %v2562
      %2574 = vst [vmem:[#allocation3 + $0x58] sm:$0xff] %v2564
      %2575 = vst [vmem:[#allocation3 + $0x60] sm:$0xff] %v2566
      %2576 = vst.msk [vmem:[#allocation3 + $0x68] sm:$0xf] %vm2489, %v2553
      %v2577 = vld [vmem:[#allocation2] sm:$0xff]
      %v2578 = vld [vmem:[#allocation2 + $0x8] sm:$0xff]
      %v2579 = vld [vmem:[#allocation2 + $0x10] sm:$0xff]
      %v2580 = vld [vmem:[#allocation2 + $0x18] sm:$0xff]
      %v2581 = vld [vmem:[#allocation2 + $0x20] sm:$0xf]
      %2587 = vrot.lane.b32.xlu0 %v2577, 93
      %v2588 = vpop.permute.xlu0 %2587
      %2589 = vrot.lane.b32.xlu0 %v2578, 93
      %v2590 = vpop.permute.xlu0 %2589
      %2591 = vrot.lane.b32.xlu0 %v2579, 93
      %v2592 = vpop.permute.xlu0 %2591
      %2593 = vrot.lane.b32.xlu0 %v2580, 93
      %v2594 = vpop.permute.xlu0 %2593
      %2595 = vrot.lane.b32.xlu0 %v2581, 93
      %v2596 = vpop.permute.xlu0 %2595
      %v2597 = vrot.slane %v2588, 4
      %v2598 = vrot.slane %v2590, 4
      %v2599 = vrot.slane %v2592, 4
      %v2600 = vrot.slane %v2594, 4
      %v2601 = vrot.slane %v2596, 4
      %v2602 = vsel %vm375, %v2597, %v2598
      %v2603 = vsel %vm1243, %v2588, %v2602
      %v2604 = vsel %vm375, %v2598, %v2599
      %v2605 = vsel %vm1243, %v2590, %v2604
      %v2606 = vsel %vm375, %v2599, %v2600
      %v2607 = vsel %vm1243, %v2592, %v2606
      %v2608 = vsel %vm375, %v2600, %v2601
      %v2609 = vsel %vm1243, %v2594, %v2608
      %2615 = vst [vmem:[#allocation3 + $0x6c] sm:$0xff] %v2603
      %2616 = vst [vmem:[#allocation3 + $0x74] sm:$0xff] %v2605
      %2617 = vst [vmem:[#allocation3 + $0x7c] sm:$0xff] %v2607
      %2618 = vst [vmem:[#allocation3 + $0x84] sm:$0xff] %v2609
      %2619 = vst.msk [vmem:[#allocation3 + $0x8c] sm:$0xf] %vm2489, %v2596
      %v2620 = vld [vmem:[#allocation2] sm:$0xff]
      %v2621 = vld [vmem:[#allocation2 + $0x8] sm:$0xff]
      %v2622 = vld [vmem:[#allocation2 + $0x10] sm:$0xff]
      %v2623 = vld [vmem:[#allocation2 + $0x18] sm:$0xff]
      %v2624 = vld [vmem:[#allocation2 + $0x20] sm:$0xff]
      %2630 = vrot.lane.b32.xlu0 %v2620, 92
      %v2631 = vpop.permute.xlu0 %2630
      %2632 = vrot.lane.b32.xlu0 %v2621, 92
      %v2633 = vpop.permute.xlu0 %2632
      %2634 = vrot.lane.b32.xlu0 %v2622, 92
      %v2635 = vpop.permute.xlu0 %2634
      %2636 = vrot.lane.b32.xlu0 %v2623, 92
      %v2637 = vpop.permute.xlu0 %2636
      %2638 = vrot.lane.b32.xlu0 %v2624, 92
      %v2639 = vpop.permute.xlu0 %2638
      %v2640 = vrot.slane %v2631, 4
      %v2641 = vrot.slane %v2633, 4
      %v2642 = vrot.slane %v2635, 4
      %v2643 = vrot.slane %v2637, 4
      %v2644 = vrot.slane %v2639, 4
      %v2645 = vsel %vm375, %v2640, %v2641
      %v2646 = vsel %vm1164, %v2631, %v2645
      %v2647 = vsel %vm375, %v2641, %v2642
      %v2648 = vsel %vm1164, %v2633, %v2647
      %v2649 = vsel %vm375, %v2642, %v2643
      %v2650 = vsel %vm1164, %v2635, %v2649
      %v2651 = vsel %vm375, %v2643, %v2644
      %v2652 = vsel %vm1164, %v2637, %v2651
      %v2653 = vsel %vm1164, %v2639, %v2644
      %2659 = vst [vmem:[#allocation3 + $0x90] sm:$0xff] %v2646
      %2660 = vst [vmem:[#allocation3 + $0x98] sm:$0xff] %v2648
      %2661 = vst [vmem:[#allocation3 + $0xa0] sm:$0xff] %v2650
      %2662 = vst [vmem:[#allocation3 + $0xa8] sm:$0xff] %v2652
      %2663 = vst.msk [vmem:[#allocation3 + $0xb0] sm:$0xf] %vm2489, %v2653
      %v2664 = vld [vmem:[#allocation2] sm:$0xff]
      %v2665 = vld [vmem:[#allocation2 + $0x8] sm:$0xff]
      %v2666 = vld [vmem:[#allocation2 + $0x10] sm:$0xff]
      %v2667 = vld [vmem:[#allocation2 + $0x18] sm:$0xff]
      %v2668 = vld [vmem:[#allocation2 + $0x20] sm:$0xff]
      %2674 = vrot.lane.b32.xlu0 %v2664, 91
      %v2675 = vpop.permute.xlu0 %2674
      %2676 = vrot.lane.b32.xlu0 %v2665, 91
      %v2677 = vpop.permute.xlu0 %2676
      %2678 = vrot.lane.b32.xlu0 %v2666, 91
      %v2679 = vpop.permute.xlu0 %2678
      %2680 = vrot.lane.b32.xlu0 %v2667, 91
      %v2681 = vpop.permute.xlu0 %2680
      %2682 = vrot.lane.b32.xlu0 %v2668, 91
      %v2683 = vpop.permute.xlu0 %2682
      %v2684 = vrot.slane %v2675, 4
      %v2685 = vrot.slane %v2677, 4
      %v2686 = vrot.slane %v2679, 4
      %v2687 = vrot.slane %v2681, 4
      %v2688 = vrot.slane %v2683, 4
      %v2689 = vsel %vm375, %v2684, %v2685
      %v2690 = vsel %vm1086, %v2675, %v2689
      %v2691 = vsel %vm375, %v2685, %v2686
      %v2692 = vsel %vm1086, %v2677, %v2691
      %v2693 = vsel %vm375, %v2686, %v2687
      %v2694 = vsel %vm1086, %v2679, %v2693
      %v2695 = vsel %vm375, %v2687, %v2688
      %v2696 = vsel %vm1086, %v2681, %v2695
      %v2697 = vsel %vm1086, %v2683, %v2688
      %2703 = vst [vmem:[#allocation3 + $0xb4] sm:$0xff] %v2690
      %2704 = vst [vmem:[#allocation3 + $0xbc] sm:$0xff] %v2692
      %2705 = vst [vmem:[#allocation3 + $0xc4] sm:$0xff] %v2694
      %2706 = vst [vmem:[#allocation3 + $0xcc] sm:$0xff] %v2696
      %2707 = vst.msk [vmem:[#allocation3 + $0xd4] sm:$0xf] %vm2489, %v2697
      %v2708 = vld [vmem:[#allocation2] sm:$0xff]
      %v2709 = vld [vmem:[#allocation2 + $0x8] sm:$0xff]
      %v2710 = vld [vmem:[#allocation2 + $0x10] sm:$0xff]
      %v2711 = vld [vmem:[#allocation2 + $0x18] sm:$0xff]
      %v2712 = vld [vmem:[#allocation2 + $0x20] sm:$0xff]
      %2718 = vrot.lane.b32.xlu0 %v2708, 58
      %v2719 = vpop.permute.xlu0 %2718
      %2720 = vrot.lane.b32.xlu0 %v2709, 58
      %v2721 = vpop.permute.xlu0 %2720
      %2722 = vrot.lane.b32.xlu0 %v2710, 58
      %v2723 = vpop.permute.xlu0 %2722
      %2724 = vrot.lane.b32.xlu0 %v2711, 58
      %v2725 = vpop.permute.xlu0 %2724
      %2726 = vrot.lane.b32.xlu0 %v2712, 58
      %v2727 = vpop.permute.xlu0 %2726
      %v2728 = vrot.slane %v2719, 4
      %v2729 = vrot.slane %v2721, 4
      %v2730 = vrot.slane %v2723, 4
      %v2731 = vrot.slane %v2725, 4
      %v2732 = vrot.slane %v2727, 4
      %v2733 = vsel %vm375, %v2728, %v2729
      %v2734 = vsel %vm929, %v2719, %v2733
      %v2735 = vsel %vm375, %v2729, %v2730
      %v2736 = vsel %vm929, %v2721, %v2735
      %v2737 = vsel %vm375, %v2730, %v2731
      %v2738 = vsel %vm929, %v2723, %v2737
      %v2739 = vsel %vm375, %v2731, %v2732
      %v2740 = vsel %vm929, %v2725, %v2739
      %v2741 = vsel %vm929, %v2727, %v2732
      %2747 = vst [vmem:[#allocation3 + $0xd8] sm:$0xff] %v2734
      %2748 = vst [vmem:[#allocation3 + $0xe0] sm:$0xff] %v2736
      %2749 = vst [vmem:[#allocation3 + $0xe8] sm:$0xff] %v2738
      %2750 = vst [vmem:[#allocation3 + $0xf0] sm:$0xff] %v2740
      %2751 = vst.msk [vmem:[#allocation3 + $0xf8] sm:$0xf] %vm2489, %v2741
      %v2752 = vld [vmem:[#allocation2] sm:$0xff]
      %v2753 = vld [vmem:[#allocation2 + $0x8] sm:$0xff]
      %v2754 = vld [vmem:[#allocation2 + $0x10] sm:$0xff]
      %v2755 = vld [vmem:[#allocation2 + $0x18] sm:$0xff]
      %v2756 = vld [vmem:[#allocation2 + $0x20] sm:$0xff]
      %2762 = vrot.lane.b32.xlu0 %v2752, 57
      %v2763 = vpop.permute.xlu0 %2762
      %2764 = vrot.lane.b32.xlu0 %v2753, 57
      %v2765 = vpop.permute.xlu0 %2764
      %2766 = vrot.lane.b32.xlu0 %v2754, 57
      %v2767 = vpop.permute.xlu0 %2766
      %2768 = vrot.lane.b32.xlu0 %v2755, 57
      %v2769 = vpop.permute.xlu0 %2768
      %2770 = vrot.lane.b32.xlu0 %v2756, 57
      %v2771 = vpop.permute.xlu0 %2770
      %v2772 = vrot.slane %v2763, 4
      %v2773 = vrot.slane %v2765, 4
      %v2774 = vrot.slane %v2767, 4
      %v2775 = vrot.slane %v2769, 4
      %v2776 = vrot.slane %v2771, 4
      %v2777 = vsel %vm375, %v2772, %v2773
      %v2778 = vsel %vm850, %v2763, %v2777
      %v2779 = vsel %vm375, %v2773, %v2774
      %v2780 = vsel %vm850, %v2765, %v2779
      %v2781 = vsel %vm375, %v2774, %v2775
      %v2782 = vsel %vm850, %v2767, %v2781
      %v2783 = vsel %vm375, %v2775, %v2776
      %v2784 = vsel %vm850, %v2769, %v2783
      %v2785 = vsel %vm850, %v2771, %v2776
      %2791 = vst [vmem:[#allocation3 + $0xfc] sm:$0xff] %v2778
      %2792 = vst [vmem:[#allocation3 + $0x104] sm:$0xff] %v2780
      %2793 = vst [vmem:[#allocation3 + $0x10c] sm:$0xff] %v2782
      %2794 = vst [vmem:[#allocation3 + $0x114] sm:$0xff] %v2784
      %2795 = vst.msk [vmem:[#allocation3 + $0x11c] sm:$0xf] %vm2489, %v2785
      %v2796 = vld [vmem:[#allocation2] sm:$0xff]
      %v2797 = vld [vmem:[#allocation2 + $0x8] sm:$0xff]
      %v2798 = vld [vmem:[#allocation2 + $0x10] sm:$0xff]
      %v2799 = vld [vmem:[#allocation2 + $0x18] sm:$0xff]
      %v2800 = vld [vmem:[#allocation2 + $0x20] sm:$0xff]
      %2806 = vrot.lane.b32.xlu0 %v2796, 56
      %v2807 = vpop.permute.xlu0 %2806
      %2808 = vrot.lane.b32.xlu0 %v2797, 56
      %v2809 = vpop.permute.xlu0 %2808
      %2810 = vrot.lane.b32.xlu0 %v2798, 56
      %v2811 = vpop.permute.xlu0 %2810
      %2812 = vrot.lane.b32.xlu0 %v2799, 56
      %v2813 = vpop.permute.xlu0 %2812
      %2814 = vrot.lane.b32.xlu0 %v2800, 56
      %v2815 = vpop.permute.xlu0 %2814
      %v2816 = vrot.slane %v2807, 4
      %v2817 = vrot.slane %v2809, 4
      %v2818 = vrot.slane %v2811, 4
      %v2819 = vrot.slane %v2813, 4
      %v2820 = vrot.slane %v2815, 4
      %v2821 = vsel %vm375, %v2816, %v2817
      %v2822 = vsel %vm772, %v2807, %v2821
      %v2823 = vsel %vm375, %v2817, %v2818
      %v2824 = vsel %vm772, %v2809, %v2823
      %v2825 = vsel %vm375, %v2818, %v2819
      %v2826 = vsel %vm772, %v2811, %v2825
      %v2827 = vsel %vm375, %v2819, %v2820
      %v2828 = vsel %vm772, %v2813, %v2827
      %v2829 = vsel %vm772, %v2815, %v2820
      %2835 = vst [vmem:[#allocation3 + $0x120] sm:$0xff] %v2822
      %2836 = vst [vmem:[#allocation3 + $0x128] sm:$0xff] %v2824
      %2837 = vst [vmem:[#allocation3 + $0x130] sm:$0xff] %v2826
      %2838 = vst [vmem:[#allocation3 + $0x138] sm:$0xff] %v2828
      %2839 = vst.msk [vmem:[#allocation3 + $0x140] sm:$0xf] %vm2489, %v2829
      %v2840 = vld [vmem:[%s3] sm:$0xf]
      %v2841 = vld [vmem:[#allocation3] sm:$0xff]
      %v2842 = vld [vmem:[#allocation3 + $0x8] sm:$0xff]
      %v2843 = vld [vmem:[#allocation3 + $0x10] sm:$0xff]
      %v2844 = vld [vmem:[#allocation3 + $0x18] sm:$0xff]
      %v2845 = vld [vmem:[#allocation3 + $0x20] sm:$0xf]
      %v2846 = vld [vmem:[#allocation3 + $0x24] sm:$0xff]
      %v2847 = vld [vmem:[#allocation3 + $0x2c] sm:$0xff]
      %v2848 = vld [vmem:[#allocation3 + $0x34] sm:$0xff]
      %v2849 = vld [vmem:[#allocation3 + $0x3c] sm:$0xff]
      %v2850 = vld [vmem:[#allocation3 + $0x44] sm:$0xf]
      %v2851 = vld [vmem:[#allocation3 + $0x48] sm:$0xff]
      %v2852 = vld [vmem:[#allocation3 + $0x50] sm:$0xff]
      %v2853 = vld [vmem:[#allocation3 + $0x58] sm:$0xff]
      %v2854 = vld [vmem:[#allocation3 + $0x60] sm:$0xff]
      %v2855 = vld [vmem:[#allocation3 + $0x68] sm:$0xf]
      %v2856 = vld [vmem:[#allocation3 + $0x6c] sm:$0xff]
      %v2857 = vld [vmem:[#allocation3 + $0x74] sm:$0xff]
      %v2858 = vld [vmem:[#allocation3 + $0x7c] sm:$0xff]
      %v2859 = vld [vmem:[#allocation3 + $0x84] sm:$0xff]
      %v2860 = vld [vmem:[#allocation3 + $0x8c] sm:$0xf]
      %v2861 = vld [vmem:[#allocation3 + $0x90] sm:$0xff]
      %v2862 = vld [vmem:[#allocation3 + $0x98] sm:$0xff]
      %v2863 = vld [vmem:[#allocation3 + $0xa0] sm:$0xff]
      %v2864 = vld [vmem:[#allocation3 + $0xa8] sm:$0xff]
      %v2865 = vld [vmem:[#allocation3 + $0xb0] sm:$0xf]
      %v2866 = vld [vmem:[#allocation3 + $0xb4] sm:$0xff]
      %v2867 = vld [vmem:[#allocation3 + $0xbc] sm:$0xff]
      %v2868 = vld [vmem:[#allocation3 + $0xc4] sm:$0xff]
      %v2869 = vld [vmem:[#allocation3 + $0xcc] sm:$0xff]
      %v2870 = vld [vmem:[#allocation3 + $0xd4] sm:$0xf]
      %v2871 = vld [vmem:[#allocation3 + $0xd8] sm:$0xff]
      %v2872 = vld [vmem:[#allocation3 + $0xe0] sm:$0xff]
      %v2873 = vld [vmem:[#allocation3 + $0xe8] sm:$0xff]
      %v2874 = vld [vmem:[#allocation3 + $0xf0] sm:$0xff]
      %v2875 = vld [vmem:[#allocation3 + $0xf8] sm:$0xf]
      %v2876 = vld [vmem:[#allocation3 + $0xfc] sm:$0xff]
      %v2877 = vld [vmem:[#allocation3 + $0x104] sm:$0xff]
      %v2878 = vld [vmem:[#allocation3 + $0x10c] sm:$0xff]
      %v2879 = vld [vmem:[#allocation3 + $0x114] sm:$0xff]
      %v2880 = vld [vmem:[#allocation3 + $0x11c] sm:$0xf]
      %v2881 = vld [vmem:[#allocation3 + $0x120] sm:$0xff]
      %v2882 = vld [vmem:[#allocation3 + $0x128] sm:$0xff]
      %v2883 = vld [vmem:[#allocation3 + $0x130] sm:$0xff]
      %v2884 = vld [vmem:[#allocation3 + $0x138] sm:$0xff]
      %v2885 = vld [vmem:[#allocation3 + $0x140] sm:$0xf]
      %v2886 = vld [vmem:[%s4] sm:$0xff]
      %2888 = vset.pattern.permute.xlu0 0
      %2889 = vperm.xlu0 %2888, %v2886
      %v2890 = vpop.permute.xlu0 %2889
      %v2937 = vunpack.c.l.b16 %v2841
      %v2938 = vunpack.c.h.b16 %v2841
      %v2939 = vunpack.c.l.b16 %v2842
      %v2940 = vunpack.c.h.b16 %v2842
      %v2941 = vunpack.c.l.b16 %v2843
      %v2942 = vunpack.c.h.b16 %v2843
      %v2943 = vunpack.c.l.b16 %v2844
      %v2944 = vunpack.c.h.b16 %v2844
      %v2945 = vunpack.c.l.b16 %v2845
      %v2946 = vunpack.c.l.b16 %v2846
      %v2947 = vunpack.c.h.b16 %v2846
      %v2948 = vunpack.c.l.b16 %v2847
      %v2949 = vunpack.c.h.b16 %v2847
      %v2950 = vunpack.c.l.b16 %v2848
      %v2951 = vunpack.c.h.b16 %v2848
      %v2952 = vunpack.c.l.b16 %v2849
      %v2953 = vunpack.c.h.b16 %v2849
      %v2954 = vunpack.c.l.b16 %v2850
      %v2955 = vunpack.c.l.b16 %v2851
      %v2956 = vunpack.c.h.b16 %v2851
      %v2957 = vunpack.c.l.b16 %v2852
      %v2958 = vunpack.c.h.b16 %v2852
      %v2959 = vunpack.c.l.b16 %v2853
      %v2960 = vunpack.c.h.b16 %v2853
      %v2961 = vunpack.c.l.b16 %v2854
      %v2962 = vunpack.c.h.b16 %v2854
      %v2963 = vunpack.c.l.b16 %v2855
      %v2964 = vunpack.c.l.b16 %v2856
      %v2965 = vunpack.c.h.b16 %v2856
      %v2966 = vunpack.c.l.b16 %v2857
      %v2967 = vunpack.c.h.b16 %v2857
      %v2968 = vunpack.c.l.b16 %v2858
      %v2969 = vunpack.c.h.b16 %v2858
      %v2970 = vunpack.c.l.b16 %v2859
      %v2971 = vunpack.c.h.b16 %v2859
      %v2972 = vunpack.c.l.b16 %v2860
      %v2973 = vunpack.c.l.b16 %v2861
      %v2974 = vunpack.c.h.b16 %v2861
      %v2975 = vunpack.c.l.b16 %v2862
      %v2976 = vunpack.c.h.b16 %v2862
      %v2977 = vunpack.c.l.b16 %v2863
      %v2978 = vunpack.c.h.b16 %v2863
      %v2979 = vunpack.c.l.b16 %v2864
      %v2980 = vunpack.c.h.b16 %v2864
      %v2981 = vunpack.c.l.b16 %v2865
      %v2982 = vunpack.c.l.b16 %v2866
      %v2983 = vunpack.c.h.b16 %v2866
      %v2984 = vunpack.c.l.b16 %v2867
      %v2985 = vunpack.c.h.b16 %v2867
      %v2986 = vunpack.c.l.b16 %v2868
      %v2987 = vunpack.c.h.b16 %v2868
      %v2988 = vunpack.c.l.b16 %v2869
      %v2989 = vunpack.c.h.b16 %v2869
      %v2990 = vunpack.c.l.b16 %v2870
      %v2991 = vunpack.c.l.b16 %v2871
      %v2992 = vunpack.c.h.b16 %v2871
      %v2993 = vunpack.c.l.b16 %v2872
      %v2994 = vunpack.c.h.b16 %v2872
      %v2995 = vunpack.c.l.b16 %v2873
      %v2996 = vunpack.c.h.b16 %v2873
      %v2997 = vunpack.c.l.b16 %v2874
      %v2998 = vunpack.c.h.b16 %v2874
      %v2999 = vunpack.c.l.b16 %v2875
      %v3000 = vunpack.c.l.b16 %v2876
      %v3001 = vunpack.c.h.b16 %v2876
      %v3002 = vunpack.c.l.b16 %v2877
      %v3003 = vunpack.c.h.b16 %v2877
      %v3004 = vunpack.c.l.b16 %v2878
      %v3005 = vunpack.c.h.b16 %v2878
      %v3006 = vunpack.c.l.b16 %v2879
      %v3007 = vunpack.c.h.b16 %v2879
      %v3008 = vunpack.c.l.b16 %v2880
      %v3009 = vunpack.c.l.b16 %v2881
      %v3010 = vunpack.c.h.b16 %v2881
      %v3011 = vunpack.c.l.b16 %v2882
      %v3012 = vunpack.c.h.b16 %v2882
      %v3013 = vunpack.c.l.b16 %v2883
      %v3014 = vunpack.c.h.b16 %v2883
      %v3015 = vunpack.c.l.b16 %v2884
      %v3016 = vunpack.c.h.b16 %v2884
      %v3017 = vunpack.c.l.b16 %v2885
      %v3018 = vpack.c.b16 %v2946, %v2937
      %v3019 = vpack.c.b16 %v2947, %v2938
      %v3020 = vpack.c.b16 %v2948, %v2939
      %v3021 = vpack.c.b16 %v2949, %v2940
      %v3022 = vpack.c.b16 %v2950, %v2941
      %v3023 = vpack.c.b16 %v2951, %v2942
      %v3024 = vpack.c.b16 %v2952, %v2943
      %v3025 = vpack.c.b16 %v2953, %v2944
      %v3026 = vpack.c.b16 %v2954, %v2945
      %v3027 = vpack.c.b16 %v2964, %v2955
      %v3028 = vpack.c.b16 %v2965, %v2956
      %v3029 = vpack.c.b16 %v2966, %v2957
      %v3030 = vpack.c.b16 %v2967, %v2958
      %v3031 = vpack.c.b16 %v2968, %v2959
      %v3032 = vpack.c.b16 %v2969, %v2960
      %v3033 = vpack.c.b16 %v2970, %v2961
      %v3034 = vpack.c.b16 %v2971, %v2962
      %v3035 = vpack.c.b16 %v2972, %v2963
      %v3036 = vpack.c.b16 %v2982, %v2973
      %v3037 = vpack.c.b16 %v2983, %v2974
      %v3038 = vpack.c.b16 %v2984, %v2975
      %v3039 = vpack.c.b16 %v2985, %v2976
      %v3040 = vpack.c.b16 %v2986, %v2977
      %v3041 = vpack.c.b16 %v2987, %v2978
      %v3042 = vpack.c.b16 %v2988, %v2979
      %v3043 = vpack.c.b16 %v2989, %v2980
      %v3044 = vpack.c.b16 %v2990, %v2981
      %v3045 = vpack.c.b16 %v3000, %v2991
      %v3046 = vpack.c.b16 %v3001, %v2992
      %v3047 = vpack.c.b16 %v3002, %v2993
      %v3048 = vpack.c.b16 %v3003, %v2994
      %v3049 = vpack.c.b16 %v3004, %v2995
      %v3050 = vpack.c.b16 %v3005, %v2996
      %v3051 = vpack.c.b16 %v3006, %v2997
      %v3052 = vpack.c.b16 %v3007, %v2998
      %v3053 = vpack.c.b16 %v3008, %v2999
      %v3054 = vpack.c.b16 %v3009, %v3009
      %v3055 = vpack.c.b16 %v3010, %v3010
      %v3056 = vpack.c.b16 %v3011, %v3011
      %v3057 = vpack.c.b16 %v3012, %v3012
      %v3058 = vpack.c.b16 %v3013, %v3013
      %v3059 = vpack.c.b16 %v3014, %v3014
      %v3060 = vpack.c.b16 %v3015, %v3015
      %v3061 = vpack.c.b16 %v3016, %v3016
      %v3062 = vpack.c.b16 %v3017, %v3017
      %vm3099 = vcmask 588800
      %v3101 = vsel %vm3099, %v2840, 0
      %v3104 = vsel %vm2476, %v3054, 0
      %v3107 = vsel %vm2476, %v3055, 0
      %v3110 = vsel %vm2476, %v3056, 0
      %v3113 = vsel %vm2476, %v3057, 0
      %v3116 = vsel %vm2476, %v3058, 0
      %v3119 = vsel %vm2476, %v3059, 0
      %v3122 = vsel %vm2476, %v3060, 0
      %v3125 = vsel %vm2476, %v3061, 0
      %v3128 = vsel %vm2476, %v3062, 0
      %3130 = vmatprep.subr.bf16.mxu0 0
      %3131 = vmatpush1.bf16.msra.mxu0 0
      %3132 = vmatprep.subr.bf16.mxu0 0
      %3133 = vmatpush1.bf16.msra.mxu0 0
      %3134 = vmatprep.subr.bf16.mxu0 0
      %3135 = vmatpush1.bf16.msra.mxu0 0
      %3136 = vmatprep.subr.bf16.mxu0 %v3107
      %3137 = vmatpush1.bf16.msra.mxu0 %v3104
      %3138 = vmatprep.subr.bf16.mxu0 %v3046
      %3139 = vmatpush1.bf16.msra.mxu0 %v3045
      %3140 = vmatprep.subr.bf16.mxu0 %v3037
      %3141 = vmatpush1.bf16.msra.mxu0 %v3036
      %3142 = vmatprep.subr.bf16.mxu0 %v3028
      %3143 = vmatpush1.bf16.msra.mxu0 %v3027
      %3144 = vmatprep.subr.bf16.mxu0 %v3019
      %3145 = vmatpush1.bf16.msra.mxu0 %v3018
      %3146 = vmatprep.subr.bf16.mxu0 0
      %3147 = vmatpush2.bf16.msra.mxu0 0
      %3148 = vmatprep.subr.bf16.mxu0 0
      %3149 = vmatpush2.bf16.msra.mxu0 0
      %3150 = vmatprep.subr.bf16.mxu0 0
      %3151 = vmatpush2.bf16.msra.mxu0 0
      %3152 = vmatprep.subr.bf16.mxu0 0
      %3153 = vmatpush2.bf16.msra.mxu0 0
      %3154 = vmatprep.subr.bf16.mxu0 0
      %3155 = vmatpush2.bf16.msra.mxu0 0
      %3156 = vmatprep.subr.bf16.mxu0 0
      %3157 = vmatpush2.bf16.msra.mxu0 0
      %3158 = vmatprep.subr.bf16.mxu0 0
      %3159 = vmatpush2.bf16.msra.mxu0 0
      %3160 = vmatprep.subr.bf16.mxu0 0
      %3161 = vmatpush2.bf16.msra.mxu0 0
      %3162 = vmatprep.mubr.bf16.mxu0 0
      %3163 = vmatmul.mubr.bf16.gmra.mxu0 %v3101
      %v3164 = vpop.f32.mrf.mxu0
      %v3165 = vadd.f32 %v2890, %v3164
      %v3166 = vpop.f32.mrf.mxu0
      %v3167 = vadd.f32 %v2890, %v3166
      %v3168 = vpop.f32.mrf.mxu0
      %v3169 = vpop.f32.mrf.mxu0
      %3170 = vdwg.mxu0
      %3171 = vmatprep.subr.bf16.mxu0 0
      %3172 = vmatpush1.bf16.msra.mxu0 0
      %3173 = vmatprep.subr.bf16.mxu0 0
      %3174 = vmatpush1.bf16.msra.mxu0 0
      %3175 = vmatprep.subr.bf16.mxu0 0
      %3176 = vmatpush1.bf16.msra.mxu0 0
      %3177 = vmatprep.subr.bf16.mxu0 %v3113
      %3178 = vmatpush1.bf16.msra.mxu0 %v3110
      %3179 = vmatprep.subr.bf16.mxu0 %v3048
      %3180 = vmatpush1.bf16.msra.mxu0 %v3047
      %3181 = vmatprep.subr.bf16.mxu0 %v3039
      %3182 = vmatpush1.bf16.msra.mxu0 %v3038
      %3183 = vmatprep.subr.bf16.mxu0 %v3030
      %3184 = vmatpush1.bf16.msra.mxu0 %v3029
      %3185 = vmatprep.subr.bf16.mxu0 %v3021
      %3186 = vmatpush1.bf16.msra.mxu0 %v3020
      %3187 = vmatprep.subr.bf16.mxu0 0
      %3188 = vmatpush2.bf16.msra.mxu0 0
      %3189 = vmatprep.subr.bf16.mxu0 0
      %3190 = vmatpush2.bf16.msra.mxu0 0
      %3191 = vmatprep.subr.bf16.mxu0 0
      %3192 = vmatpush2.bf16.msra.mxu0 0
      %3193 = vmatprep.subr.bf16.mxu0 0
      %3194 = vmatpush2.bf16.msra.mxu0 0
      %3195 = vmatprep.subr.bf16.mxu0 0
      %3196 = vmatpush2.bf16.msra.mxu0 0
      %3197 = vmatprep.subr.bf16.mxu0 0
      %3198 = vmatpush2.bf16.msra.mxu0 0
      %3199 = vmatprep.subr.bf16.mxu0 0
      %3200 = vmatpush2.bf16.msra.mxu0 0
      %3201 = vmatprep.subr.bf16.mxu0 0
      %3202 = vmatpush2.bf16.msra.mxu0 0
      %3203 = vmatprep.mubr.bf16.mxu0 0
      %3204 = vmatmul.mubr.bf16.gmra.mxu0 %v3101
      %v3205 = vpop.f32.mrf.mxu0
      %v3206 = vadd.f32 %v2890, %v3205
      %v3207 = vpop.f32.mrf.mxu0
      %v3208 = vadd.f32 %v2890, %v3207
      %v3209 = vpop.f32.mrf.mxu0
      %v3210 = vpop.f32.mrf.mxu0
      %3211 = vdwg.mxu0
      %3212 = vmatprep.subr.bf16.mxu0 0
      %3213 = vmatpush1.bf16.msra.mxu0 0
      %3214 = vmatprep.subr.bf16.mxu0 0
      %3215 = vmatpush1.bf16.msra.mxu0 0
      %3216 = vmatprep.subr.bf16.mxu0 0
      %3217 = vmatpush1.bf16.msra.mxu0 0
      %3218 = vmatprep.subr.bf16.mxu0 %v3119
      %3219 = vmatpush1.bf16.msra.mxu0 %v3116
      %3220 = vmatprep.subr.bf16.mxu0 %v3050
      %3221 = vmatpush1.bf16.msra.mxu0 %v3049
      %3222 = vmatprep.subr.bf16.mxu0 %v3041
      %3223 = vmatpush1.bf16.msra.mxu0 %v3040
      %3224 = vmatprep.subr.bf16.mxu0 %v3032
      %3225 = vmatpush1.bf16.msra.mxu0 %v3031
      %3226 = vmatprep.subr.bf16.mxu0 %v3023
      %3227 = vmatpush1.bf16.msra.mxu0 %v3022
      %3228 = vmatprep.subr.bf16.mxu0 0
      %3229 = vmatpush2.bf16.msra.mxu0 0
      %3230 = vmatprep.subr.bf16.mxu0 0
      %3231 = vmatpush2.bf16.msra.mxu0 0
      %3232 = vmatprep.subr.bf16.mxu0 0
      %3233 = vmatpush2.bf16.msra.mxu0 0
      %3234 = vmatprep.subr.bf16.mxu0 0
      %3235 = vmatpush2.bf16.msra.mxu0 0
      %3236 = vmatprep.subr.bf16.mxu0 0
      %3237 = vmatpush2.bf16.msra.mxu0 0
      %3238 = vmatprep.subr.bf16.mxu0 0
      %3239 = vmatpush2.bf16.msra.mxu0 0
      %3240 = vmatprep.subr.bf16.mxu0 0
      %3241 = vmatpush2.bf16.msra.mxu0 0
      %3242 = vmatprep.subr.bf16.mxu0 0
      %3243 = vmatpush2.bf16.msra.mxu0 0
      %3244 = vmatprep.mubr.bf16.mxu0 0
      %3245 = vmatmul.mubr.bf16.gmra.mxu0 %v3101
      %v3246 = vpop.f32.mrf.mxu0
      %v3247 = vadd.f32 %v2890, %v3246
      %v3248 = vpop.f32.mrf.mxu0
      %v3249 = vadd.f32 %v2890, %v3248
      %v3250 = vpop.f32.mrf.mxu0
      %v3251 = vpop.f32.mrf.mxu0
      %3252 = vdwg.mxu0
      %3253 = vmatprep.subr.bf16.mxu0 0
      %3254 = vmatpush1.bf16.msra.mxu0 0
      %3255 = vmatprep.subr.bf16.mxu0 0
      %3256 = vmatpush1.bf16.msra.mxu0 0
      %3257 = vmatprep.subr.bf16.mxu0 0
      %3258 = vmatpush1.bf16.msra.mxu0 0
      %3259 = vmatprep.subr.bf16.mxu0 %v3125
      %3260 = vmatpush1.bf16.msra.mxu0 %v3122
      %3261 = vmatprep.subr.bf16.mxu0 %v3052
      %3262 = vmatpush1.bf16.msra.mxu0 %v3051
      %3263 = vmatprep.subr.bf16.mxu0 %v3043
      %3264 = vmatpush1.bf16.msra.mxu0 %v3042
      %3265 = vmatprep.subr.bf16.mxu0 %v3034
      %3266 = vmatpush1.bf16.msra.mxu0 %v3033
      %3267 = vmatprep.subr.bf16.mxu0 %v3025
      %3268 = vmatpush1.bf16.msra.mxu0 %v3024
      %3269 = vmatprep.subr.bf16.mxu0 0
      %3270 = vmatpush2.bf16.msra.mxu0 0
      %3271 = vmatprep.subr.bf16.mxu0 0
      %3272 = vmatpush2.bf16.msra.mxu0 0
      %3273 = vmatprep.subr.bf16.mxu0 0
      %3274 = vmatpush2.bf16.msra.mxu0 0
      %3275 = vmatprep.subr.bf16.mxu0 0
      %3276 = vmatpush2.bf16.msra.mxu0 0
      %3277 = vmatprep.subr.bf16.mxu0 0
      %3278 = vmatpush2.bf16.msra.mxu0 0
      %3279 = vmatprep.subr.bf16.mxu0 0
      %3280 = vmatpush2.bf16.msra.mxu0 0
      %3281 = vmatprep.subr.bf16.mxu0 0
      %3282 = vmatpush2.bf16.msra.mxu0 0
      %3283 = vmatprep.subr.bf16.mxu0 0
      %3284 = vmatpush2.bf16.msra.mxu0 0
      %3285 = vmatprep.mubr.bf16.mxu0 0
      %3286 = vmatmul.mubr.bf16.gmra.mxu0 %v3101
      %v3287 = vpop.f32.mrf.mxu0
      %v3288 = vadd.f32 %v2890, %v3287
      %v3289 = vpop.f32.mrf.mxu0
      %v3290 = vadd.f32 %v2890, %v3289
      %v3291 = vpop.f32.mrf.mxu0
      %v3292 = vpop.f32.mrf.mxu0
      %3293 = vdwg.mxu0
      %3294 = vmatprep.subr.bf16.mxu0 0
      %3295 = vmatpush1.bf16.msra.mxu0 0
      %3296 = vmatprep.subr.bf16.mxu0 0
      %3297 = vmatpush1.bf16.msra.mxu0 0
      %3298 = vmatprep.subr.bf16.mxu0 0
      %3299 = vmatpush1.bf16.msra.mxu0 0
      %3300 = vmatprep.subr.bf16.mxu0 0
      %3301 = vmatpush1.bf16.msra.mxu0 %v3128
      %3302 = vmatprep.subr.bf16.mxu0 0
      %3303 = vmatpush1.bf16.msra.mxu0 %v3053
      %3304 = vmatprep.subr.bf16.mxu0 0
      %3305 = vmatpush1.bf16.msra.mxu0 %v3044
      %3306 = vmatprep.subr.bf16.mxu0 0
      %3307 = vmatpush1.bf16.msra.mxu0 %v3035
      %3308 = vmatprep.subr.bf16.mxu0 0
      %3309 = vmatpush1.bf16.msra.mxu0 %v3026
      %3310 = vmatprep.subr.bf16.mxu0 0
      %3311 = vmatpush2.bf16.msra.mxu0 0
      %3312 = vmatprep.subr.bf16.mxu0 0
      %3313 = vmatpush2.bf16.msra.mxu0 0
      %3314 = vmatprep.subr.bf16.mxu0 0
      %3315 = vmatpush2.bf16.msra.mxu0 0
      %3316 = vmatprep.subr.bf16.mxu0 0
      %3317 = vmatpush2.bf16.msra.mxu0 0
      %3318 = vmatprep.subr.bf16.mxu0 0
      %3319 = vmatpush2.bf16.msra.mxu0 0
      %3320 = vmatprep.subr.bf16.mxu0 0
      %3321 = vmatpush2.bf16.msra.mxu0 0
      %3322 = vmatprep.subr.bf16.mxu0 0
      %3323 = vmatpush2.bf16.msra.mxu0 0
      %3324 = vmatprep.subr.bf16.mxu0 0
      %3325 = vmatpush2.bf16.msra.mxu0 0
      %3326 = vmatprep.mubr.bf16.mxu0 0
      %3327 = vmatmul.mubr.bf16.gmra.mxu0 %v3101
      %v3328 = vpop.f32.mrf.mxu0
      %v3329 = vadd.f32 %v2890, %v3328
      %v3330 = vpop.f32.mrf.mxu0
      %v3331 = vpop.f32.mrf.mxu0
      %v3332 = vpop.f32.mrf.mxu0
      %3333 = vdwg.mxu0
      %v3334 = vmax.f32 %v3165, 0.0
      %v3335 = vmax.f32 %v3167, 0.0
      %v3336 = vmax.f32 %v3206, 0.0
      %v3337 = vmax.f32 %v3208, 0.0
      %v3338 = vmax.f32 %v3247, 0.0
      %v3339 = vmax.f32 %v3249, 0.0
      %v3340 = vmax.f32 %v3288, 0.0
      %v3341 = vmax.f32 %v3290, 0.0
      %v3342 = vmax.f32 %v3329, 0.0
      %v3343 = vmul.f32 %v3334, %v2356
      %v3344 = vmul.f32 %v3335, %v2360
      %v3345 = vmul.f32 %v3336, %v2364
      %v3346 = vmul.f32 %v3337, %v2368
      %v3347 = vmul.f32 %v3338, %v2372
      %v3348 = vmul.f32 %v3339, %v2376
      %v3349 = vmul.f32 %v3340, %v2380
      %v3350 = vmul.f32 %v3341, %v2384
      %v3351 = vmul.f32 %v3342, %v2388
      %v3352 = vpack.c.bf16 %v3343, %v3343
      %v3353 = vpack.c.bf16 %v3344, %v3344
      %v3354 = vpack.c.bf16 %v3345, %v3345
      %v3355 = vpack.c.bf16 %v3346, %v3346
      %v3356 = vpack.c.bf16 %v3347, %v3347
      %v3357 = vpack.c.bf16 %v3348, %v3348
      %v3358 = vpack.c.bf16 %v3349, %v3349
      %v3359 = vpack.c.bf16 %v3350, %v3350
      %v3360 = vpack.c.bf16 %v3351, %v3351
      %v3370 = vunpack.c.l.b16 %v3352
      %v3371 = vunpack.c.l.b16 %v3353
      %v3372 = vunpack.c.l.b16 %v3354
      %v3373 = vunpack.c.l.b16 %v3355
      %v3374 = vunpack.c.l.b16 %v3356
      %v3375 = vunpack.c.l.b16 %v3357
      %v3376 = vunpack.c.l.b16 %v3358
      %v3377 = vunpack.c.l.b16 %v3359
      %v3378 = vunpack.c.l.b16 %v3360
      %v3379 = vpack.c.b16 %v3371, %v3370
      %v3380 = vpack.c.b16 %v3373, %v3372
      %v3381 = vpack.c.b16 %v3375, %v3374
      %v3382 = vpack.c.b16 %v3377, %v3376
      %v3383 = vpack.c.b16 %v3378, %v3378
      %3384 = vrot.lane.b32.xlu0 %v3379, 36
      %v3385 = vpop.permute.xlu0 %3384
      %3386 = vrot.lane.b32.xlu0 %v3380, 36
      %v3387 = vpop.permute.xlu0 %3386
      %3388 = vrot.lane.b32.xlu0 %v3381, 36
      %v3389 = vpop.permute.xlu0 %3388
      %3390 = vrot.lane.b32.xlu0 %v3382, 36
      %v3391 = vpop.permute.xlu0 %3390
      %3392 = vrot.lane.b32.xlu0 %v3383, 36
      %v3393 = vpop.permute.xlu0 %3392
      %v3394 = vrot.slane %v3385, 4
      %v3395 = vrot.slane %v3387, 4
      %v3396 = vrot.slane %v3389, 4
      %v3397 = vrot.slane %v3391, 4
      %v3398 = vrot.slane %v3393, 4
      %v3399 = vsel %vm2454, %v3394, %v3385
      %v3400 = vsel %vm375, %v3394, %v3395
      %v3401 = vsel %vm2454, %v3400, %v3387
      %v3402 = vsel %vm375, %v3395, %v3396
      %v3403 = vsel %vm2454, %v3402, %v3389
      %v3404 = vsel %vm375, %v3396, %v3397
      %v3405 = vsel %vm2454, %v3404, %v3391
      %v3406 = vsel %vm375, %v3397, %v3398
      %v3407 = vsel %vm2454, %v3406, %v3393
      %3413 = vst.msk [vmem:[#allocation2] sm:$0xff] %vm2471, %v3399
      %3414 = vst [vmem:[#allocation2 + $0x8] sm:$0xff] %v3401
      %3415 = vst [vmem:[#allocation2 + $0x10] sm:$0xff] %v3403
      %3416 = vst [vmem:[#allocation2 + $0x18] sm:$0xff] %v3405
      %3417 = vst.msk [vmem:[#allocation2 + $0x20] sm:$0xff] %vm2478, %v3407
      %v3418 = vld [vmem:[#allocation2] sm:$0xff]
      %v3419 = vld [vmem:[#allocation2 + $0x8] sm:$0xff]
      %v3420 = vld [vmem:[#allocation2 + $0x10] sm:$0xff]
      %v3421 = vld [vmem:[#allocation2 + $0x18] sm:$0xff]
      %v3422 = vld [vmem:[#allocation2 + $0x20] sm:$0xf]
      %3423 = vst [vmem:[#allocation3] sm:$0xff] %v3418
      %3424 = vst [vmem:[#allocation3 + $0x8] sm:$0xff] %v3419
      %3425 = vst [vmem:[#allocation3 + $0x10] sm:$0xff] %v3420
      %3426 = vst [vmem:[#allocation3 + $0x18] sm:$0xff] %v3421
      %3427 = vst.msk [vmem:[#allocation3 + $0x20] sm:$0xf] %vm2489, %v3422
      %v3428 = vld [vmem:[#allocation2] sm:$0xff]
      %v3429 = vld [vmem:[#allocation2 + $0x8] sm:$0xff]
      %v3430 = vld [vmem:[#allocation2 + $0x10] sm:$0xff]
      %v3431 = vld [vmem:[#allocation2 + $0x18] sm:$0xff]
      %v3432 = vld [vmem:[#allocation2 + $0x20] sm:$0xf]
      %3438 = vrot.lane.b32.xlu0 %v3428, 127
      %v3439 = vpop.permute.xlu0 %3438
      %3440 = vrot.lane.b32.xlu0 %v3429, 127
      %v3441 = vpop.permute.xlu0 %3440
      %3442 = vrot.lane.b32.xlu0 %v3430, 127
      %v3443 = vpop.permute.xlu0 %3442
      %3444 = vrot.lane.b32.xlu0 %v3431, 127
      %v3445 = vpop.permute.xlu0 %3444
      %3446 = vrot.lane.b32.xlu0 %v3432, 127
      %v3447 = vpop.permute.xlu0 %3446
      %v3448 = vrot.slane %v3439, 4
      %v3449 = vrot.slane %v3441, 4
      %v3450 = vrot.slane %v3443, 4
      %v3451 = vrot.slane %v3445, 4
      %v3452 = vrot.slane %v3447, 4
      %v3453 = vsel %vm375, %v3448, %v3449
      %v3454 = vsel %vm1475, %v3439, %v3453
      %v3455 = vsel %vm375, %v3449, %v3450
      %v3456 = vsel %vm1475, %v3441, %v3455
      %v3457 = vsel %vm375, %v3450, %v3451
      %v3458 = vsel %vm1475, %v3443, %v3457
      %v3459 = vsel %vm375, %v3451, %v3452
      %v3460 = vsel %vm1475, %v3445, %v3459
      %3466 = vst [vmem:[#allocation3 + $0x24] sm:$0xff] %v3454
      %3467 = vst [vmem:[#allocation3 + $0x2c] sm:$0xff] %v3456
      %3468 = vst [vmem:[#allocation3 + $0x34] sm:$0xff] %v3458
      %3469 = vst [vmem:[#allocation3 + $0x3c] sm:$0xff] %v3460
      %3470 = vst.msk [vmem:[#allocation3 + $0x44] sm:$0xf] %vm2489, %v3447
      %v3471 = vld [vmem:[#allocation2] sm:$0xff]
      %v3472 = vld [vmem:[#allocation2 + $0x8] sm:$0xff]
      %v3473 = vld [vmem:[#allocation2 + $0x10] sm:$0xff]
      %v3474 = vld [vmem:[#allocation2 + $0x18] sm:$0xff]
      %v3475 = vld [vmem:[#allocation2 + $0x20] sm:$0xf]
      %3481 = vrot.lane.b32.xlu0 %v3471, 126
      %v3482 = vpop.permute.xlu0 %3481
      %3483 = vrot.lane.b32.xlu0 %v3472, 126
      %v3484 = vpop.permute.xlu0 %3483
      %3485 = vrot.lane.b32.xlu0 %v3473, 126
      %v3486 = vpop.permute.xlu0 %3485
      %3487 = vrot.lane.b32.xlu0 %v3474, 126
      %v3488 = vpop.permute.xlu0 %3487
      %3489 = vrot.lane.b32.xlu0 %v3475, 126
      %v3490 = vpop.permute.xlu0 %3489
      %v3491 = vrot.slane %v3482, 4
      %v3492 = vrot.slane %v3484, 4
      %v3493 = vrot.slane %v3486, 4
      %v3494 = vrot.slane %v3488, 4
      %v3495 = vrot.slane %v3490, 4
      %v3496 = vsel %vm375, %v3491, %v3492
      %v3497 = vsel %vm1398, %v3482, %v3496
      %v3498 = vsel %vm375, %v3492, %v3493
      %v3499 = vsel %vm1398, %v3484, %v3498
      %v3500 = vsel %vm375, %v3493, %v3494
      %v3501 = vsel %vm1398, %v3486, %v3500
      %v3502 = vsel %vm375, %v3494, %v3495
      %v3503 = vsel %vm1398, %v3488, %v3502
      %3509 = vst [vmem:[#allocation3 + $0x48] sm:$0xff] %v3497
      %3510 = vst [vmem:[#allocation3 + $0x50] sm:$0xff] %v3499
      %3511 = vst [vmem:[#allocation3 + $0x58] sm:$0xff] %v3501
      %3512 = vst [vmem:[#allocation3 + $0x60] sm:$0xff] %v3503
      %3513 = vst.msk [vmem:[#allocation3 + $0x68] sm:$0xf] %vm2489, %v3490
      %v3514 = vld [vmem:[#allocation2] sm:$0xff]
      %v3515 = vld [vmem:[#allocation2 + $0x8] sm:$0xff]
      %v3516 = vld [vmem:[#allocation2 + $0x10] sm:$0xff]
      %v3517 = vld [vmem:[#allocation2 + $0x18] sm:$0xff]
      %v3518 = vld [vmem:[#allocation2 + $0x20] sm:$0xf]
      %3524 = vrot.lane.b32.xlu0 %v3514, 93
      %v3525 = vpop.permute.xlu0 %3524
      %3526 = vrot.lane.b32.xlu0 %v3515, 93
      %v3527 = vpop.permute.xlu0 %3526
      %3528 = vrot.lane.b32.xlu0 %v3516, 93
      %v3529 = vpop.permute.xlu0 %3528
      %3530 = vrot.lane.b32.xlu0 %v3517, 93
      %v3531 = vpop.permute.xlu0 %3530
      %3532 = vrot.lane.b32.xlu0 %v3518, 93
      %v3533 = vpop.permute.xlu0 %3532
      %v3534 = vrot.slane %v3525, 4
      %v3535 = vrot.slane %v3527, 4
      %v3536 = vrot.slane %v3529, 4
      %v3537 = vrot.slane %v3531, 4
      %v3538 = vrot.slane %v3533, 4
      %v3539 = vsel %vm375, %v3534, %v3535
      %v3540 = vsel %vm1243, %v3525, %v3539
      %v3541 = vsel %vm375, %v3535, %v3536
      %v3542 = vsel %vm1243, %v3527, %v3541
      %v3543 = vsel %vm375, %v3536, %v3537
      %v3544 = vsel %vm1243, %v3529, %v3543
      %v3545 = vsel %vm375, %v3537, %v3538
      %v3546 = vsel %vm1243, %v3531, %v3545
      %3552 = vst [vmem:[#allocation3 + $0x6c] sm:$0xff] %v3540
      %3553 = vst [vmem:[#allocation3 + $0x74] sm:$0xff] %v3542
      %3554 = vst [vmem:[#allocation3 + $0x7c] sm:$0xff] %v3544
      %3555 = vst [vmem:[#allocation3 + $0x84] sm:$0xff] %v3546
      %3556 = vst.msk [vmem:[#allocation3 + $0x8c] sm:$0xf] %vm2489, %v3533
      %v3557 = vld [vmem:[#allocation2] sm:$0xff]
      %v3558 = vld [vmem:[#allocation2 + $0x8] sm:$0xff]
      %v3559 = vld [vmem:[#allocation2 + $0x10] sm:$0xff]
      %v3560 = vld [vmem:[#allocation2 + $0x18] sm:$0xff]
      %v3561 = vld [vmem:[#allocation2 + $0x20] sm:$0xff]
      %3567 = vrot.lane.b32.xlu0 %v3557, 92
      %v3568 = vpop.permute.xlu0 %3567
      %3569 = vrot.lane.b32.xlu0 %v3558, 92
      %v3570 = vpop.permute.xlu0 %3569
      %3571 = vrot.lane.b32.xlu0 %v3559, 92
      %v3572 = vpop.permute.xlu0 %3571
      %3573 = vrot.lane.b32.xlu0 %v3560, 92
      %v3574 = vpop.permute.xlu0 %3573
      %3575 = vrot.lane.b32.xlu0 %v3561, 92
      %v3576 = vpop.permute.xlu0 %3575
      %v3577 = vrot.slane %v3568, 4
      %v3578 = vrot.slane %v3570, 4
      %v3579 = vrot.slane %v3572, 4
      %v3580 = vrot.slane %v3574, 4
      %v3581 = vrot.slane %v3576, 4
      %v3582 = vsel %vm375, %v3577, %v3578
      %v3583 = vsel %vm1164, %v3568, %v3582
      %v3584 = vsel %vm375, %v3578, %v3579
      %v3585 = vsel %vm1164, %v3570, %v3584
      %v3586 = vsel %vm375, %v3579, %v3580
      %v3587 = vsel %vm1164, %v3572, %v3586
      %v3588 = vsel %vm375, %v3580, %v3581
      %v3589 = vsel %vm1164, %v3574, %v3588
      %v3590 = vsel %vm1164, %v3576, %v3581
      %3596 = vst [vmem:[#allocation3 + $0x90] sm:$0xff] %v3583
      %3597 = vst [vmem:[#allocation3 + $0x98] sm:$0xff] %v3585
      %3598 = vst [vmem:[#allocation3 + $0xa0] sm:$0xff] %v3587
      %3599 = vst [vmem:[#allocation3 + $0xa8] sm:$0xff] %v3589
      %3600 = vst.msk [vmem:[#allocation3 + $0xb0] sm:$0xf] %vm2489, %v3590
      %v3601 = vld [vmem:[#allocation2] sm:$0xff]
      %v3602 = vld [vmem:[#allocation2 + $0x8] sm:$0xff]
      %v3603 = vld [vmem:[#allocation2 + $0x10] sm:$0xff]
      %v3604 = vld [vmem:[#allocation2 + $0x18] sm:$0xff]
      %v3605 = vld [vmem:[#allocation2 + $0x20] sm:$0xff]
      %3611 = vrot.lane.b32.xlu0 %v3601, 91
      %v3612 = vpop.permute.xlu0 %3611
      %3613 = vrot.lane.b32.xlu0 %v3602, 91
      %v3614 = vpop.permute.xlu0 %3613
      %3615 = vrot.lane.b32.xlu0 %v3603, 91
      %v3616 = vpop.permute.xlu0 %3615
      %3617 = vrot.lane.b32.xlu0 %v3604, 91
      %v3618 = vpop.permute.xlu0 %3617
      %3619 = vrot.lane.b32.xlu0 %v3605, 91
      %v3620 = vpop.permute.xlu0 %3619
      %v3621 = vrot.slane %v3612, 4
      %v3622 = vrot.slane %v3614, 4
      %v3623 = vrot.slane %v3616, 4
      %v3624 = vrot.slane %v3618, 4
      %v3625 = vrot.slane %v3620, 4
      %v3626 = vsel %vm375, %v3621, %v3622
      %v3627 = vsel %vm1086, %v3612, %v3626
      %v3628 = vsel %vm375, %v3622, %v3623
      %v3629 = vsel %vm1086, %v3614, %v3628
      %v3630 = vsel %vm375, %v3623, %v3624
      %v3631 = vsel %vm1086, %v3616, %v3630
      %v3632 = vsel %vm375, %v3624, %v3625
      %v3633 = vsel %vm1086, %v3618, %v3632
      %v3634 = vsel %vm1086, %v3620, %v3625
      %3640 = vst [vmem:[#allocation3 + $0xb4] sm:$0xff] %v3627
      %3641 = vst [vmem:[#allocation3 + $0xbc] sm:$0xff] %v3629
      %3642 = vst [vmem:[#allocation3 + $0xc4] sm:$0xff] %v3631
      %3643 = vst [vmem:[#allocation3 + $0xcc] sm:$0xff] %v3633
      %3644 = vst.msk [vmem:[#allocation3 + $0xd4] sm:$0xf] %vm2489, %v3634
      %v3645 = vld [vmem:[#allocation2] sm:$0xff]
      %v3646 = vld [vmem:[#allocation2 + $0x8] sm:$0xff]
      %v3647 = vld [vmem:[#allocation2 + $0x10] sm:$0xff]
      %v3648 = vld [vmem:[#allocation2 + $0x18] sm:$0xff]
      %v3649 = vld [vmem:[#allocation2 + $0x20] sm:$0xff]
      %3655 = vrot.lane.b32.xlu0 %v3645, 58
      %v3656 = vpop.permute.xlu0 %3655
      %3657 = vrot.lane.b32.xlu0 %v3646, 58
      %v3658 = vpop.permute.xlu0 %3657
      %3659 = vrot.lane.b32.xlu0 %v3647, 58
      %v3660 = vpop.permute.xlu0 %3659
      %3661 = vrot.lane.b32.xlu0 %v3648, 58
      %v3662 = vpop.permute.xlu0 %3661
      %3663 = vrot.lane.b32.xlu0 %v3649, 58
      %v3664 = vpop.permute.xlu0 %3663
      %v3665 = vrot.slane %v3656, 4
      %v3666 = vrot.slane %v3658, 4
      %v3667 = vrot.slane %v3660, 4
      %v3668 = vrot.slane %v3662, 4
      %v3669 = vrot.slane %v3664, 4
      %v3670 = vsel %vm375, %v3665, %v3666
      %v3671 = vsel %vm929, %v3656, %v3670
      %v3672 = vsel %vm375, %v3666, %v3667
      %v3673 = vsel %vm929, %v3658, %v3672
      %v3674 = vsel %vm375, %v3667, %v3668
      %v3675 = vsel %vm929, %v3660, %v3674
      %v3676 = vsel %vm375, %v3668, %v3669
      %v3677 = vsel %vm929, %v3662, %v3676
      %v3678 = vsel %vm929, %v3664, %v3669
      %3684 = vst [vmem:[#allocation3 + $0xd8] sm:$0xff] %v3671
      %3685 = vst [vmem:[#allocation3 + $0xe0] sm:$0xff] %v3673
      %3686 = vst [vmem:[#allocation3 + $0xe8] sm:$0xff] %v3675
      %3687 = vst [vmem:[#allocation3 + $0xf0] sm:$0xff] %v3677
      %3688 = vst.msk [vmem:[#allocation3 + $0xf8] sm:$0xf] %vm2489, %v3678
      %v3689 = vld [vmem:[#allocation2] sm:$0xff]
      %v3690 = vld [vmem:[#allocation2 + $0x8] sm:$0xff]
      %v3691 = vld [vmem:[#allocation2 + $0x10] sm:$0xff]
      %v3692 = vld [vmem:[#allocation2 + $0x18] sm:$0xff]
      %v3693 = vld [vmem:[#allocation2 + $0x20] sm:$0xff]
      %3699 = vrot.lane.b32.xlu0 %v3689, 57
      %v3700 = vpop.permute.xlu0 %3699
      %3701 = vrot.lane.b32.xlu0 %v3690, 57
      %v3702 = vpop.permute.xlu0 %3701
      %3703 = vrot.lane.b32.xlu0 %v3691, 57
      %v3704 = vpop.permute.xlu0 %3703
      %3705 = vrot.lane.b32.xlu0 %v3692, 57
      %v3706 = vpop.permute.xlu0 %3705
      %3707 = vrot.lane.b32.xlu0 %v3693, 57
      %v3708 = vpop.permute.xlu0 %3707
      %v3709 = vrot.slane %v3700, 4
      %v3710 = vrot.slane %v3702, 4
      %v3711 = vrot.slane %v3704, 4
      %v3712 = vrot.slane %v3706, 4
      %v3713 = vrot.slane %v3708, 4
      %v3714 = vsel %vm375, %v3709, %v3710
      %v3715 = vsel %vm850, %v3700, %v3714
      %v3716 = vsel %vm375, %v3710, %v3711
      %v3717 = vsel %vm850, %v3702, %v3716
      %v3718 = vsel %vm375, %v3711, %v3712
      %v3719 = vsel %vm850, %v3704, %v3718
      %v3720 = vsel %vm375, %v3712, %v3713
      %v3721 = vsel %vm850, %v3706, %v3720
      %v3722 = vsel %vm850, %v3708, %v3713
      %3728 = vst [vmem:[#allocation3 + $0xfc] sm:$0xff] %v3715
      %3729 = vst [vmem:[#allocation3 + $0x104] sm:$0xff] %v3717
      %3730 = vst [vmem:[#allocation3 + $0x10c] sm:$0xff] %v3719
      %3731 = vst [vmem:[#allocation3 + $0x114] sm:$0xff] %v3721
      %3732 = vst.msk [vmem:[#allocation3 + $0x11c] sm:$0xf] %vm2489, %v3722
      %v3733 = vld [vmem:[#allocation2] sm:$0xff]
      %v3734 = vld [vmem:[#allocation2 + $0x8] sm:$0xff]
      %v3735 = vld [vmem:[#allocation2 + $0x10] sm:$0xff]
      %v3736 = vld [vmem:[#allocation2 + $0x18] sm:$0xff]
      %v3737 = vld [vmem:[#allocation2 + $0x20] sm:$0xff]
      %3743 = vrot.lane.b32.xlu0 %v3733, 56
      %v3744 = vpop.permute.xlu0 %3743
      %3745 = vrot.lane.b32.xlu0 %v3734, 56
      %v3746 = vpop.permute.xlu0 %3745
      %3747 = vrot.lane.b32.xlu0 %v3735, 56
      %v3748 = vpop.permute.xlu0 %3747
      %3749 = vrot.lane.b32.xlu0 %v3736, 56
      %v3750 = vpop.permute.xlu0 %3749
      %3751 = vrot.lane.b32.xlu0 %v3737, 56
      %v3752 = vpop.permute.xlu0 %3751
      %v3753 = vrot.slane %v3744, 4
      %v3754 = vrot.slane %v3746, 4
      %v3755 = vrot.slane %v3748, 4
      %v3756 = vrot.slane %v3750, 4
      %v3757 = vrot.slane %v3752, 4
      %v3758 = vsel %vm375, %v3753, %v3754
      %v3759 = vsel %vm772, %v3744, %v3758
      %v3760 = vsel %vm375, %v3754, %v3755
      %v3761 = vsel %vm772, %v3746, %v3760
      %v3762 = vsel %vm375, %v3755, %v3756
      %v3763 = vsel %vm772, %v3748, %v3762
      %v3764 = vsel %vm375, %v3756, %v3757
      %v3765 = vsel %vm772, %v3750, %v3764
      %v3766 = vsel %vm772, %v3752, %v3757
      %3772 = vst [vmem:[#allocation3 + $0x120] sm:$0xff] %v3759
      %3773 = vst [vmem:[#allocation3 + $0x128] sm:$0xff] %v3761
      %3774 = vst [vmem:[#allocation3 + $0x130] sm:$0xff] %v3763
      %3775 = vst [vmem:[#allocation3 + $0x138] sm:$0xff] %v3765
      %3776 = vst.msk [vmem:[#allocation3 + $0x140] sm:$0xf] %vm2489, %v3766
      %v3777 = vld [vmem:[%s5] sm:$0xf]
      %v3778 = vld [vmem:[#allocation3] sm:$0xff]
      %v3779 = vld [vmem:[#allocation3 + $0x8] sm:$0xff]
      %v3780 = vld [vmem:[#allocation3 + $0x10] sm:$0xff]
      %v3781 = vld [vmem:[#allocation3 + $0x18] sm:$0xff]
      %v3782 = vld [vmem:[#allocation3 + $0x20] sm:$0xf]
      %v3783 = vld [vmem:[#allocation3 + $0x24] sm:$0xff]
      %v3784 = vld [vmem:[#allocation3 + $0x2c] sm:$0xff]
      %v3785 = vld [vmem:[#allocation3 + $0x34] sm:$0xff]
      %v3786 = vld [vmem:[#allocation3 + $0x3c] sm:$0xff]
      %v3787 = vld [vmem:[#allocation3 + $0x44] sm:$0xf]
      %v3788 = vld [vmem:[#allocation3 + $0x48] sm:$0xff]
      %v3789 = vld [vmem:[#allocation3 + $0x50] sm:$0xff]
      %v3790 = vld [vmem:[#allocation3 + $0x58] sm:$0xff]
      %v3791 = vld [vmem:[#allocation3 + $0x60] sm:$0xff]
      %v3792 = vld [vmem:[#allocation3 + $0x68] sm:$0xf]
      %v3793 = vld [vmem:[#allocation3 + $0x6c] sm:$0xff]
      %v3794 = vld [vmem:[#allocation3 + $0x74] sm:$0xff]
      %v3795 = vld [vmem:[#allocation3 + $0x7c] sm:$0xff]
      %v3796 = vld [vmem:[#allocation3 + $0x84] sm:$0xff]
      %v3797 = vld [vmem:[#allocation3 + $0x8c] sm:$0xf]
      %v3798 = vld [vmem:[#allocation3 + $0x90] sm:$0xff]
      %v3799 = vld [vmem:[#allocation3 + $0x98] sm:$0xff]
      %v3800 = vld [vmem:[#allocation3 + $0xa0] sm:$0xff]
      %v3801 = vld [vmem:[#allocation3 + $0xa8] sm:$0xff]
      %v3802 = vld [vmem:[#allocation3 + $0xb0] sm:$0xf]
      %v3803 = vld [vmem:[#allocation3 + $0xb4] sm:$0xff]
      %v3804 = vld [vmem:[#allocation3 + $0xbc] sm:$0xff]
      %v3805 = vld [vmem:[#allocation3 + $0xc4] sm:$0xff]
      %v3806 = vld [vmem:[#allocation3 + $0xcc] sm:$0xff]
      %v3807 = vld [vmem:[#allocation3 + $0xd4] sm:$0xf]
      %v3808 = vld [vmem:[#allocation3 + $0xd8] sm:$0xff]
      %v3809 = vld [vmem:[#allocation3 + $0xe0] sm:$0xff]
      %v3810 = vld [vmem:[#allocation3 + $0xe8] sm:$0xff]
      %v3811 = vld [vmem:[#allocation3 + $0xf0] sm:$0xff]
      %v3812 = vld [vmem:[#allocation3 + $0xf8] sm:$0xf]
      %v3813 = vld [vmem:[#allocation3 + $0xfc] sm:$0xff]
      %v3814 = vld [vmem:[#allocation3 + $0x104] sm:$0xff]
      %v3815 = vld [vmem:[#allocation3 + $0x10c] sm:$0xff]
      %v3816 = vld [vmem:[#allocation3 + $0x114] sm:$0xff]
      %v3817 = vld [vmem:[#allocation3 + $0x11c] sm:$0xf]
      %v3818 = vld [vmem:[#allocation3 + $0x120] sm:$0xff]
      %v3819 = vld [vmem:[#allocation3 + $0x128] sm:$0xff]
      %v3820 = vld [vmem:[#allocation3 + $0x130] sm:$0xff]
      %v3821 = vld [vmem:[#allocation3 + $0x138] sm:$0xff]
      %v3822 = vld [vmem:[#allocation3 + $0x140] sm:$0xf]
      %v3823 = vld [vmem:[%s6] sm:$0xff]
      %3825 = vset.pattern.permute.xlu0 0
      %3826 = vperm.xlu0 %3825, %v3823
      %v3827 = vpop.permute.xlu0 %3826
      %v3874 = vunpack.c.l.b16 %v3778
      %v3875 = vunpack.c.h.b16 %v3778
      %v3876 = vunpack.c.l.b16 %v3779
      %v3877 = vunpack.c.h.b16 %v3779
      %v3878 = vunpack.c.l.b16 %v3780
      %v3879 = vunpack.c.h.b16 %v3780
      %v3880 = vunpack.c.l.b16 %v3781
      %v3881 = vunpack.c.h.b16 %v3781
      %v3882 = vunpack.c.l.b16 %v3782
      %v3883 = vunpack.c.l.b16 %v3783
      %v3884 = vunpack.c.h.b16 %v3783
      %v3885 = vunpack.c.l.b16 %v3784
      %v3886 = vunpack.c.h.b16 %v3784
      %v3887 = vunpack.c.l.b16 %v3785
      %v3888 = vunpack.c.h.b16 %v3785
      %v3889 = vunpack.c.l.b16 %v3786
      %v3890 = vunpack.c.h.b16 %v3786
      %v3891 = vunpack.c.l.b16 %v3787
      %v3892 = vunpack.c.l.b16 %v3788
      %v3893 = vunpack.c.h.b16 %v3788
      %v3894 = vunpack.c.l.b16 %v3789
      %v3895 = vunpack.c.h.b16 %v3789
      %v3896 = vunpack.c.l.b16 %v3790
      %v3897 = vunpack.c.h.b16 %v3790
      %v3898 = vunpack.c.l.b16 %v3791
      %v3899 = vunpack.c.h.b16 %v3791
      %v3900 = vunpack.c.l.b16 %v3792
      %v3901 = vunpack.c.l.b16 %v3793
      %v3902 = vunpack.c.h.b16 %v3793
      %v3903 = vunpack.c.l.b16 %v3794
      %v3904 = vunpack.c.h.b16 %v3794
      %v3905 = vunpack.c.l.b16 %v3795
      %v3906 = vunpack.c.h.b16 %v3795
      %v3907 = vunpack.c.l.b16 %v3796
      %v3908 = vunpack.c.h.b16 %v3796
      %v3909 = vunpack.c.l.b16 %v3797
      %v3910 = vunpack.c.l.b16 %v3798
      %v3911 = vunpack.c.h.b16 %v3798
      %v3912 = vunpack.c.l.b16 %v3799
      %v3913 = vunpack.c.h.b16 %v3799
      %v3914 = vunpack.c.l.b16 %v3800
      %v3915 = vunpack.c.h.b16 %v3800
      %v3916 = vunpack.c.l.b16 %v3801
      %v3917 = vunpack.c.h.b16 %v3801
      %v3918 = vunpack.c.l.b16 %v3802
      %v3919 = vunpack.c.l.b16 %v3803
      %v3920 = vunpack.c.h.b16 %v3803
      %v3921 = vunpack.c.l.b16 %v3804
      %v3922 = vunpack.c.h.b16 %v3804
      %v3923 = vunpack.c.l.b16 %v3805
      %v3924 = vunpack.c.h.b16 %v3805
      %v3925 = vunpack.c.l.b16 %v3806
      %v3926 = vunpack.c.h.b16 %v3806
      %v3927 = vunpack.c.l.b16 %v3807
      %v3928 = vunpack.c.l.b16 %v3808
      %v3929 = vunpack.c.h.b16 %v3808
      %v3930 = vunpack.c.l.b16 %v3809
      %v3931 = vunpack.c.h.b16 %v3809
      %v3932 = vunpack.c.l.b16 %v3810
      %v3933 = vunpack.c.h.b16 %v3810
      %v3934 = vunpack.c.l.b16 %v3811
      %v3935 = vunpack.c.h.b16 %v3811
      %v3936 = vunpack.c.l.b16 %v3812
      %v3937 = vunpack.c.l.b16 %v3813
      %v3938 = vunpack.c.h.b16 %v3813
      %v3939 = vunpack.c.l.b16 %v3814
      %v3940 = vunpack.c.h.b16 %v3814
      %v3941 = vunpack.c.l.b16 %v3815
      %v3942 = vunpack.c.h.b16 %v3815
      %v3943 = vunpack.c.l.b16 %v3816
      %v3944 = vunpack.c.h.b16 %v3816
      %v3945 = vunpack.c.l.b16 %v3817
      %v3946 = vunpack.c.l.b16 %v3818
      %v3947 = vunpack.c.h.b16 %v3818
      %v3948 = vunpack.c.l.b16 %v3819
      %v3949 = vunpack.c.h.b16 %v3819
      %v3950 = vunpack.c.l.b16 %v3820
      %v3951 = vunpack.c.h.b16 %v3820
      %v3952 = vunpack.c.l.b16 %v3821
      %v3953 = vunpack.c.h.b16 %v3821
      %v3954 = vunpack.c.l.b16 %v3822
      %v3955 = vpack.c.b16 %v3883, %v3874
      %v3956 = vpack.c.b16 %v3884, %v3875
      %v3957 = vpack.c.b16 %v3885, %v3876
      %v3958 = vpack.c.b16 %v3886, %v3877
      %v3959 = vpack.c.b16 %v3887, %v3878
      %v3960 = vpack.c.b16 %v3888, %v3879
      %v3961 = vpack.c.b16 %v3889, %v3880
      %v3962 = vpack.c.b16 %v3890, %v3881
      %v3963 = vpack.c.b16 %v3891, %v3882
      %v3964 = vpack.c.b16 %v3901, %v3892
      %v3965 = vpack.c.b16 %v3902, %v3893
      %v3966 = vpack.c.b16 %v3903, %v3894
      %v3967 = vpack.c.b16 %v3904, %v3895
      %v3968 = vpack.c.b16 %v3905, %v3896
      %v3969 = vpack.c.b16 %v3906, %v3897
      %v3970 = vpack.c.b16 %v3907, %v3898
      %v3971 = vpack.c.b16 %v3908, %v3899
      %v3972 = vpack.c.b16 %v3909, %v3900
      %v3973 = vpack.c.b16 %v3919, %v3910
      %v3974 = vpack.c.b16 %v3920, %v3911
      %v3975 = vpack.c.b16 %v3921, %v3912
      %v3976 = vpack.c.b16 %v3922, %v3913
      %v3977 = vpack.c.b16 %v3923, %v3914
      %v3978 = vpack.c.b16 %v3924, %v3915
      %v3979 = vpack.c.b16 %v3925, %v3916
      %v3980 = vpack.c.b16 %v3926, %v3917
      %v3981 = vpack.c.b16 %v3927, %v3918
      %v3982 = vpack.c.b16 %v3937, %v3928
      %v3983 = vpack.c.b16 %v3938, %v3929
      %v3984 = vpack.c.b16 %v3939, %v3930
      %v3985 = vpack.c.b16 %v3940, %v3931
      %v3986 = vpack.c.b16 %v3941, %v3932
      %v3987 = vpack.c.b16 %v3942, %v3933
      %v3988 = vpack.c.b16 %v3943, %v3934
      %v3989 = vpack.c.b16 %v3944, %v3935
      %v3990 = vpack.c.b16 %v3945, %v3936
      %v3991 = vpack.c.b16 %v3946, %v3946
      %v3992 = vpack.c.b16 %v3947, %v3947
      %v3993 = vpack.c.b16 %v3948, %v3948
      %v3994 = vpack.c.b16 %v3949, %v3949
      %v3995 = vpack.c.b16 %v3950, %v3950
      %v3996 = vpack.c.b16 %v3951, %v3951
      %v3997 = vpack.c.b16 %v3952, %v3952
      %v3998 = vpack.c.b16 %v3953, %v3953
      %v3999 = vpack.c.b16 %v3954, %v3954
      %v4037 = vsel %vm3099, %v3777, 0
      %v4040 = vsel %vm2476, %v3991, 0
      %v4043 = vsel %vm2476, %v3992, 0
      %v4046 = vsel %vm2476, %v3993, 0
      %v4049 = vsel %vm2476, %v3994, 0
      %v4052 = vsel %vm2476, %v3995, 0
      %v4055 = vsel %vm2476, %v3996, 0
      %v4058 = vsel %vm2476, %v3997, 0
      %v4061 = vsel %vm2476, %v3998, 0
      %v4064 = vsel %vm2476, %v3999, 0
      %4066 = vmatprep.subr.bf16.mxu0 0
      %4067 = vmatpush1.bf16.msra.mxu0 0
      %4068 = vmatprep.subr.bf16.mxu0 0
      %4069 = vmatpush1.bf16.msra.mxu0 0
      %4070 = vmatprep.subr.bf16.mxu0 0
      %4071 = vmatpush1.bf16.msra.mxu0 0
      %4072 = vmatprep.subr.bf16.mxu0 %v4043
      %4073 = vmatpush1.bf16.msra.mxu0 %v4040
      %4074 = vmatprep.subr.bf16.mxu0 %v3983
      %4075 = vmatpush1.bf16.msra.mxu0 %v3982
      %4076 = vmatprep.subr.bf16.mxu0 %v3974
      %4077 = vmatpush1.bf16.msra.mxu0 %v3973
      %4078 = vmatprep.subr.bf16.mxu0 %v3965
      %4079 = vmatpush1.bf16.msra.mxu0 %v3964
      %4080 = vmatprep.subr.bf16.mxu0 %v3956
      %4081 = vmatpush1.bf16.msra.mxu0 %v3955
      %4082 = vmatprep.subr.bf16.mxu0 0
      %4083 = vmatpush2.bf16.msra.mxu0 0
      %4084 = vmatprep.subr.bf16.mxu0 0
      %4085 = vmatpush2.bf16.msra.mxu0 0
      %4086 = vmatprep.subr.bf16.mxu0 0
      %4087 = vmatpush2.bf16.msra.mxu0 0
      %4088 = vmatprep.subr.bf16.mxu0 0
      %4089 = vmatpush2.bf16.msra.mxu0 0
      %4090 = vmatprep.subr.bf16.mxu0 0
      %4091 = vmatpush2.bf16.msra.mxu0 0
      %4092 = vmatprep.subr.bf16.mxu0 0
      %4093 = vmatpush2.bf16.msra.mxu0 0
      %4094 = vmatprep.subr.bf16.mxu0 0
      %4095 = vmatpush2.bf16.msra.mxu0 0
      %4096 = vmatprep.subr.bf16.mxu0 0
      %4097 = vmatpush2.bf16.msra.mxu0 0
      %4098 = vmatprep.mubr.bf16.mxu0 0
      %4099 = vmatmul.mubr.bf16.gmra.mxu0 %v4037
      %v4100 = vpop.f32.mrf.mxu0
      %v4101 = vadd.f32 %v3827, %v4100
      %v4102 = vpop.f32.mrf.mxu0
      %v4103 = vadd.f32 %v3827, %v4102
      %v4104 = vpop.f32.mrf.mxu0
      %v4105 = vpop.f32.mrf.mxu0
      %4106 = vdwg.mxu0
      %4107 = vmatprep.subr.bf16.mxu0 0
      %4108 = vmatpush1.bf16.msra.mxu0 0
      %4109 = vmatprep.subr.bf16.mxu0 0
      %4110 = vmatpush1.bf16.msra.mxu0 0
      %4111 = vmatprep.subr.bf16.mxu0 0
      %4112 = vmatpush1.bf16.msra.mxu0 0
      %4113 = vmatprep.subr.bf16.mxu0 %v4049
      %4114 = vmatpush1.bf16.msra.mxu0 %v4046
      %4115 = vmatprep.subr.bf16.mxu0 %v3985
      %4116 = vmatpush1.bf16.msra.mxu0 %v3984
      %4117 = vmatprep.subr.bf16.mxu0 %v3976
      %4118 = vmatpush1.bf16.msra.mxu0 %v3975
      %4119 = vmatprep.subr.bf16.mxu0 %v3967
      %4120 = vmatpush1.bf16.msra.mxu0 %v3966
      %4121 = vmatprep.subr.bf16.mxu0 %v3958
      %4122 = vmatpush1.bf16.msra.mxu0 %v3957
      %4123 = vmatprep.subr.bf16.mxu0 0
      %4124 = vmatpush2.bf16.msra.mxu0 0
      %4125 = vmatprep.subr.bf16.mxu0 0
      %4126 = vmatpush2.bf16.msra.mxu0 0
      %4127 = vmatprep.subr.bf16.mxu0 0
      %4128 = vmatpush2.bf16.msra.mxu0 0
      %4129 = vmatprep.subr.bf16.mxu0 0
      %4130 = vmatpush2.bf16.msra.mxu0 0
      %4131 = vmatprep.subr.bf16.mxu0 0
      %4132 = vmatpush2.bf16.msra.mxu0 0
      %4133 = vmatprep.subr.bf16.mxu0 0
      %4134 = vmatpush2.bf16.msra.mxu0 0
      %4135 = vmatprep.subr.bf16.mxu0 0
      %4136 = vmatpush2.bf16.msra.mxu0 0
      %4137 = vmatprep.subr.bf16.mxu0 0
      %4138 = vmatpush2.bf16.msra.mxu0 0
      %4139 = vmatprep.mubr.bf16.mxu0 0
      %4140 = vmatmul.mubr.bf16.gmra.mxu0 %v4037
      %v4141 = vpop.f32.mrf.mxu0
      %v4142 = vadd.f32 %v3827, %v4141
      %v4143 = vpop.f32.mrf.mxu0
      %v4144 = vadd.f32 %v3827, %v4143
      %v4145 = vpop.f32.mrf.mxu0
      %v4146 = vpop.f32.mrf.mxu0
      %4147 = vdwg.mxu0
      %4148 = vmatprep.subr.bf16.mxu0 0
      %4149 = vmatpush1.bf16.msra.mxu0 0
      %4150 = vmatprep.subr.bf16.mxu0 0
      %4151 = vmatpush1.bf16.msra.mxu0 0
      %4152 = vmatprep.subr.bf16.mxu0 0
      %4153 = vmatpush1.bf16.msra.mxu0 0
      %4154 = vmatprep.subr.bf16.mxu0 %v4055
      %4155 = vmatpush1.bf16.msra.mxu0 %v4052
      %4156 = vmatprep.subr.bf16.mxu0 %v3987
      %4157 = vmatpush1.bf16.msra.mxu0 %v3986
      %4158 = vmatprep.subr.bf16.mxu0 %v3978
      %4159 = vmatpush1.bf16.msra.mxu0 %v3977
      %4160 = vmatprep.subr.bf16.mxu0 %v3969
      %4161 = vmatpush1.bf16.msra.mxu0 %v3968
      %4162 = vmatprep.subr.bf16.mxu0 %v3960
      %4163 = vmatpush1.bf16.msra.mxu0 %v3959
      %4164 = vmatprep.subr.bf16.mxu0 0
      %4165 = vmatpush2.bf16.msra.mxu0 0
      %4166 = vmatprep.subr.bf16.mxu0 0
      %4167 = vmatpush2.bf16.msra.mxu0 0
      %4168 = vmatprep.subr.bf16.mxu0 0
      %4169 = vmatpush2.bf16.msra.mxu0 0
      %4170 = vmatprep.subr.bf16.mxu0 0
      %4171 = vmatpush2.bf16.msra.mxu0 0
      %4172 = vmatprep.subr.bf16.mxu0 0
      %4173 = vmatpush2.bf16.msra.mxu0 0
      %4174 = vmatprep.subr.bf16.mxu0 0
      %4175 = vmatpush2.bf16.msra.mxu0 0
      %4176 = vmatprep.subr.bf16.mxu0 0
      %4177 = vmatpush2.bf16.msra.mxu0 0
      %4178 = vmatprep.subr.bf16.mxu0 0
      %4179 = vmatpush2.bf16.msra.mxu0 0
      %4180 = vmatprep.mubr.bf16.mxu0 0
      %4181 = vmatmul.mubr.bf16.gmra.mxu0 %v4037
      %v4182 = vpop.f32.mrf.mxu0
      %v4183 = vadd.f32 %v3827, %v4182
      %v4184 = vpop.f32.mrf.mxu0
      %v4185 = vadd.f32 %v3827, %v4184
      %v4186 = vpop.f32.mrf.mxu0
      %v4187 = vpop.f32.mrf.mxu0
      %4188 = vdwg.mxu0
      %4189 = vmatprep.subr.bf16.mxu0 0
      %4190 = vmatpush1.bf16.msra.mxu0 0
      %4191 = vmatprep.subr.bf16.mxu0 0
      %4192 = vmatpush1.bf16.msra.mxu0 0
      %4193 = vmatprep.subr.bf16.mxu0 0
      %4194 = vmatpush1.bf16.msra.mxu0 0
      %4195 = vmatprep.subr.bf16.mxu0 %v4061
      %4196 = vmatpush1.bf16.msra.mxu0 %v4058
      %4197 = vmatprep.subr.bf16.mxu0 %v3989
      %4198 = vmatpush1.bf16.msra.mxu0 %v3988
      %4199 = vmatprep.subr.bf16.mxu0 %v3980
      %4200 = vmatpush1.bf16.msra.mxu0 %v3979
      %4201 = vmatprep.subr.bf16.mxu0 %v3971
      %4202 = vmatpush1.bf16.msra.mxu0 %v3970
      %4203 = vmatprep.subr.bf16.mxu0 %v3962
      %4204 = vmatpush1.bf16.msra.mxu0 %v3961
      %4205 = vmatprep.subr.bf16.mxu0 0
      %4206 = vmatpush2.bf16.msra.mxu0 0
      %4207 = vmatprep.subr.bf16.mxu0 0
      %4208 = vmatpush2.bf16.msra.mxu0 0
      %4209 = vmatprep.subr.bf16.mxu0 0
      %4210 = vmatpush2.bf16.msra.mxu0 0
      %4211 = vmatprep.subr.bf16.mxu0 0
      %4212 = vmatpush2.bf16.msra.mxu0 0
      %4213 = vmatprep.subr.bf16.mxu0 0
      %4214 = vmatpush2.bf16.msra.mxu0 0
      %4215 = vmatprep.subr.bf16.mxu0 0
      %4216 = vmatpush2.bf16.msra.mxu0 0
      %4217 = vmatprep.subr.bf16.mxu0 0
      %4218 = vmatpush2.bf16.msra.mxu0 0
      %4219 = vmatprep.subr.bf16.mxu0 0
      %4220 = vmatpush2.bf16.msra.mxu0 0
      %4221 = vmatprep.mubr.bf16.mxu0 0
      %4222 = vmatmul.mubr.bf16.gmra.mxu0 %v4037
      %v4223 = vpop.f32.mrf.mxu0
      %v4224 = vadd.f32 %v3827, %v4223
      %v4225 = vpop.f32.mrf.mxu0
      %v4226 = vadd.f32 %v3827, %v4225
      %v4227 = vpop.f32.mrf.mxu0
      %v4228 = vpop.f32.mrf.mxu0
      %4229 = vdwg.mxu0
      %4230 = vmatprep.subr.bf16.mxu0 0
      %4231 = vmatpush1.bf16.msra.mxu0 0
      %4232 = vmatprep.subr.bf16.mxu0 0
      %4233 = vmatpush1.bf16.msra.mxu0 0
      %4234 = vmatprep.subr.bf16.mxu0 0
      %4235 = vmatpush1.bf16.msra.mxu0 0
      %4236 = vmatprep.subr.bf16.mxu0 0
      %4237 = vmatpush1.bf16.msra.mxu0 %v4064
      %4238 = vmatprep.subr.bf16.mxu0 0
      %4239 = vmatpush1.bf16.msra.mxu0 %v3990
      %4240 = vmatprep.subr.bf16.mxu0 0
      %4241 = vmatpush1.bf16.msra.mxu0 %v3981
      %4242 = vmatprep.subr.bf16.mxu0 0
      %4243 = vmatpush1.bf16.msra.mxu0 %v3972
      %4244 = vmatprep.subr.bf16.mxu0 0
      %4245 = vmatpush1.bf16.msra.mxu0 %v3963
      %4246 = vmatprep.subr.bf16.mxu0 0
      %4247 = vmatpush2.bf16.msra.mxu0 0
      %4248 = vmatprep.subr.bf16.mxu0 0
      %4249 = vmatpush2.bf16.msra.mxu0 0
      %4250 = vmatprep.subr.bf16.mxu0 0
      %4251 = vmatpush2.bf16.msra.mxu0 0
      %4252 = vmatprep.subr.bf16.mxu0 0
      %4253 = vmatpush2.bf16.msra.mxu0 0
      %4254 = vmatprep.subr.bf16.mxu0 0
      %4255 = vmatpush2.bf16.msra.mxu0 0
      %4256 = vmatprep.subr.bf16.mxu0 0
      %4257 = vmatpush2.bf16.msra.mxu0 0
      %4258 = vmatprep.subr.bf16.mxu0 0
      %4259 = vmatpush2.bf16.msra.mxu0 0
      %4260 = vmatprep.subr.bf16.mxu0 0
      %4261 = vmatpush2.bf16.msra.mxu0 0
      %4262 = vmatprep.mubr.bf16.mxu0 0
      %4263 = vmatmul.mubr.bf16.gmra.mxu0 %v4037
      %v4264 = vpop.f32.mrf.mxu0
      %v4265 = vadd.f32 %v3827, %v4264
      %v4266 = vpop.f32.mrf.mxu0
      %v4267 = vpop.f32.mrf.mxu0
      %v4268 = vpop.f32.mrf.mxu0
      %4269 = vdwg.mxu0
      %v4270 = vmax.f32 %v4101, 0.0
      %v4271 = vmax.f32 %v4103, 0.0
      %v4272 = vmax.f32 %v4142, 0.0
      %v4273 = vmax.f32 %v4144, 0.0
      %v4274 = vmax.f32 %v4183, 0.0
      %v4275 = vmax.f32 %v4185, 0.0
      %v4276 = vmax.f32 %v4224, 0.0
      %v4277 = vmax.f32 %v4226, 0.0
      %v4278 = vmax.f32 %v4265, 0.0
      %v4279 = vmul.f32 %v4270, %v2356
      %v4280 = vmul.f32 %v4271, %v2360
      %v4281 = vmul.f32 %v4272, %v2364
      %v4282 = vmul.f32 %v4273, %v2368
      %v4283 = vmul.f32 %v4274, %v2372
      %v4284 = vmul.f32 %v4275, %v2376
      %v4285 = vmul.f32 %v4276, %v2380
      %v4286 = vmul.f32 %v4277, %v2384
      %v4287 = vmul.f32 %v4278, %v2388
      %vm4288 = vcmask 293888
      %4289 = vst.msk [vmem:[%s305] sm:$0xff] %vm4288, 0.0
      %4299 = vrot.lane.b32.xlu0 %v4279, 36
      %v4300 = vpop.permute.xlu0 %4299
      %4301 = vrot.lane.b32.xlu0 %v4280, 36
      %v4302 = vpop.permute.xlu0 %4301
      %4303 = vrot.lane.b32.xlu0 %v4281, 36
      %v4304 = vpop.permute.xlu0 %4303
      %4305 = vrot.lane.b32.xlu0 %v4282, 36
      %v4306 = vpop.permute.xlu0 %4305
      %4307 = vrot.lane.b32.xlu0 %v4283, 36
      %v4308 = vpop.permute.xlu0 %4307
      %4309 = vrot.lane.b32.xlu0 %v4284, 36
      %v4310 = vpop.permute.xlu0 %4309
      %4311 = vrot.lane.b32.xlu0 %v4285, 36
      %v4312 = vpop.permute.xlu0 %4311
      %4313 = vrot.lane.b32.xlu0 %v4286, 36
      %v4314 = vpop.permute.xlu0 %4313
      %4315 = vrot.lane.b32.xlu0 %v4287, 36
      %v4316 = vpop.permute.xlu0 %4315
      %v4317 = vsel %vm4288, %v4300, %v4302
      %v4318 = vsel %vm4288, %v4302, %v4304
      %v4319 = vsel %vm4288, %v4304, %v4306
      %v4320 = vsel %vm4288, %v4306, %v4308
      %v4321 = vsel %vm4288, %v4308, %v4310
      %v4322 = vsel %vm4288, %v4310, %v4312
      %v4323 = vsel %vm4288, %v4312, %v4314
      %v4324 = vsel %vm4288, %v4314, %v4316
      %vm4335 = vcmask 1047840
      %4336 = vst.msk [vmem:[%s305] sm:$0xff] %vm4335, %v4300
      %4337 = vst [vmem:[%s305 + $0x8] sm:$0xff] %v4317
      %4338 = vst [vmem:[%s305 + $0x10] sm:$0xff] %v4318
      %4339 = vst [vmem:[%s305 + $0x18] sm:$0xff] %v4319
      %4340 = vst [vmem:[%s305 + $0x20] sm:$0xff] %v4320
      %4341 = vst [vmem:[%s305 + $0x28] sm:$0xff] %v4321
      %4342 = vst [vmem:[%s305 + $0x30] sm:$0xff] %v4322
      %4343 = vst [vmem:[%s305 + $0x38] sm:$0xff] %v4323
      %4344 = vst [vmem:[%s305 + $0x40] sm:$0xff] %v4324
      %vm4345 = vcmask 7168
      %4346 = vst.msk [vmem:[%s305 + $0x48] sm:$0xff] %vm4345, %v4316
      %vm4347 = vcmask 310280
      %4348 = vst.msk [vmem:[%s305 + $0x48] sm:$0xff] %vm4347, 0.0
      %p4349 = scmp.lt.s32.totalorder %s19, 1
      %s4350 = scalar_select %p4349, %s19, 1
      %s4351 = smul.addr %s4350, 10
      %s4352 = smul.addr %s4351, 8
      %s4353 = scalar_lea.vmem %s8, %s4352
      // Predicated region
      $region53: #{upsampling_forward.1} parent=51 // pred_check
        %p4354 = pneg %p210
      $region54: #{upsampling_forward.1} parent=51 // pred_check_branch
        %4356 = sbr.rel (%p4354) target = $region56
      $region55: #{upsampling_forward.1} parent=51 // pred_region
        _
      $region56: #{upsampling_forward.1} parent=51 // pred_fallthru
        _
    $region52: #{upsampling_forward.1} parent=5 // pred_fallthru
      _
    %p4357 = scmp.le.s32.totalorder 2, %s14
    // Predicated region
    $region57: #{upsampling_forward.1} parent=5 // pred_check
      %p4358 = pneg %p4357
    $region58: #{upsampling_forward.1} parent=5 // pred_check_branch
      %4360 = sbr.rel (%p4358) target = $region60
    $region59: #{upsampling_forward.1} parent=5 // pred_region
      %s4361 = ssub.s32 %s14, 2
      // Predicated region
      $region61: #{upsampling_forward.1} parent=59 // pred_check
        %p4362 = pneg %p216
      $region62: #{upsampling_forward.1} parent=59 // pred_check_branch
        %4364 = sbr.rel (%p4362) target = $region64
      $region63: #{upsampling_forward.1} parent=59 // pred_region
        %p4365 = scmp.lt.s32.totalorder %s20, 1
        %s4366 = scalar_select %p4365, %s20, 1
        %s4367 = smul.addr %s4366, 10
        %s4368 = smul.addr %s4367, 8
        %s4369 = scalar_lea.vmem %s8, %s4368
      $region64: #{upsampling_forward.1} parent=59 // pred_fallthru
        _
    $region60: #{upsampling_forward.1} parent=5 // pred_fallthru
      _
  $region6: #{upsampling_forward.1} parent=0 // loop_footer
    %s18 = sadd.s32 1, %s14
  $region7: #{upsampling_forward.1} parent=0 // loop_footer_branch
    %13 = sbr.rel target = $region3
  $region8: #{upsampling_forward.1} parent=0 // loop_exit
    _

</llo_original>
